<compile_context>
chip_gen: v7x
topology: tpu7x:2x2x1
jax: 0.10.0
libtpu: 0.0.40
codegen_flags: <defaults>
</compile_context>

<pallas_src>
import functools

import jax
import jax.numpy as jnp
from jax import lax
from jax.experimental import pallas as pl
from jax.experimental.pallas import tpu as pltpu

EPSILON = 1e-4  # ProtoPNet.epsilon


def _protopnet_kernel(feat_ref, w1_ref, b1_ref, w2_ref, b2_ref,
                      proto_ref, p2_ref, wlast_ref,
                      logits_ref, mind_ref,
                      a2_sc, x2_sc,
                      *, bb, hw, mxu_dtype):
    """One (batch-block, prototype-chunk) grid step.

    feat_ref  : (C_feat, bb*hw)   channel-major backbone features (lanes = bb*hw)
    w1_ref    : (C_mid, C_feat)   add-on conv1 weight (PyTorch (out, in) layout)
    b1_ref    : (C_mid, 1)
    w2_ref    : (C_proto, C_mid)  add-on conv2 weight
    b2_ref    : (C_proto, 1)
    proto_ref : (pc, C_proto)     prototype chunk (1x1 spatial squeezed)
    p2_ref    : (pc, 1)           precomputed ||p||^2 chunk (hoisted in wrapper)
    wlast_ref : (pc, classes)     last-layer weight chunk, transposed
    logits_ref: (bb, classes)     accumulated across prototype chunks
    mind_ref  : (bb, pc)
    a2_sc     : (C_proto, bb*hw)  VMEM scratch: add-on output, reused across chunks
    x2_sc     : (1, bb*hw)        VMEM scratch: sum_c a2^2
    """
    p_idx = pl.program_id(1)
    prec = lax.Precision.HIGHEST if mxu_dtype == jnp.float32 else None

    def mm(w, x):
        # Single 2-D channel contraction; MXU free dim = bb*hw (lane-dense).
        return jnp.dot(w.astype(mxu_dtype), x.astype(mxu_dtype),
                       precision=prec, preferred_element_type=jnp.float32)

    # ---- add_on_layers (Conv1x1 -> ReLU -> Conv1x1 -> Sigmoid): once per batch block ----
    # TODO(synk): deeper 'bottleneck' add_on stacks (C_feat >> C_proto) would chain
    # additional (ReLU) conv1x1 matmul stages here; the demo config has one stage.
    @pl.when(p_idx == 0)
    def _():
        z = feat_ref[...]                                         # (C_feat, bb*hw) f32
        a1 = jnp.maximum(mm(w1_ref[...], z) + b1_ref[...], 0.0)   # (C_mid, bb*hw)
        a2 = jax.nn.sigmoid(mm(w2_ref[...], a1) + b2_ref[...])    # (C_proto, bb*hw)
        a2_sc[...] = a2
        x2_sc[...] = jnp.sum(a2 * a2, axis=0, keepdims=True)      # (1, bb*hw) f32
        logits_ref[...] = jnp.zeros_like(logits_ref)

    # ---- _l2_convolution for this prototype chunk: ||x||^2 - 2 x.p + ||p||^2 ----
    xp = mm(proto_ref[...], a2_sc[...])                           # (pc, bb*hw)
    dist = jnp.maximum(x2_sc[...] - 2.0 * xp + p2_ref[...], 0.0)  # (pc, bb*hw) f32

    # ---- global min pool per image: lane (XLU) reduction over each hw segment ----
    mins = [jnp.min(dist[:, n * hw:(n + 1) * hw], axis=-1, keepdims=True)
            for n in range(bb)]
    min_d = jnp.concatenate(mins, axis=-1)                        # (pc, bb)
    min_dT = min_d.T                                              # (bb, pc)  tiny transpose
    mind_ref[...] = min_dT

    # ---- distance_2_similarity ('log') + last layer (Linear, no bias) partial ----
    sim = jnp.log((min_dT + 1.0) / (min_dT + EPSILON))            # (bb, pc) f32
    logits_ref[...] += jnp.dot(sim, wlast_ref[...],
                               precision=lax.Precision.HIGHEST,
                               preferred_element_type=jnp.float32)


@functools.partial(jax.jit, static_argnames=("mxu_dtype", "batch_block", "p_chunk"))
def protopnet_forward(feat_cnw, w1, b1, w2, b2, protos, wlast, *,
                      mxu_dtype=jnp.float32, batch_block=None, p_chunk=None):
    """feat_cnw: (C_feat, N, H*W) float32, channel-major backbone features.

    Weights in PyTorch orientation: w1 (C_mid, C_feat), b1 (C_mid,),
    w2 (C_proto, C_mid), b2 (C_proto,), protos (P, C_proto), wlast (classes, P).
    Returns (logits (N, classes), min_distances (N, P)).
    """
    C_feat, N, HW = feat_cnw.shape
    C_mid = w1.shape[0]
    C_proto = w2.shape[0]
    P = protos.shape[0]
    num_classes = wlast.shape[0]

    # ---- grid-invariant prototype / weight precompute (hoisted out of the kernel) ----
    b1c = b1.reshape(C_mid, 1)
    b2c = b2.reshape(C_proto, 1)
    p2 = jnp.sum(protos * protos, axis=-1, keepdims=True)          # (P, 1)
    wlast_t = wlast.T                                               # (P, classes)

    # ---- batch-block grid axis ("parallel": v7x dual-TC + feature DMA pipelining) ----
    if batch_block is None:
        ok = (N > 8) and (N % 8 == 0) and ((8 * HW) % 128 == 0)
        batch_block = 8 if ok else N
    assert N % batch_block == 0
    n_blocks = N // batch_block
    if n_blocks > 1:
        # blocked rows of the (N, classes)/(N, P) outputs and the feature columns
        assert batch_block % 8 == 0 and (batch_block * HW) % 128 == 0

    # ---- prototype-chunk grid axis: bounds the (pc, cols) distance tile in VMEM ----
    if p_chunk is None:
        p_chunk = P if P <= 512 else 512
    p_chunk = min(p_chunk, P)
    p_blocks = pl.cdiv(P, p_chunk)
    P_pad = p_blocks * p_chunk
    if p_blocks > 1:
        assert p_chunk % 128 == 0   # lane-dense min-distance output blocks
    if P_pad != P:
        # Zero padding is inert: padded wlast rows contribute 0 to the logits
        # and the padded min-distance columns are sliced off below.
        pad = ((0, P_pad - P), (0, 0))
        protos = jnp.pad(protos, pad)
        p2 = jnp.pad(p2, pad)
        wlast_t = jnp.pad(wlast_t, pad)

    feat2d = feat_cnw.reshape(C_feat, N * HW)     # free: trailing dims contiguous
    cols = batch_block * HW

    kernel = functools.partial(_protopnet_kernel, bb=batch_block, hw=HW,
                               mxu_dtype=mxu_dtype)

    logits, min_d = pl.pallas_call(
        kernel,
        out_shape=(
            jax.ShapeDtypeStruct((N, num_classes), jnp.float32),
            jax.ShapeDtypeStruct((N, P_pad), jnp.float32),
        ),
        grid_spec=pltpu.PrefetchScalarGridSpec(
            num_scalar_prefetch=0,
            grid=(n_blocks, p_blocks),
            in_specs=[
                pl.BlockSpec((C_feat, cols), lambda s, p: (0, s)),
                pl.BlockSpec((C_mid, C_feat), lambda s, p: (0, 0)),
                pl.BlockSpec((C_mid, 1), lambda s, p: (0, 0)),
                pl.BlockSpec((C_proto, C_mid), lambda s, p: (0, 0)),
                pl.BlockSpec((C_proto, 1), lambda s, p: (0, 0)),
                pl.BlockSpec((p_chunk, C_proto), lambda s, p: (p, 0)),
                pl.BlockSpec((p_chunk, 1), lambda s, p: (p, 0)),
                pl.BlockSpec((p_chunk, num_classes), lambda s, p: (p, 0)),
            ],
            out_specs=(
                pl.BlockSpec((batch_block, num_classes), lambda s, p: (s, 0)),
                pl.BlockSpec((batch_block, p_chunk), lambda s, p: (s, p)),
            ),
            scratch_shapes=[
                pltpu.VMEM((C_proto, cols), jnp.float32),
                pltpu.VMEM((1, cols), jnp.float32),
            ],
        ),
        compiler_params=pltpu.CompilerParams(
            dimension_semantics=("parallel", "arbitrary"),
            vmem_limit_bytes=32 * 1024 * 1024),
    )(feat2d, w1, b1c, w2, b2c, protos, p2, wlast_t)

    return logits, min_d[:, :P]


def backbone_features(x_nchw, conv_w, conv_b):
    """Stand-in VGG-style backbone: Conv2d(3->C_feat, 3x3, pad=1) + ReLU.

    Computed in plain JAX (the injected `features` submodule is not ProtoPNet
    math).  The conv writes channel-major ("CNHW") output directly so the
    kernel's (C_feat, N, H*W) layout comes out for free - no HBM transpose.
    """
    y = lax.conv_general_dilated(
        x_nchw, conv_w, window_strides=(1, 1), padding=((1, 1), (1, 1)),
        dimension_numbers=("NCHW", "OIHW", "CNHW"))
    y = jnp.maximum(y + conv_b[:, None, None, None], 0.0)
    c, n, h, w = y.shape
    return y.reshape(c, n, h * w)


def protopnet_reference(feat_cnw, w1, b1, w2, b2, protos, wlast,
                        mxu_dtype=jnp.float32):
    """Pure-JAX reference mirroring the PyTorch forward (validation only)."""
    hp = lax.Precision.HIGHEST
    f32 = jnp.float32
    cast = lambda a: a.astype(mxu_dtype)
    z = jnp.transpose(feat_cnw, (1, 2, 0))                          # (N, HW, C_feat)
    a1 = jnp.maximum(
        jnp.matmul(cast(z), cast(w1.T), precision=hp,
                   preferred_element_type=f32) + b1, 0.0)
    a2 = jax.nn.sigmoid(
        jnp.matmul(cast(a1), cast(w2.T), precision=hp,
                   preferred_element_type=f32) + b2)                # (N, HW, C_proto)
    x2 = jnp.sum(a2 * a2, axis=-1, keepdims=True)
    xp = jnp.matmul(cast(a2), cast(protos.T), precision=hp,
                    preferred_element_type=f32)                     # (N, HW, P)
    p2 = jnp.sum(protos * protos, axis=-1)
    dist = jnp.maximum(x2 - 2.0 * xp + p2[None, None, :], 0.0)
    min_d = jnp.min(dist, axis=1)                                   # (N, P)
    sim = jnp.log((min_d + 1.0) / (min_d + EPSILON))
    logits = jnp.matmul(sim, wlast.T, precision=hp)                 # (N, classes)
    return logits, min_d


def _make_model_params(key, c_in, c_feat, c_proto, num_prototypes, num_classes):
    keys = jax.random.split(key, 4)
    # backbone (external `features` module): Conv2d(c_in, c_feat, 3, padding=1) + ReLU
    bk_w = jax.random.normal(keys[0], (c_feat, c_in, 3, 3), jnp.float32) * \
        jnp.sqrt(2.0 / (c_feat * 3 * 3))
    bk_b = jnp.zeros((c_feat,), jnp.float32)
    # add_on_layers (bottleneck, single stage since c_feat // 2 == c_proto):
    # Conv1x1(c_feat->c_mid), ReLU, Conv1x1(c_mid->c_proto), Sigmoid
    # kaiming_normal_(fan_out) init, bias = 0; PyTorch (out, in) orientation.
    c_mid = max(c_proto, c_feat // 2)
    w1 = jax.random.normal(keys[1], (c_mid, c_feat), jnp.float32) * \
        jnp.sqrt(2.0 / c_mid)
    b1 = jnp.zeros((c_mid,), jnp.float32)
    w2 = jax.random.normal(keys[2], (c_proto, c_mid), jnp.float32) * \
        jnp.sqrt(2.0 / c_proto)
    b2 = jnp.zeros((c_proto,), jnp.float32)
    # prototype_vectors ~ U[0,1), 1x1 spatial -> (P, C_proto)
    protos = jax.random.uniform(keys[3], (num_prototypes, c_proto), jnp.float32)
    # last_layer weight from set_last_layer_incorrect_connection(-0.5)
    per_class = num_prototypes // num_classes
    ident = jnp.zeros((num_prototypes, num_classes), jnp.float32)
    ident = ident.at[jnp.arange(num_prototypes),
                     jnp.arange(num_prototypes) // per_class].set(1.0)
    wlast = 1.0 * ident.T + (-0.5) * (1.0 - ident.T)
    return bk_w, bk_b, w1, b1, w2, b2, protos, wlast


def _run_case(key, *, n, c_in, hw_side, c_feat, c_proto, num_prototypes,
              num_classes, p_chunk=None, batch_block=None, check_bf16=False):
    kp, kx = jax.random.split(key)
    bk_w, bk_b, w1, b1, w2, b2, protos, wlast = _make_model_params(
        kp, c_in, c_feat, c_proto, num_prototypes, num_classes)
    x = jax.random.normal(kx, (n, c_in, hw_side, hw_side), jnp.float32)

    feats = backbone_features(x, bk_w, bk_b)                 # (C_feat, N, H*W)
    logits, min_d = protopnet_forward(
        feats, w1, b1, w2, b2, protos, wlast,
        p_chunk=p_chunk, batch_block=batch_block)
    jax.block_until_ready((logits, min_d))

    assert logits.shape == (n, num_classes)
    assert min_d.shape == (n, num_prototypes)

    # ---- validate against a pure-JAX reference of the PyTorch forward ----
    ref_logits, ref_min = protopnet_reference(feats, w1, b1, w2, b2, protos, wlast)
    assert jnp.allclose(min_d, ref_min, rtol=1e-2, atol=1e-2), \
        float(jnp.max(jnp.abs(min_d - ref_min)))
    assert jnp.allclose(logits, ref_logits, rtol=1e-2, atol=1e-2), \
        float(jnp.max(jnp.abs(logits - ref_logits)))

    if check_bf16:
        # bf16 MXU operands / f32 accumulation (v6e / v7x optimization); the
        # L2-distance combine stays f32, so this is a smoke / ballpark check.
        logits_bf, min_bf = protopnet_forward(
            feats, w1, b1, w2, b2, protos, wlast,
            mxu_dtype=jnp.bfloat16, p_chunk=p_chunk, batch_block=batch_block)
        jax.block_until_ready((logits_bf, min_bf))
        assert jnp.all(jnp.isfinite(logits_bf)) and jnp.all(jnp.isfinite(min_bf))
        assert float(jnp.max(jnp.abs(min_bf - ref_min))) < 0.5


if __name__ == "__main__":
    key = jax.random.PRNGKey(0)
    k1, k2 = jax.random.split(key)

    # Small config consistent with ProtoPNet.__init__ (single grid step).
    _run_case(k1, n=2, c_in=3, hw_side=16, c_feat=8, c_proto=4,
              num_prototypes=10, num_classes=5, check_bf16=True)

    # Slightly larger config exercising the prototype-chunk grid axis
    # (incl. zero padding of P) and the "parallel" batch-block axis.
    _run_case(k2, n=16, c_in=3, hw_side=16, c_feat=8, c_proto=4,
              num_prototypes=250, num_classes=5, p_chunk=128, batch_block=8)

    print("KERNEL_OK")
</pallas_src>

<mosaic_0001>
module attributes {stable_mosaic.version = 11 : i64} {
  func.func @_protopnet_kernel(%arg0: i32, %arg1: i32, %arg2: memref<8x512xf32, #tpu.memory_space<vmem>>, %arg3: memref<4x8xf32, #tpu.memory_space<vmem>>, %arg4: memref<4x1xf32, #tpu.memory_space<vmem>>, %arg5: memref<4x4xf32, #tpu.memory_space<vmem>>, %arg6: memref<4x1xf32, #tpu.memory_space<vmem>>, %arg7: memref<10x4xf32, #tpu.memory_space<vmem>>, %arg8: memref<10x1xf32, #tpu.memory_space<vmem>>, %arg9: memref<10x5xf32, #tpu.memory_space<vmem>>, %arg10: memref<2x5xf32, #tpu.memory_space<vmem>>, %arg11: memref<2x10xf32, #tpu.memory_space<vmem>>, %arg12: memref<4x512xf32, #tpu.memory_space<vmem>>, %arg13: memref<1x512xf32, #tpu.memory_space<vmem>>) attributes {dimension_semantics = [#tpu.dimension_semantics<parallel>, #tpu.dimension_semantics<arbitrary>], iteration_bounds = array<i64: 1, 1>, scalar_prefetch = 0 : i64, scratch_operands = 2 : i64, tpu.core_type = #tpu.core_type<tc>, window_params = [{transform_indices = @transform_0, window_bounds = array<i64: 8, 512>}, {pipeline_mode = #tpu.pipeline_mode<synchronous>, transform_indices = @transform_1, window_bounds = array<i64: 4, 8>}, {pipeline_mode = #tpu.pipeline_mode<synchronous>, transform_indices = @transform_2, window_bounds = array<i64: 4, 1>}, {pipeline_mode = #tpu.pipeline_mode<synchronous>, transform_indices = @transform_3, window_bounds = array<i64: 4, 4>}, {pipeline_mode = #tpu.pipeline_mode<synchronous>, transform_indices = @transform_4, window_bounds = array<i64: 4, 1>}, {transform_indices = @transform_5, window_bounds = array<i64: 10, 4>}, {transform_indices = @transform_6, window_bounds = array<i64: 10, 1>}, {transform_indices = @transform_7, window_bounds = array<i64: 10, 5>}, {transform_indices = @transform_8, window_bounds = array<i64: 2, 5>}, {transform_indices = @transform_9, window_bounds = array<i64: 2, 10>}]} {
    %c0_i32 = arith.constant 0 : i32
    %0 = arith.cmpi eq, %arg1, %c0_i32 : i32
    %1 = arith.extui %0 : i1 to i32
    %c0_i32_0 = arith.constant 0 : i32
    %2 = arith.cmpi ne, %1, %c0_i32_0 : i32
    scf.if %2 {
      %c0_23 = arith.constant 0 : index
      %c0_24 = arith.constant 0 : index
      %36 = vector.load %arg2[%c0_23, %c0_24] : memref<8x512xf32, #tpu.memory_space<vmem>>, vector<8x512xf32>
      %c0_25 = arith.constant 0 : index
      %c0_26 = arith.constant 0 : index
      %37 = vector.load %arg3[%c0_25, %c0_26] : memref<4x8xf32, #tpu.memory_space<vmem>>, vector<4x8xf32>
      %cst_27 = arith.constant dense<0.000000e+00> : vector<4x512xf32>
      %38 = tpu.matmul %37, %36, %cst_27 {dimension_numbers = #tpu.dot_dimension_numbers<[1], [0], [0], [1], [0, 0, 1, 1], [], []>, precision = #tpu.contract_precision<fp32>} : vector<4x8xf32>, vector<8x512xf32>, vector<4x512xf32> -> vector<4x512xf32>
      %c0_28 = arith.constant 0 : index
      %c0_29 = arith.constant 0 : index
      %39 = vector.load %arg4[%c0_28, %c0_29] : memref<4x1xf32, #tpu.memory_space<vmem>>, vector<4x1xf32>
      %40 = vector.broadcast %39 : vector<4x1xf32> to vector<4x512xf32>
      %41 = arith.addf %38, %40 : vector<4x512xf32>
      %cst_30 = arith.constant 0.000000e+00 : f32
      %42 = vector.broadcast %cst_30 : f32 to vector<4x512xf32>
      %43 = arith.maximumf %41, %42 : vector<4x512xf32>
      %c0_31 = arith.constant 0 : index
      %c0_32 = arith.constant 0 : index
      %44 = vector.load %arg5[%c0_31, %c0_32] : memref<4x4xf32, #tpu.memory_space<vmem>>, vector<4x4xf32>
      %cst_33 = arith.constant dense<0.000000e+00> : vector<4x512xf32>
      %45 = tpu.matmul %44, %43, %cst_33 {dimension_numbers = #tpu.dot_dimension_numbers<[1], [0], [0], [1], [0, 0, 1, 1], [], []>, precision = #tpu.contract_precision<fp32>} : vector<4x4xf32>, vector<4x512xf32>, vector<4x512xf32> -> vector<4x512xf32>
      %c0_34 = arith.constant 0 : index
      %c0_35 = arith.constant 0 : index
      %46 = vector.load %arg6[%c0_34, %c0_35] : memref<4x1xf32, #tpu.memory_space<vmem>>, vector<4x1xf32>
      %47 = vector.broadcast %46 : vector<4x1xf32> to vector<4x512xf32>
      %48 = arith.addf %45, %47 : vector<4x512xf32>
      %49 = arith.negf %48 : vector<4x512xf32>
      %50 = math.exp %49 : vector<4x512xf32>
      %cst_36 = arith.constant 1.000000e+00 : f32
      %51 = vector.broadcast %cst_36 : f32 to vector<4x512xf32>
      %52 = arith.addf %51, %50 : vector<4x512xf32>
      %53 = arith.divf %51, %52 : vector<4x512xf32>
      %c0_37 = arith.constant 0 : index
      %c0_38 = arith.constant 0 : index
      %54 = vector.load %arg12[%c0_37, %c0_38] : memref<4x512xf32, #tpu.memory_space<vmem>>, vector<4x512xf32>
      tpu.vector_store %arg12[%c0_37, %c0_38], %53 {strides = array<i32>} : memref<4x512xf32, #tpu.memory_space<vmem>>, vector<4x512xf32>,
      %55 = arith.mulf %53, %53 : vector<4x512xf32>
      %cst_39 = arith.constant dense<0.000000e+00> : vector<512xf32>
      %56 = vector.multi_reduction <add>, %55, %cst_39 [0] : vector<4x512xf32> to vector<512xf32>
      %57 = vector.shape_cast %56 : vector<512xf32> to vector<1x512xf32>
      %c0_40 = arith.constant 0 : index
      %c0_41 = arith.constant 0 : index
      %58 = vector.load %arg13[%c0_40, %c0_41] : memref<1x512xf32, #tpu.memory_space<vmem>>, vector<1x512xf32>
      tpu.vector_store %arg13[%c0_40, %c0_41], %57 {strides = array<i32>} : memref<1x512xf32, #tpu.memory_space<vmem>>, vector<1x512xf32>,
      %cst_42 = arith.constant 0.000000e+00 : f32
      %59 = vector.broadcast %cst_42 : f32 to vector<2x5xf32>
      %c0_43 = arith.constant 0 : index
      %c0_44 = arith.constant 0 : index
      %60 = vector.load %arg10[%c0_43, %c0_44] : memref<2x5xf32, #tpu.memory_space<vmem>>, vector<2x5xf32>
      tpu.vector_store %arg10[%c0_43, %c0_44], %59 {strides = array<i32>} : memref<2x5xf32, #tpu.memory_space<vmem>>, vector<2x5xf32>,
    } else {
    }
    %c0 = arith.constant 0 : index
    %c0_1 = arith.constant 0 : index
    %3 = vector.load %arg7[%c0, %c0_1] : memref<10x4xf32, #tpu.memory_space<vmem>>, vector<10x4xf32>
    %c0_2 = arith.constant 0 : index
    %c0_3 = arith.constant 0 : index
    %4 = vector.load %arg12[%c0_2, %c0_3] : memref<4x512xf32, #tpu.memory_space<vmem>>, vector<4x512xf32>
    %cst = arith.constant dense<0.000000e+00> : vector<10x512xf32>
    %5 = tpu.matmul %3, %4, %cst {dimension_numbers = #tpu.dot_dimension_numbers<[1], [0], [0], [1], [0, 0, 1, 1], [], []>, precision = #tpu.contract_precision<fp32>} : vector<10x4xf32>, vector<4x512xf32>, vector<10x512xf32> -> vector<10x512xf32>
    %c0_4 = arith.constant 0 : index
    %c0_5 = arith.constant 0 : index
    %6 = vector.load %arg13[%c0_4, %c0_5] : memref<1x512xf32, #tpu.memory_space<vmem>>, vector<1x512xf32>
    %cst_6 = arith.constant 2.000000e+00 : f32
    %7 = vector.broadcast %cst_6 : f32 to vector<10x512xf32>
    %8 = arith.mulf %7, %5 : vector<10x512xf32>
    %9 = vector.broadcast %6 : vector<1x512xf32> to vector<10x512xf32>
    %10 = arith.subf %9, %8 : vector<10x512xf32>
    %c0_7 = arith.constant 0 : index
    %c0_8 = arith.constant 0 : index
    %11 = vector.load %arg8[%c0_7, %c0_8] : memref<10x1xf32, #tpu.memory_space<vmem>>, vector<10x1xf32>
    %12 = vector.broadcast %11 : vector<10x1xf32> to vector<10x512xf32>
    %13 = arith.addf %10, %12 : vector<10x512xf32>
    %cst_9 = arith.constant 0.000000e+00 : f32
    %14 = vector.broadcast %cst_9 : f32 to vector<10x512xf32>
    %15 = arith.maximumf %13, %14 : vector<10x512xf32>
    %16 = vector.extract_strided_slice %15 {offsets = [0, 0], sizes = [10, 256], strides = [1, 1]} : vector<10x512xf32> to vector<10x256xf32>
    %cst_10 = arith.constant dense<0x7F800000> : vector<10xf32>
    %17 = vector.multi_reduction <minimumf>, %16, %cst_10 [1] : vector<10x256xf32> to vector<10xf32>
    %18 = vector.shape_cast %17 : vector<10xf32> to vector<10x1xf32>
    %19 = vector.extract_strided_slice %15 {offsets = [0, 256], sizes = [10, 256], strides = [1, 1]} : vector<10x512xf32> to vector<10x256xf32>
    %cst_11 = arith.constant dense<0x7F800000> : vector<10xf32>
    %20 = vector.multi_reduction <minimumf>, %19, %cst_11 [1] : vector<10x256xf32> to vector<10xf32>
    %21 = vector.shape_cast %20 : vector<10xf32> to vector<10x1xf32>
    %22 = tpu.concatenate %18, %21 in 1 : vector<10x1xf32>, vector<10x1xf32> -> vector<10x2xf32>
    %23 = tpu.transpose %22, [1, 0] : vector<10x2xf32> -> vector<2x10xf32>
    %c0_12 = arith.constant 0 : index
    %c0_13 = arith.constant 0 : index
    %24 = vector.load %arg11[%c0_12, %c0_13] : memref<2x10xf32, #tpu.memory_space<vmem>>, vector<2x10xf32>
    tpu.vector_store %arg11[%c0_12, %c0_13], %23 {strides = array<i32>} : memref<2x10xf32, #tpu.memory_space<vmem>>, vector<2x10xf32>,
    %cst_14 = arith.constant 1.000000e+00 : f32
    %25 = vector.broadcast %cst_14 : f32 to vector<2x10xf32>
    %26 = arith.addf %23, %25 : vector<2x10xf32>
    %cst_15 = arith.constant 9.99999974E-5 : f32
    %27 = vector.broadcast %cst_15 : f32 to vector<2x10xf32>
    %28 = arith.addf %23, %27 : vector<2x10xf32>
    %29 = arith.divf %26, %28 : vector<2x10xf32>
    %30 = math.log %29 : vector<2x10xf32>
    %c0_16 = arith.constant 0 : index
    %c0_17 = arith.constant 0 : index
    %31 = vector.load %arg10[%c0_16, %c0_17] : memref<2x5xf32, #tpu.memory_space<vmem>>, vector<2x5xf32>
    %c0_18 = arith.constant 0 : index
    %c0_19 = arith.constant 0 : index
    %32 = vector.load %arg9[%c0_18, %c0_19] : memref<10x5xf32, #tpu.memory_space<vmem>>, vector<10x5xf32>
    %cst_20 = arith.constant dense<0.000000e+00> : vector<2x5xf32>
    %33 = tpu.matmul %30, %32, %cst_20 {dimension_numbers = #tpu.dot_dimension_numbers<[1], [0], [0], [1], [0, 0, 1, 1], [], []>, precision = #tpu.contract_precision<fp32>} : vector<2x10xf32>, vector<10x5xf32>, vector<2x5xf32> -> vector<2x5xf32>
    %34 = arith.addf %31, %33 : vector<2x5xf32>
    %c0_21 = arith.constant 0 : index
    %c0_22 = arith.constant 0 : index
    %35 = vector.load %arg10[%c0_21, %c0_22] : memref<2x5xf32, #tpu.memory_space<vmem>>, vector<2x5xf32>
    tpu.vector_store %arg10[%c0_21, %c0_22], %34 {strides = array<i32>} : memref<2x5xf32, #tpu.memory_space<vmem>>, vector<2x5xf32>,
    return
  }
  func.func @transform_0(%arg0: i32, %arg1: i32) -> (i32, i32) {
    %c0_i32 = arith.constant 0 : i32
    %c0_i32_0 = arith.constant 0 : i32
    return %c0_i32, %arg0 : i32, i32
  }
  func.func @transform_1(%arg0: i32, %arg1: i32) -> (i32, i32) {
    %c0_i32 = arith.constant 0 : i32
    %c0_i32_0 = arith.constant 0 : i32
    %c0_i32_1 = arith.constant 0 : i32
    return %c0_i32, %c0_i32_0 : i32, i32
  }
  func.func @transform_2(%arg0: i32, %arg1: i32) -> (i32, i32) {
    %c0_i32 = arith.constant 0 : i32
    %c0_i32_0 = arith.constant 0 : i32
    %c0_i32_1 = arith.constant 0 : i32
    return %c0_i32, %c0_i32_0 : i32, i32
  }
  func.func @transform_3(%arg0: i32, %arg1: i32) -> (i32, i32) {
    %c0_i32 = arith.constant 0 : i32
    %c0_i32_0 = arith.constant 0 : i32
    %c0_i32_1 = arith.constant 0 : i32
    return %c0_i32, %c0_i32_0 : i32, i32
  }
  func.func @transform_4(%arg0: i32, %arg1: i32) -> (i32, i32) {
    %c0_i32 = arith.constant 0 : i32
    %c0_i32_0 = arith.constant 0 : i32
    %c0_i32_1 = arith.constant 0 : i32
    return %c0_i32, %c0_i32_0 : i32, i32
  }
  func.func @transform_5(%arg0: i32, %arg1: i32) -> (i32, i32) {
    %c0_i32 = arith.constant 0 : i32
    %c0_i32_0 = arith.constant 0 : i32
    return %arg1, %c0_i32 : i32, i32
  }
  func.func @transform_6(%arg0: i32, %arg1: i32) -> (i32, i32) {
    %c0_i32 = arith.constant 0 : i32
    %c0_i32_0 = arith.constant 0 : i32
    return %arg1, %c0_i32 : i32, i32
  }
  func.func @transform_7(%arg0: i32, %arg1: i32) -> (i32, i32) {
    %c0_i32 = arith.constant 0 : i32
    %c0_i32_0 = arith.constant 0 : i32
    return %arg1, %c0_i32 : i32, i32
  }
  func.func @transform_8(%arg0: i32, %arg1: i32) -> (i32, i32) {
    %c0_i32 = arith.constant 0 : i32
    %c0_i32_0 = arith.constant 0 : i32
    return %arg0, %c0_i32 : i32, i32
  }
  func.func @transform_9(%arg0: i32, %arg1: i32) -> (i32, i32) {
    %c0_i32 = arith.constant 0 : i32
    return %arg0, %arg1 : i32, i32
  }
}

</mosaic_0001>

<llo_original>
// kernel: protopnet_forward.1
$region0: #{protopnet_forward.1}
  #allocation0 [shape = 'u32[]', space=smem, size = 0x4, offset = 0x4, fixed_abs, tag = 'smem constant byte address 0x4 - core index']
  #allocation1 [shape = 'u32[144,128]{1,0:T(1,128)}', space=vmem, size = 0x12000, scoped, tag = 'internal scratch']
  #allocation2 [shape = 'f32[4,512]{1,0:T(4,128)}', space=vmem, size = 0x2000, scoped, tag = 'scratch operand']
  #allocation3 [shape = 'f32[1,512]{1,0:T(1,128)}', space=vmem, size = 0x800, scoped, tag = 'scratch operand']
  %s0 = inlined_call_operand.vmem [shape: f32[8,512], index: 0, kind: input, shape index: {}]
  %s1 = inlined_call_operand.vmem [shape: f32[4,8], index: 1, kind: input, shape index: {}]
  %s2 = inlined_call_operand.vmem [shape: f32[4,1], index: 2, kind: input, shape index: {}]
  %s3 = inlined_call_operand.vmem [shape: f32[4,4], index: 3, kind: input, shape index: {}]
  %s4 = inlined_call_operand.vmem [shape: f32[4,1], index: 4, kind: input, shape index: {}]
  %s5 = inlined_call_operand.vmem [shape: f32[10,4], index: 5, kind: input, shape index: {}]
  %s6 = inlined_call_operand.vmem [shape: f32[10,1], index: 6, kind: input, shape index: {}]
  %s7 = inlined_call_operand.vmem [shape: f32[10,5], index: 7, kind: input, shape index: {}]
  %s8 = inlined_call_operand.hbm [shape: f32[2,5], index: 8, kind: output, shape index: {0}]
  %s9 = inlined_call_operand.hbm [shape: f32[2,10], index: 9, kind: output, shape index: {1}]
  %10 = xla_tuple %s8, %s9
  %s11 = sld [smem:[#allocation0]]
  $region54: #{protopnet_forward.1} parent=0
    _
  %s13 = ssub.s32 1, %s11
  %s14 = scalar_select 0, %s13, %s11
  $region1: #{protopnet_forward.1} parent=0
    #allocation4 [shape = 'u8[1024]{0}', space=vmem, size = 0x400, scoped, tag = 'output window, operand 0, single buffered']
    #allocation5 [shape = 's32[1]{0}', space=sflag, size = 0x4, scoped, tag = 'scoped memory for protopnet_forward.1']
    #allocation6 [shape = 'u8[1024]{0}', space=vmem, size = 0x400, scoped, tag = 'output window, operand 1, single buffered']
    #allocation7 [shape = 's32[1]{0}', space=sflag, size = 0x4, scoped, tag = 'scoped memory for protopnet_forward.1']
    %15 = vsyncpa [#allocation5], 0
    %16 = vsyncpa [#allocation7], 0
    // Predicated region
    $region2: #{protopnet_forward.1} parent=1 // pred_check
      _
    $region3: #{protopnet_forward.1} parent=1 // pred_check_branch
      %18 = sbr.rel (0) target = $region5
    $region4: #{protopnet_forward.1} parent=1 // pred_region
      _
    $region5: #{protopnet_forward.1} parent=1 // pred_fallthru
      _
    // Predicated region
    $region6: #{protopnet_forward.1} parent=1 // pred_check
      _
    $region7: #{protopnet_forward.1} parent=1 // pred_check_branch
      %20 = sbr.rel (0) target = $region9
    $region8: #{protopnet_forward.1} parent=1 // pred_region
      _
    $region9: #{protopnet_forward.1} parent=1 // pred_fallthru
      _
    // Predicated region
    $region10: #{protopnet_forward.1} parent=1 // pred_check
      _
    $region11: #{protopnet_forward.1} parent=1 // pred_check_branch
      %22 = sbr.rel (0) target = $region13
    $region12: #{protopnet_forward.1} parent=1 // pred_region
      _
    $region13: #{protopnet_forward.1} parent=1 // pred_fallthru
      _
    // Predicated region
    $region14: #{protopnet_forward.1} parent=1 // pred_check
      _
    $region15: #{protopnet_forward.1} parent=1 // pred_check_branch
      %24 = sbr.rel (0) target = $region17
    $region16: #{protopnet_forward.1} parent=1 // pred_region
      _
    $region17: #{protopnet_forward.1} parent=1 // pred_fallthru
      _
    // Predicated region
    $region18: #{protopnet_forward.1} parent=1 // pred_check
      _
    $region19: #{protopnet_forward.1} parent=1 // pred_check_branch
      %26 = sbr.rel (0) target = $region21
    $region20: #{protopnet_forward.1} parent=1 // pred_region
      _
    $region21: #{protopnet_forward.1} parent=1 // pred_fallthru
      _
    // Predicated region
    $region22: #{protopnet_forward.1} parent=1 // pred_check
      _
    $region23: #{protopnet_forward.1} parent=1 // pred_check_branch
      %28 = sbr.rel (0) target = $region25
    $region24: #{protopnet_forward.1} parent=1 // pred_region
      _
    $region25: #{protopnet_forward.1} parent=1 // pred_fallthru
      _
    // Predicated region
    $region26: #{protopnet_forward.1} parent=1 // pred_check
      _
    $region27: #{protopnet_forward.1} parent=1 // pred_check_branch
      %30 = sbr.rel (0) target = $region29
    $region28: #{protopnet_forward.1} parent=1 // pred_region
      _
    $region29: #{protopnet_forward.1} parent=1 // pred_fallthru
      _
    // Predicated region
    $region30: #{protopnet_forward.1} parent=1 // pred_check
      _
    $region31: #{protopnet_forward.1} parent=1 // pred_check_branch
      %32 = sbr.rel (0) target = $region33
    $region32: #{protopnet_forward.1} parent=1 // pred_region
      _
    $region33: #{protopnet_forward.1} parent=1 // pred_fallthru
      _
    %p33 = scmp.eq.s32.totalorder 0, 0
    // Predicated region
    $region34: #{protopnet_forward.1} parent=1 // pred_check
      %p34 = pneg %p33
    $region35: #{protopnet_forward.1} parent=1 // pred_check_branch
      %36 = sbr.rel (%p34) target = $region37
    $region36: #{protopnet_forward.1} parent=1 // pred_region
      %v37 = vld [vmem:[%s0] sm:$0xff]
      %v38 = vld [vmem:[%s0 + $0x8] sm:$0xff]
      %v39 = vld [vmem:[%s0 + $0x10] sm:$0xff]
      %v40 = vld [vmem:[%s0 + $0x18] sm:$0xff]
      %v41 = vld [vmem:[%s1] sm:$0xf]
      %v42 = vld [vmem:[%s2] sm:$0xf]
      %44 = vset.pattern.permute.xlu0 0
      %45 = vperm.xlu0 %44, %v42
      %v46 = vpop.permute.xlu0 %45
      %vm48 = vcmask 64512
      %v50 = vsel %vm48, %v41, 0
      %v52 = vand.u32 %v38, 4294901760
      %53 = vmatprep.subr.mxu0 %v52
      %v54 = vand.u32 %v37, 4294901760
      %55 = vmatpush1.msra.mxu0 %v54
      %56 = vmatprep.subr.mxu0 0.0
      %57 = vmatpush1.msra.mxu0 0.0
      %58 = vmatprep.subr.mxu0 0.0
      %59 = vmatpush1.msra.mxu0 0.0
      %60 = vmatprep.subr.mxu0 0.0
      %61 = vmatpush1.msra.mxu0 0.0
      %62 = vmatprep.subr.mxu0 0.0
      %63 = vmatpush1.msra.mxu0 0.0
      %64 = vmatprep.subr.mxu0 0.0
      %65 = vmatpush1.msra.mxu0 0.0
      %66 = vmatprep.subr.mxu0 0.0
      %67 = vmatpush1.msra.mxu0 0.0
      %68 = vmatprep.subr.mxu0 0.0
      %69 = vmatpush1.msra.mxu0 0.0
      %70 = vmatprep.subr.mxu0 0.0
      %71 = vmatpush1.msra.mxu0 0.0
      %72 = vmatprep.subr.mxu0 0.0
      %73 = vmatpush1.msra.mxu0 0.0
      %74 = vmatprep.subr.mxu0 0.0
      %75 = vmatpush1.msra.mxu0 0.0
      %76 = vmatprep.subr.mxu0 0.0
      %77 = vmatpush1.msra.mxu0 0.0
      %78 = vmatprep.subr.mxu0 0.0
      %79 = vmatpush1.msra.mxu0 0.0
      %80 = vmatprep.subr.mxu0 0.0
      %81 = vmatpush1.msra.mxu0 0.0
      %82 = vmatprep.subr.mxu0 0.0
      %83 = vmatpush1.msra.mxu0 0.0
      %84 = vmatprep.subr.mxu0 0.0
      %85 = vmatpush1.msra.mxu0 0.0
      %86 = vmatprep.subr.mxu0 0.0
      %87 = vmatpush1.msra.mxu0 0.0
      %88 = vmatprep.subr.mxu0 0.0
      %89 = vmatpush1.msra.mxu0 0.0
      %90 = vmatprep.subr.mxu0 0.0
      %91 = vmatpush1.msra.mxu0 0.0
      %92 = vmatprep.subr.mxu0 0.0
      %93 = vmatpush1.msra.mxu0 0.0
      %94 = vmatprep.subr.mxu0 0.0
      %95 = vmatpush1.msra.mxu0 0.0
      %96 = vmatprep.subr.mxu0 0.0
      %97 = vmatpush1.msra.mxu0 0.0
      %98 = vmatprep.subr.mxu0 0.0
      %99 = vmatpush1.msra.mxu0 0.0
      %100 = vmatprep.subr.mxu0 0.0
      %101 = vmatpush1.msra.mxu0 0.0
      %102 = vmatprep.subr.mxu0 0.0
      %103 = vmatpush1.msra.mxu0 0.0
      %104 = vmatprep.subr.mxu0 0.0
      %105 = vmatpush1.msra.mxu0 0.0
      %106 = vmatprep.subr.mxu0 0.0
      %107 = vmatpush1.msra.mxu0 0.0
      %108 = vmatprep.subr.mxu0 0.0
      %109 = vmatpush1.msra.mxu0 0.0
      %110 = vmatprep.subr.mxu0 0.0
      %111 = vmatpush1.msra.mxu0 0.0
      %112 = vmatprep.subr.mxu0 0.0
      %113 = vmatpush1.msra.mxu0 0.0
      %114 = vmatprep.subr.mxu0 0.0
      %115 = vmatpush1.msra.mxu0 0.0
      %116 = vmatprep.subr.mxu0 0.0
      %117 = vmatpush1.msra.mxu0 0.0
      %118 = vmatprep.mubr.f32.mxu0 0.0
      %v119 = vand.u32 %v50, 4294901760
      %v120 = vsub.f32 %v50, %v119
      %v121 = vand.u32 %v120, 4294901760
      %v122 = vsub.f32 %v120, %v121
      %v123 = vand.u32 %v122, 4294901760
      %124 = vmatmul.mubr.f32.gmra.mrb[0].mxu0 %v123
      %v125 = vpop.f32.mrb[0].mxu0
      %v126 = vadd.f32 %v46, %v125
      %v127 = vpop.f32.mrb[0].mxu0
      %v128 = vadd.f32 %v46, %v127
      %129 = vdwg.mxu0
      %v130 = vand.u32 %v38, 4294901760
      %v131 = vsub.f32 %v38, %v130
      %v132 = vand.u32 %v131, 4294901760
      %v133 = vsub.f32 %v131, %v132
      %v134 = vand.u32 %v133, 4294901760
      %135 = vmatprep.subr.mxu0 %v134
      %v136 = vand.u32 %v37, 4294901760
      %v137 = vsub.f32 %v37, %v136
      %v138 = vand.u32 %v137, 4294901760
      %v139 = vsub.f32 %v137, %v138
      %v140 = vand.u32 %v139, 4294901760
      %141 = vmatpush1.msra.mxu0 %v140
      %142 = vmatprep.subr.mxu0 0.0
      %143 = vmatpush1.msra.mxu0 0.0
      %144 = vmatprep.subr.mxu0 0.0
      %145 = vmatpush1.msra.mxu0 0.0
      %146 = vmatprep.subr.mxu0 0.0
      %147 = vmatpush1.msra.mxu0 0.0
      %148 = vmatprep.subr.mxu0 0.0
      %149 = vmatpush1.msra.mxu0 0.0
      %150 = vmatprep.subr.mxu0 0.0
      %151 = vmatpush1.msra.mxu0 0.0
      %152 = vmatprep.subr.mxu0 0.0
      %153 = vmatpush1.msra.mxu0 0.0
      %154 = vmatprep.subr.mxu0 0.0
      %155 = vmatpush1.msra.mxu0 0.0
      %156 = vmatprep.subr.mxu0 0.0
      %157 = vmatpush1.msra.mxu0 0.0
      %158 = vmatprep.subr.mxu0 0.0
      %159 = vmatpush1.msra.mxu0 0.0
      %160 = vmatprep.subr.mxu0 0.0
      %161 = vmatpush1.msra.mxu0 0.0
      %162 = vmatprep.subr.mxu0 0.0
      %163 = vmatpush1.msra.mxu0 0.0
      %164 = vmatprep.subr.mxu0 0.0
      %165 = vmatpush1.msra.mxu0 0.0
      %166 = vmatprep.subr.mxu0 0.0
      %167 = vmatpush1.msra.mxu0 0.0
      %168 = vmatprep.subr.mxu0 0.0
      %169 = vmatpush1.msra.mxu0 0.0
      %170 = vmatprep.subr.mxu0 0.0
      %171 = vmatpush1.msra.mxu0 0.0
      %172 = vmatprep.subr.mxu0 0.0
      %173 = vmatpush1.msra.mxu0 0.0
      %174 = vmatprep.subr.mxu0 0.0
      %175 = vmatpush1.msra.mxu0 0.0
      %176 = vmatprep.subr.mxu0 0.0
      %177 = vmatpush1.msra.mxu0 0.0
      %178 = vmatprep.subr.mxu0 0.0
      %179 = vmatpush1.msra.mxu0 0.0
      %180 = vmatprep.subr.mxu0 0.0
      %181 = vmatpush1.msra.mxu0 0.0
      %182 = vmatprep.subr.mxu0 0.0
      %183 = vmatpush1.msra.mxu0 0.0
      %184 = vmatprep.subr.mxu0 0.0
      %185 = vmatpush1.msra.mxu0 0.0
      %186 = vmatprep.subr.mxu0 0.0
      %187 = vmatpush1.msra.mxu0 0.0
      %188 = vmatprep.subr.mxu0 0.0
      %189 = vmatpush1.msra.mxu0 0.0
      %190 = vmatprep.subr.mxu0 0.0
      %191 = vmatpush1.msra.mxu0 0.0
      %192 = vmatprep.subr.mxu0 0.0
      %193 = vmatpush1.msra.mxu0 0.0
      %194 = vmatprep.subr.mxu0 0.0
      %195 = vmatpush1.msra.mxu0 0.0
      %196 = vmatprep.subr.mxu0 0.0
      %197 = vmatpush1.msra.mxu0 0.0
      %198 = vmatprep.subr.mxu0 0.0
      %199 = vmatpush1.msra.mxu0 0.0
      %200 = vmatprep.subr.mxu0 0.0
      %201 = vmatpush1.msra.mxu0 0.0
      %202 = vmatprep.subr.mxu0 0.0
      %203 = vmatpush1.msra.mxu0 0.0
      %204 = vmatprep.mubr.f32.mxu0 0.0
      %v205 = vand.u32 %v50, 4294901760
      %206 = vmatmul.mubr.f32.gmra.mrb[0].mxu0 %v205
      %v207 = vpop.f32.mrb[0].mxu0
      %v208 = vadd.f32 %v126, %v207
      %v209 = vpop.f32.mrb[0].mxu0
      %v210 = vadd.f32 %v128, %v209
      %211 = vdwg.mxu0
      %v212 = vand.u32 %v38, 4294901760
      %v213 = vsub.f32 %v38, %v212
      %214 = vmatprep.subr.mxu0 %v213
      %v215 = vand.u32 %v37, 4294901760
      %v216 = vsub.f32 %v37, %v215
      %217 = vmatpush1.msra.mxu0 %v216
      %218 = vmatprep.subr.mxu0 0.0
      %219 = vmatpush1.msra.mxu0 0.0
      %220 = vmatprep.subr.mxu0 0.0
      %221 = vmatpush1.msra.mxu0 0.0
      %222 = vmatprep.subr.mxu0 0.0
      %223 = vmatpush1.msra.mxu0 0.0
      %224 = vmatprep.subr.mxu0 0.0
      %225 = vmatpush1.msra.mxu0 0.0
      %226 = vmatprep.subr.mxu0 0.0
      %227 = vmatpush1.msra.mxu0 0.0
      %228 = vmatprep.subr.mxu0 0.0
      %229 = vmatpush1.msra.mxu0 0.0
      %230 = vmatprep.subr.mxu0 0.0
      %231 = vmatpush1.msra.mxu0 0.0
      %232 = vmatprep.subr.mxu0 0.0
      %233 = vmatpush1.msra.mxu0 0.0
      %234 = vmatprep.subr.mxu0 0.0
      %235 = vmatpush1.msra.mxu0 0.0
      %236 = vmatprep.subr.mxu0 0.0
      %237 = vmatpush1.msra.mxu0 0.0
      %238 = vmatprep.subr.mxu0 0.0
      %239 = vmatpush1.msra.mxu0 0.0
      %240 = vmatprep.subr.mxu0 0.0
      %241 = vmatpush1.msra.mxu0 0.0
      %242 = vmatprep.subr.mxu0 0.0
      %243 = vmatpush1.msra.mxu0 0.0
      %244 = vmatprep.subr.mxu0 0.0
      %245 = vmatpush1.msra.mxu0 0.0
      %246 = vmatprep.subr.mxu0 0.0
      %247 = vmatpush1.msra.mxu0 0.0
      %248 = vmatprep.subr.mxu0 0.0
      %249 = vmatpush1.msra.mxu0 0.0
      %250 = vmatprep.subr.mxu0 0.0
      %251 = vmatpush1.msra.mxu0 0.0
      %252 = vmatprep.subr.mxu0 0.0
      %253 = vmatpush1.msra.mxu0 0.0
      %254 = vmatprep.subr.mxu0 0.0
      %255 = vmatpush1.msra.mxu0 0.0
      %256 = vmatprep.subr.mxu0 0.0
      %257 = vmatpush1.msra.mxu0 0.0
      %258 = vmatprep.subr.mxu0 0.0
      %259 = vmatpush1.msra.mxu0 0.0
      %260 = vmatprep.subr.mxu0 0.0
      %261 = vmatpush1.msra.mxu0 0.0
      %262 = vmatprep.subr.mxu0 0.0
      %263 = vmatpush1.msra.mxu0 0.0
      %264 = vmatprep.subr.mxu0 0.0
      %265 = vmatpush1.msra.mxu0 0.0
      %266 = vmatprep.subr.mxu0 0.0
      %267 = vmatpush1.msra.mxu0 0.0
      %268 = vmatprep.subr.mxu0 0.0
      %269 = vmatpush1.msra.mxu0 0.0
      %270 = vmatprep.subr.mxu0 0.0
      %271 = vmatpush1.msra.mxu0 0.0
      %272 = vmatprep.subr.mxu0 0.0
      %273 = vmatpush1.msra.mxu0 0.0
      %274 = vmatprep.subr.mxu0 0.0
      %275 = vmatpush1.msra.mxu0 0.0
      %276 = vmatprep.subr.mxu0 0.0
      %277 = vmatpush1.msra.mxu0 0.0
      %278 = vmatprep.subr.mxu0 0.0
      %279 = vmatpush1.msra.mxu0 0.0
      %280 = vmatprep.mubr.f32.mxu0 0.0
      %v281 = vand.u32 %v50, 4294901760
      %v282 = vsub.f32 %v50, %v281
      %283 = vmatmul.mubr.f32.gmra.mrb[0].mxu0 %v282
      %v284 = vpop.f32.mrb[0].mxu0
      %v285 = vadd.f32 %v208, %v284
      %v286 = vpop.f32.mrb[0].mxu0
      %v287 = vadd.f32 %v210, %v286
      %288 = vdwg.mxu0
      %v289 = vand.u32 %v38, 4294901760
      %290 = vmatprep.subr.mxu0 %v289
      %v291 = vand.u32 %v37, 4294901760
      %292 = vmatpush1.msra.mxu0 %v291
      %293 = vmatprep.subr.mxu0 0.0
      %294 = vmatpush1.msra.mxu0 0.0
      %295 = vmatprep.subr.mxu0 0.0
      %296 = vmatpush1.msra.mxu0 0.0
      %297 = vmatprep.subr.mxu0 0.0
      %298 = vmatpush1.msra.mxu0 0.0
      %299 = vmatprep.subr.mxu0 0.0
      %300 = vmatpush1.msra.mxu0 0.0
      %301 = vmatprep.subr.mxu0 0.0
      %302 = vmatpush1.msra.mxu0 0.0
      %303 = vmatprep.subr.mxu0 0.0
      %304 = vmatpush1.msra.mxu0 0.0
      %305 = vmatprep.subr.mxu0 0.0
      %306 = vmatpush1.msra.mxu0 0.0
      %307 = vmatprep.subr.mxu0 0.0
      %308 = vmatpush1.msra.mxu0 0.0
      %309 = vmatprep.subr.mxu0 0.0
      %310 = vmatpush1.msra.mxu0 0.0
      %311 = vmatprep.subr.mxu0 0.0
      %312 = vmatpush1.msra.mxu0 0.0
      %313 = vmatprep.subr.mxu0 0.0
      %314 = vmatpush1.msra.mxu0 0.0
      %315 = vmatprep.subr.mxu0 0.0
      %316 = vmatpush1.msra.mxu0 0.0
      %317 = vmatprep.subr.mxu0 0.0
      %318 = vmatpush1.msra.mxu0 0.0
      %319 = vmatprep.subr.mxu0 0.0
      %320 = vmatpush1.msra.mxu0 0.0
      %321 = vmatprep.subr.mxu0 0.0
      %322 = vmatpush1.msra.mxu0 0.0
      %323 = vmatprep.subr.mxu0 0.0
      %324 = vmatpush1.msra.mxu0 0.0
      %325 = vmatprep.subr.mxu0 0.0
      %326 = vmatpush1.msra.mxu0 0.0
      %327 = vmatprep.subr.mxu0 0.0
      %328 = vmatpush1.msra.mxu0 0.0
      %329 = vmatprep.subr.mxu0 0.0
      %330 = vmatpush1.msra.mxu0 0.0
      %331 = vmatprep.subr.mxu0 0.0
      %332 = vmatpush1.msra.mxu0 0.0
      %333 = vmatprep.subr.mxu0 0.0
      %334 = vmatpush1.msra.mxu0 0.0
      %335 = vmatprep.subr.mxu0 0.0
      %336 = vmatpush1.msra.mxu0 0.0
      %337 = vmatprep.subr.mxu0 0.0
      %338 = vmatpush1.msra.mxu0 0.0
      %339 = vmatprep.subr.mxu0 0.0
      %340 = vmatpush1.msra.mxu0 0.0
      %341 = vmatprep.subr.mxu0 0.0
      %342 = vmatpush1.msra.mxu0 0.0
      %343 = vmatprep.subr.mxu0 0.0
      %344 = vmatpush1.msra.mxu0 0.0
      %345 = vmatprep.subr.mxu0 0.0
      %346 = vmatpush1.msra.mxu0 0.0
      %347 = vmatprep.subr.mxu0 0.0
      %348 = vmatpush1.msra.mxu0 0.0
      %349 = vmatprep.subr.mxu0 0.0
      %350 = vmatpush1.msra.mxu0 0.0
      %351 = vmatprep.subr.mxu0 0.0
      %352 = vmatpush1.msra.mxu0 0.0
      %353 = vmatprep.subr.mxu0 0.0
      %354 = vmatpush1.msra.mxu0 0.0
      %355 = vmatprep.mubr.f32.mxu0 0.0
      %v356 = vand.u32 %v50, 4294901760
      %v357 = vsub.f32 %v50, %v356
      %v358 = vand.u32 %v357, 4294901760
      %359 = vmatmul.mubr.f32.gmra.mrb[0].mxu0 %v358
      %v360 = vpop.f32.mrb[0].mxu0
      %v361 = vadd.f32 %v285, %v360
      %v362 = vpop.f32.mrb[0].mxu0
      %v363 = vadd.f32 %v287, %v362
      %364 = vdwg.mxu0
      %v365 = vand.u32 %v38, 4294901760
      %v366 = vsub.f32 %v38, %v365
      %v367 = vand.u32 %v366, 4294901760
      %368 = vmatprep.subr.mxu0 %v367
      %v369 = vand.u32 %v37, 4294901760
      %v370 = vsub.f32 %v37, %v369
      %v371 = vand.u32 %v370, 4294901760
      %372 = vmatpush1.msra.mxu0 %v371
      %373 = vmatprep.subr.mxu0 0.0
      %374 = vmatpush1.msra.mxu0 0.0
      %375 = vmatprep.subr.mxu0 0.0
      %376 = vmatpush1.msra.mxu0 0.0
      %377 = vmatprep.subr.mxu0 0.0
      %378 = vmatpush1.msra.mxu0 0.0
      %379 = vmatprep.subr.mxu0 0.0
      %380 = vmatpush1.msra.mxu0 0.0
      %381 = vmatprep.subr.mxu0 0.0
      %382 = vmatpush1.msra.mxu0 0.0
      %383 = vmatprep.subr.mxu0 0.0
      %384 = vmatpush1.msra.mxu0 0.0
      %385 = vmatprep.subr.mxu0 0.0
      %386 = vmatpush1.msra.mxu0 0.0
      %387 = vmatprep.subr.mxu0 0.0
      %388 = vmatpush1.msra.mxu0 0.0
      %389 = vmatprep.subr.mxu0 0.0
      %390 = vmatpush1.msra.mxu0 0.0
      %391 = vmatprep.subr.mxu0 0.0
      %392 = vmatpush1.msra.mxu0 0.0
      %393 = vmatprep.subr.mxu0 0.0
      %394 = vmatpush1.msra.mxu0 0.0
      %395 = vmatprep.subr.mxu0 0.0
      %396 = vmatpush1.msra.mxu0 0.0
      %397 = vmatprep.subr.mxu0 0.0
      %398 = vmatpush1.msra.mxu0 0.0
      %399 = vmatprep.subr.mxu0 0.0
      %400 = vmatpush1.msra.mxu0 0.0
      %401 = vmatprep.subr.mxu0 0.0
      %402 = vmatpush1.msra.mxu0 0.0
      %403 = vmatprep.subr.mxu0 0.0
      %404 = vmatpush1.msra.mxu0 0.0
      %405 = vmatprep.subr.mxu0 0.0
      %406 = vmatpush1.msra.mxu0 0.0
      %407 = vmatprep.subr.mxu0 0.0
      %408 = vmatpush1.msra.mxu0 0.0
      %409 = vmatprep.subr.mxu0 0.0
      %410 = vmatpush1.msra.mxu0 0.0
      %411 = vmatprep.subr.mxu0 0.0
      %412 = vmatpush1.msra.mxu0 0.0
      %413 = vmatprep.subr.mxu0 0.0
      %414 = vmatpush1.msra.mxu0 0.0
      %415 = vmatprep.subr.mxu0 0.0
      %416 = vmatpush1.msra.mxu0 0.0
      %417 = vmatprep.subr.mxu0 0.0
      %418 = vmatpush1.msra.mxu0 0.0
      %419 = vmatprep.subr.mxu0 0.0
      %420 = vmatpush1.msra.mxu0 0.0
      %421 = vmatprep.subr.mxu0 0.0
      %422 = vmatpush1.msra.mxu0 0.0
      %423 = vmatprep.subr.mxu0 0.0
      %424 = vmatpush1.msra.mxu0 0.0
      %425 = vmatprep.subr.mxu0 0.0
      %426 = vmatpush1.msra.mxu0 0.0
      %427 = vmatprep.subr.mxu0 0.0
      %428 = vmatpush1.msra.mxu0 0.0
      %429 = vmatprep.subr.mxu0 0.0
      %430 = vmatpush1.msra.mxu0 0.0
      %431 = vmatprep.subr.mxu0 0.0
      %432 = vmatpush1.msra.mxu0 0.0
      %433 = vmatprep.subr.mxu0 0.0
      %434 = vmatpush1.msra.mxu0 0.0
      %435 = vmatprep.mubr.f32.mxu0 0.0
      %v436 = vand.u32 %v50, 4294901760
      %437 = vmatmul.mubr.f32.gmra.mrb[0].mxu0 %v436
      %v438 = vpop.f32.mrb[0].mxu0
      %v439 = vadd.f32 %v361, %v438
      %v440 = vpop.f32.mrb[0].mxu0
      %v441 = vadd.f32 %v363, %v440
      %442 = vdwg.mxu0
      %v443 = vand.u32 %v38, 4294901760
      %444 = vmatprep.subr.mxu0 %v443
      %v445 = vand.u32 %v37, 4294901760
      %446 = vmatpush1.msra.mxu0 %v445
      %447 = vmatprep.subr.mxu0 0.0
      %448 = vmatpush1.msra.mxu0 0.0
      %449 = vmatprep.subr.mxu0 0.0
      %450 = vmatpush1.msra.mxu0 0.0
      %451 = vmatprep.subr.mxu0 0.0
      %452 = vmatpush1.msra.mxu0 0.0
      %453 = vmatprep.subr.mxu0 0.0
      %454 = vmatpush1.msra.mxu0 0.0
      %455 = vmatprep.subr.mxu0 0.0
      %456 = vmatpush1.msra.mxu0 0.0
      %457 = vmatprep.subr.mxu0 0.0
      %458 = vmatpush1.msra.mxu0 0.0
      %459 = vmatprep.subr.mxu0 0.0
      %460 = vmatpush1.msra.mxu0 0.0
      %461 = vmatprep.subr.mxu0 0.0
      %462 = vmatpush1.msra.mxu0 0.0
      %463 = vmatprep.subr.mxu0 0.0
      %464 = vmatpush1.msra.mxu0 0.0
      %465 = vmatprep.subr.mxu0 0.0
      %466 = vmatpush1.msra.mxu0 0.0
      %467 = vmatprep.subr.mxu0 0.0
      %468 = vmatpush1.msra.mxu0 0.0
      %469 = vmatprep.subr.mxu0 0.0
      %470 = vmatpush1.msra.mxu0 0.0
      %471 = vmatprep.subr.mxu0 0.0
      %472 = vmatpush1.msra.mxu0 0.0
      %473 = vmatprep.subr.mxu0 0.0
      %474 = vmatpush1.msra.mxu0 0.0
      %475 = vmatprep.subr.mxu0 0.0
      %476 = vmatpush1.msra.mxu0 0.0
      %477 = vmatprep.subr.mxu0 0.0
      %478 = vmatpush1.msra.mxu0 0.0
      %479 = vmatprep.subr.mxu0 0.0
      %480 = vmatpush1.msra.mxu0 0.0
      %481 = vmatprep.subr.mxu0 0.0
      %482 = vmatpush1.msra.mxu0 0.0
      %483 = vmatprep.subr.mxu0 0.0
      %484 = vmatpush1.msra.mxu0 0.0
      %485 = vmatprep.subr.mxu0 0.0
      %486 = vmatpush1.msra.mxu0 0.0
      %487 = vmatprep.subr.mxu0 0.0
      %488 = vmatpush1.msra.mxu0 0.0
      %489 = vmatprep.subr.mxu0 0.0
      %490 = vmatpush1.msra.mxu0 0.0
      %491 = vmatprep.subr.mxu0 0.0
      %492 = vmatpush1.msra.mxu0 0.0
      %493 = vmatprep.subr.mxu0 0.0
      %494 = vmatpush1.msra.mxu0 0.0
      %495 = vmatprep.subr.mxu0 0.0
      %496 = vmatpush1.msra.mxu0 0.0
      %497 = vmatprep.subr.mxu0 0.0
      %498 = vmatpush1.msra.mxu0 0.0
      %499 = vmatprep.subr.mxu0 0.0
      %500 = vmatpush1.msra.mxu0 0.0
      %501 = vmatprep.subr.mxu0 0.0
      %502 = vmatpush1.msra.mxu0 0.0
      %503 = vmatprep.subr.mxu0 0.0
      %504 = vmatpush1.msra.mxu0 0.0
      %505 = vmatprep.subr.mxu0 0.0
      %506 = vmatpush1.msra.mxu0 0.0
      %507 = vmatprep.subr.mxu0 0.0
      %508 = vmatpush1.msra.mxu0 0.0
      %509 = vmatprep.mubr.f32.mxu0 0.0
      %v510 = vand.u32 %v50, 4294901760
      %511 = vmatmul.mubr.f32.gmra.mrb[0].mxu0 %v510
      %v512 = vpop.f32.mrb[0].mxu0
      %v513 = vadd.f32 %v439, %v512
      %v514 = vpop.f32.mrb[0].mxu0
      %v515 = vadd.f32 %v441, %v514
      %516 = vdwg.mxu0
      %v517 = vand.u32 %v40, 4294901760
      %518 = vmatprep.subr.mxu0 %v517
      %v519 = vand.u32 %v39, 4294901760
      %520 = vmatpush1.msra.mxu0 %v519
      %521 = vmatprep.subr.mxu0 0.0
      %522 = vmatpush1.msra.mxu0 0.0
      %523 = vmatprep.subr.mxu0 0.0
      %524 = vmatpush1.msra.mxu0 0.0
      %525 = vmatprep.subr.mxu0 0.0
      %526 = vmatpush1.msra.mxu0 0.0
      %527 = vmatprep.subr.mxu0 0.0
      %528 = vmatpush1.msra.mxu0 0.0
      %529 = vmatprep.subr.mxu0 0.0
      %530 = vmatpush1.msra.mxu0 0.0
      %531 = vmatprep.subr.mxu0 0.0
      %532 = vmatpush1.msra.mxu0 0.0
      %533 = vmatprep.subr.mxu0 0.0
      %534 = vmatpush1.msra.mxu0 0.0
      %535 = vmatprep.subr.mxu0 0.0
      %536 = vmatpush1.msra.mxu0 0.0
      %537 = vmatprep.subr.mxu0 0.0
      %538 = vmatpush1.msra.mxu0 0.0
      %539 = vmatprep.subr.mxu0 0.0
      %540 = vmatpush1.msra.mxu0 0.0
      %541 = vmatprep.subr.mxu0 0.0
      %542 = vmatpush1.msra.mxu0 0.0
      %543 = vmatprep.subr.mxu0 0.0
      %544 = vmatpush1.msra.mxu0 0.0
      %545 = vmatprep.subr.mxu0 0.0
      %546 = vmatpush1.msra.mxu0 0.0
      %547 = vmatprep.subr.mxu0 0.0
      %548 = vmatpush1.msra.mxu0 0.0
      %549 = vmatprep.subr.mxu0 0.0
      %550 = vmatpush1.msra.mxu0 0.0
      %551 = vmatprep.subr.mxu0 0.0
      %552 = vmatpush1.msra.mxu0 0.0
      %553 = vmatprep.subr.mxu0 0.0
      %554 = vmatpush1.msra.mxu0 0.0
      %555 = vmatprep.subr.mxu0 0.0
      %556 = vmatpush1.msra.mxu0 0.0
      %557 = vmatprep.subr.mxu0 0.0
      %558 = vmatpush1.msra.mxu0 0.0
      %559 = vmatprep.subr.mxu0 0.0
      %560 = vmatpush1.msra.mxu0 0.0
      %561 = vmatprep.subr.mxu0 0.0
      %562 = vmatpush1.msra.mxu0 0.0
      %563 = vmatprep.subr.mxu0 0.0
      %564 = vmatpush1.msra.mxu0 0.0
      %565 = vmatprep.subr.mxu0 0.0
      %566 = vmatpush1.msra.mxu0 0.0
      %567 = vmatprep.subr.mxu0 0.0
      %568 = vmatpush1.msra.mxu0 0.0
      %569 = vmatprep.subr.mxu0 0.0
      %570 = vmatpush1.msra.mxu0 0.0
      %571 = vmatprep.subr.mxu0 0.0
      %572 = vmatpush1.msra.mxu0 0.0
      %573 = vmatprep.subr.mxu0 0.0
      %574 = vmatpush1.msra.mxu0 0.0
      %575 = vmatprep.subr.mxu0 0.0
      %576 = vmatpush1.msra.mxu0 0.0
      %577 = vmatprep.subr.mxu0 0.0
      %578 = vmatpush1.msra.mxu0 0.0
      %579 = vmatprep.subr.mxu0 0.0
      %580 = vmatpush1.msra.mxu0 0.0
      %581 = vmatprep.subr.mxu0 0.0
      %582 = vmatpush1.msra.mxu0 0.0
      %583 = vmatprep.mubr.f32.mxu0 0.0
      %v584 = vand.u32 %v50, 4294901760
      %v585 = vsub.f32 %v50, %v584
      %v586 = vand.u32 %v585, 4294901760
      %v587 = vsub.f32 %v585, %v586
      %v588 = vand.u32 %v587, 4294901760
      %589 = vmatmul.mubr.f32.gmra.mrb[0].mxu0 %v588
      %v590 = vpop.f32.mrb[0].mxu0
      %v591 = vadd.f32 %v46, %v590
      %v592 = vpop.f32.mrb[0].mxu0
      %v593 = vadd.f32 %v46, %v592
      %594 = vdwg.mxu0
      %v595 = vand.u32 %v40, 4294901760
      %v596 = vsub.f32 %v40, %v595
      %v597 = vand.u32 %v596, 4294901760
      %v598 = vsub.f32 %v596, %v597
      %v599 = vand.u32 %v598, 4294901760
      %600 = vmatprep.subr.mxu0 %v599
      %v601 = vand.u32 %v39, 4294901760
      %v602 = vsub.f32 %v39, %v601
      %v603 = vand.u32 %v602, 4294901760
      %v604 = vsub.f32 %v602, %v603
      %v605 = vand.u32 %v604, 4294901760
      %606 = vmatpush1.msra.mxu0 %v605
      %607 = vmatprep.subr.mxu0 0.0
      %608 = vmatpush1.msra.mxu0 0.0
      %609 = vmatprep.subr.mxu0 0.0
      %610 = vmatpush1.msra.mxu0 0.0
      %611 = vmatprep.subr.mxu0 0.0
      %612 = vmatpush1.msra.mxu0 0.0
      %613 = vmatprep.subr.mxu0 0.0
      %614 = vmatpush1.msra.mxu0 0.0
      %615 = vmatprep.subr.mxu0 0.0
      %616 = vmatpush1.msra.mxu0 0.0
      %617 = vmatprep.subr.mxu0 0.0
      %618 = vmatpush1.msra.mxu0 0.0
      %619 = vmatprep.subr.mxu0 0.0
      %620 = vmatpush1.msra.mxu0 0.0
      %621 = vmatprep.subr.mxu0 0.0
      %622 = vmatpush1.msra.mxu0 0.0
      %623 = vmatprep.subr.mxu0 0.0
      %624 = vmatpush1.msra.mxu0 0.0
      %625 = vmatprep.subr.mxu0 0.0
      %626 = vmatpush1.msra.mxu0 0.0
      %627 = vmatprep.subr.mxu0 0.0
      %628 = vmatpush1.msra.mxu0 0.0
      %629 = vmatprep.subr.mxu0 0.0
      %630 = vmatpush1.msra.mxu0 0.0
      %631 = vmatprep.subr.mxu0 0.0
      %632 = vmatpush1.msra.mxu0 0.0
      %633 = vmatprep.subr.mxu0 0.0
      %634 = vmatpush1.msra.mxu0 0.0
      %635 = vmatprep.subr.mxu0 0.0
      %636 = vmatpush1.msra.mxu0 0.0
      %637 = vmatprep.subr.mxu0 0.0
      %638 = vmatpush1.msra.mxu0 0.0
      %639 = vmatprep.subr.mxu0 0.0
      %640 = vmatpush1.msra.mxu0 0.0
      %641 = vmatprep.subr.mxu0 0.0
      %642 = vmatpush1.msra.mxu0 0.0
      %643 = vmatprep.subr.mxu0 0.0
      %644 = vmatpush1.msra.mxu0 0.0
      %645 = vmatprep.subr.mxu0 0.0
      %646 = vmatpush1.msra.mxu0 0.0
      %647 = vmatprep.subr.mxu0 0.0
      %648 = vmatpush1.msra.mxu0 0.0
      %649 = vmatprep.subr.mxu0 0.0
      %650 = vmatpush1.msra.mxu0 0.0
      %651 = vmatprep.subr.mxu0 0.0
      %652 = vmatpush1.msra.mxu0 0.0
      %653 = vmatprep.subr.mxu0 0.0
      %654 = vmatpush1.msra.mxu0 0.0
      %655 = vmatprep.subr.mxu0 0.0
      %656 = vmatpush1.msra.mxu0 0.0
      %657 = vmatprep.subr.mxu0 0.0
      %658 = vmatpush1.msra.mxu0 0.0
      %659 = vmatprep.subr.mxu0 0.0
      %660 = vmatpush1.msra.mxu0 0.0
      %661 = vmatprep.subr.mxu0 0.0
      %662 = vmatpush1.msra.mxu0 0.0
      %663 = vmatprep.subr.mxu0 0.0
      %664 = vmatpush1.msra.mxu0 0.0
      %665 = vmatprep.subr.mxu0 0.0
      %666 = vmatpush1.msra.mxu0 0.0
      %667 = vmatprep.subr.mxu0 0.0
      %668 = vmatpush1.msra.mxu0 0.0
      %669 = vmatprep.mubr.f32.mxu0 0.0
      %v670 = vand.u32 %v50, 4294901760
      %671 = vmatmul.mubr.f32.gmra.mrb[0].mxu0 %v670
      %v672 = vpop.f32.mrb[0].mxu0
      %v673 = vadd.f32 %v591, %v672
      %v674 = vpop.f32.mrb[0].mxu0
      %v675 = vadd.f32 %v593, %v674
      %676 = vdwg.mxu0
      %v677 = vand.u32 %v40, 4294901760
      %v678 = vsub.f32 %v40, %v677
      %679 = vmatprep.subr.mxu0 %v678
      %v680 = vand.u32 %v39, 4294901760
      %v681 = vsub.f32 %v39, %v680
      %682 = vmatpush1.msra.mxu0 %v681
      %683 = vmatprep.subr.mxu0 0.0
      %684 = vmatpush1.msra.mxu0 0.0
      %685 = vmatprep.subr.mxu0 0.0
      %686 = vmatpush1.msra.mxu0 0.0
      %687 = vmatprep.subr.mxu0 0.0
      %688 = vmatpush1.msra.mxu0 0.0
      %689 = vmatprep.subr.mxu0 0.0
      %690 = vmatpush1.msra.mxu0 0.0
      %691 = vmatprep.subr.mxu0 0.0
      %692 = vmatpush1.msra.mxu0 0.0
      %693 = vmatprep.subr.mxu0 0.0
      %694 = vmatpush1.msra.mxu0 0.0
      %695 = vmatprep.subr.mxu0 0.0
      %696 = vmatpush1.msra.mxu0 0.0
      %697 = vmatprep.subr.mxu0 0.0
      %698 = vmatpush1.msra.mxu0 0.0
      %699 = vmatprep.subr.mxu0 0.0
      %700 = vmatpush1.msra.mxu0 0.0
      %701 = vmatprep.subr.mxu0 0.0
      %702 = vmatpush1.msra.mxu0 0.0
      %703 = vmatprep.subr.mxu0 0.0
      %704 = vmatpush1.msra.mxu0 0.0
      %705 = vmatprep.subr.mxu0 0.0
      %706 = vmatpush1.msra.mxu0 0.0
      %707 = vmatprep.subr.mxu0 0.0
      %708 = vmatpush1.msra.mxu0 0.0
      %709 = vmatprep.subr.mxu0 0.0
      %710 = vmatpush1.msra.mxu0 0.0
      %711 = vmatprep.subr.mxu0 0.0
      %712 = vmatpush1.msra.mxu0 0.0
      %713 = vmatprep.subr.mxu0 0.0
      %714 = vmatpush1.msra.mxu0 0.0
      %715 = vmatprep.subr.mxu0 0.0
      %716 = vmatpush1.msra.mxu0 0.0
      %717 = vmatprep.subr.mxu0 0.0
      %718 = vmatpush1.msra.mxu0 0.0
      %719 = vmatprep.subr.mxu0 0.0
      %720 = vmatpush1.msra.mxu0 0.0
      %721 = vmatprep.subr.mxu0 0.0
      %722 = vmatpush1.msra.mxu0 0.0
      %723 = vmatprep.subr.mxu0 0.0
      %724 = vmatpush1.msra.mxu0 0.0
      %725 = vmatprep.subr.mxu0 0.0
      %726 = vmatpush1.msra.mxu0 0.0
      %727 = vmatprep.subr.mxu0 0.0
      %728 = vmatpush1.msra.mxu0 0.0
      %729 = vmatprep.subr.mxu0 0.0
      %730 = vmatpush1.msra.mxu0 0.0
      %731 = vmatprep.subr.mxu0 0.0
      %732 = vmatpush1.msra.mxu0 0.0
      %733 = vmatprep.subr.mxu0 0.0
      %734 = vmatpush1.msra.mxu0 0.0
      %735 = vmatprep.subr.mxu0 0.0
      %736 = vmatpush1.msra.mxu0 0.0
      %737 = vmatprep.subr.mxu0 0.0
      %738 = vmatpush1.msra.mxu0 0.0
      %739 = vmatprep.subr.mxu0 0.0
      %740 = vmatpush1.msra.mxu0 0.0
      %741 = vmatprep.subr.mxu0 0.0
      %742 = vmatpush1.msra.mxu0 0.0
      %743 = vmatprep.subr.mxu0 0.0
      %744 = vmatpush1.msra.mxu0 0.0
      %745 = vmatprep.mubr.f32.mxu0 0.0
      %v746 = vand.u32 %v50, 4294901760
      %v747 = vsub.f32 %v50, %v746
      %748 = vmatmul.mubr.f32.gmra.mrb[0].mxu0 %v747
      %v749 = vpop.f32.mrb[0].mxu0
      %v750 = vadd.f32 %v673, %v749
      %v751 = vpop.f32.mrb[0].mxu0
      %v752 = vadd.f32 %v675, %v751
      %753 = vdwg.mxu0
      %v754 = vand.u32 %v40, 4294901760
      %755 = vmatprep.subr.mxu0 %v754
      %v756 = vand.u32 %v39, 4294901760
      %757 = vmatpush1.msra.mxu0 %v756
      %758 = vmatprep.subr.mxu0 0.0
      %759 = vmatpush1.msra.mxu0 0.0
      %760 = vmatprep.subr.mxu0 0.0
      %761 = vmatpush1.msra.mxu0 0.0
      %762 = vmatprep.subr.mxu0 0.0
      %763 = vmatpush1.msra.mxu0 0.0
      %764 = vmatprep.subr.mxu0 0.0
      %765 = vmatpush1.msra.mxu0 0.0
      %766 = vmatprep.subr.mxu0 0.0
      %767 = vmatpush1.msra.mxu0 0.0
      %768 = vmatprep.subr.mxu0 0.0
      %769 = vmatpush1.msra.mxu0 0.0
      %770 = vmatprep.subr.mxu0 0.0
      %771 = vmatpush1.msra.mxu0 0.0
      %772 = vmatprep.subr.mxu0 0.0
      %773 = vmatpush1.msra.mxu0 0.0
      %774 = vmatprep.subr.mxu0 0.0
      %775 = vmatpush1.msra.mxu0 0.0
      %776 = vmatprep.subr.mxu0 0.0
      %777 = vmatpush1.msra.mxu0 0.0
      %778 = vmatprep.subr.mxu0 0.0
      %779 = vmatpush1.msra.mxu0 0.0
      %780 = vmatprep.subr.mxu0 0.0
      %781 = vmatpush1.msra.mxu0 0.0
      %782 = vmatprep.subr.mxu0 0.0
      %783 = vmatpush1.msra.mxu0 0.0
      %784 = vmatprep.subr.mxu0 0.0
      %785 = vmatpush1.msra.mxu0 0.0
      %786 = vmatprep.subr.mxu0 0.0
      %787 = vmatpush1.msra.mxu0 0.0
      %788 = vmatprep.subr.mxu0 0.0
      %789 = vmatpush1.msra.mxu0 0.0
      %790 = vmatprep.subr.mxu0 0.0
      %791 = vmatpush1.msra.mxu0 0.0
      %792 = vmatprep.subr.mxu0 0.0
      %793 = vmatpush1.msra.mxu0 0.0
      %794 = vmatprep.subr.mxu0 0.0
      %795 = vmatpush1.msra.mxu0 0.0
      %796 = vmatprep.subr.mxu0 0.0
      %797 = vmatpush1.msra.mxu0 0.0
      %798 = vmatprep.subr.mxu0 0.0
      %799 = vmatpush1.msra.mxu0 0.0
      %800 = vmatprep.subr.mxu0 0.0
      %801 = vmatpush1.msra.mxu0 0.0
      %802 = vmatprep.subr.mxu0 0.0
      %803 = vmatpush1.msra.mxu0 0.0
      %804 = vmatprep.subr.mxu0 0.0
      %805 = vmatpush1.msra.mxu0 0.0
      %806 = vmatprep.subr.mxu0 0.0
      %807 = vmatpush1.msra.mxu0 0.0
      %808 = vmatprep.subr.mxu0 0.0
      %809 = vmatpush1.msra.mxu0 0.0
      %810 = vmatprep.subr.mxu0 0.0
      %811 = vmatpush1.msra.mxu0 0.0
      %812 = vmatprep.subr.mxu0 0.0
      %813 = vmatpush1.msra.mxu0 0.0
      %814 = vmatprep.subr.mxu0 0.0
      %815 = vmatpush1.msra.mxu0 0.0
      %816 = vmatprep.subr.mxu0 0.0
      %817 = vmatpush1.msra.mxu0 0.0
      %818 = vmatprep.subr.mxu0 0.0
      %819 = vmatpush1.msra.mxu0 0.0
      %820 = vmatprep.mubr.f32.mxu0 0.0
      %v821 = vand.u32 %v50, 4294901760
      %v822 = vsub.f32 %v50, %v821
      %v823 = vand.u32 %v822, 4294901760
      %824 = vmatmul.mubr.f32.gmra.mrb[0].mxu0 %v823
      %v825 = vpop.f32.mrb[0].mxu0
      %v826 = vadd.f32 %v750, %v825
      %v827 = vpop.f32.mrb[0].mxu0
      %v828 = vadd.f32 %v752, %v827
      %829 = vdwg.mxu0
      %v830 = vand.u32 %v40, 4294901760
      %v831 = vsub.f32 %v40, %v830
      %v832 = vand.u32 %v831, 4294901760
      %833 = vmatprep.subr.mxu0 %v832
      %v834 = vand.u32 %v39, 4294901760
      %v835 = vsub.f32 %v39, %v834
      %v836 = vand.u32 %v835, 4294901760
      %837 = vmatpush1.msra.mxu0 %v836
      %838 = vmatprep.subr.mxu0 0.0
      %839 = vmatpush1.msra.mxu0 0.0
      %840 = vmatprep.subr.mxu0 0.0
      %841 = vmatpush1.msra.mxu0 0.0
      %842 = vmatprep.subr.mxu0 0.0
      %843 = vmatpush1.msra.mxu0 0.0
      %844 = vmatprep.subr.mxu0 0.0
      %845 = vmatpush1.msra.mxu0 0.0
      %846 = vmatprep.subr.mxu0 0.0
      %847 = vmatpush1.msra.mxu0 0.0
      %848 = vmatprep.subr.mxu0 0.0
      %849 = vmatpush1.msra.mxu0 0.0
      %850 = vmatprep.subr.mxu0 0.0
      %851 = vmatpush1.msra.mxu0 0.0
      %852 = vmatprep.subr.mxu0 0.0
      %853 = vmatpush1.msra.mxu0 0.0
      %854 = vmatprep.subr.mxu0 0.0
      %855 = vmatpush1.msra.mxu0 0.0
      %856 = vmatprep.subr.mxu0 0.0
      %857 = vmatpush1.msra.mxu0 0.0
      %858 = vmatprep.subr.mxu0 0.0
      %859 = vmatpush1.msra.mxu0 0.0
      %860 = vmatprep.subr.mxu0 0.0
      %861 = vmatpush1.msra.mxu0 0.0
      %862 = vmatprep.subr.mxu0 0.0
      %863 = vmatpush1.msra.mxu0 0.0
      %864 = vmatprep.subr.mxu0 0.0
      %865 = vmatpush1.msra.mxu0 0.0
      %866 = vmatprep.subr.mxu0 0.0
      %867 = vmatpush1.msra.mxu0 0.0
      %868 = vmatprep.subr.mxu0 0.0
      %869 = vmatpush1.msra.mxu0 0.0
      %870 = vmatprep.subr.mxu0 0.0
      %871 = vmatpush1.msra.mxu0 0.0
      %872 = vmatprep.subr.mxu0 0.0
      %873 = vmatpush1.msra.mxu0 0.0
      %874 = vmatprep.subr.mxu0 0.0
      %875 = vmatpush1.msra.mxu0 0.0
      %876 = vmatprep.subr.mxu0 0.0
      %877 = vmatpush1.msra.mxu0 0.0
      %878 = vmatprep.subr.mxu0 0.0
      %879 = vmatpush1.msra.mxu0 0.0
      %880 = vmatprep.subr.mxu0 0.0
      %881 = vmatpush1.msra.mxu0 0.0
      %882 = vmatprep.subr.mxu0 0.0
      %883 = vmatpush1.msra.mxu0 0.0
      %884 = vmatprep.subr.mxu0 0.0
      %885 = vmatpush1.msra.mxu0 0.0
      %886 = vmatprep.subr.mxu0 0.0
      %887 = vmatpush1.msra.mxu0 0.0
      %888 = vmatprep.subr.mxu0 0.0
      %889 = vmatpush1.msra.mxu0 0.0
      %890 = vmatprep.subr.mxu0 0.0
      %891 = vmatpush1.msra.mxu0 0.0
      %892 = vmatprep.subr.mxu0 0.0
      %893 = vmatpush1.msra.mxu0 0.0
      %894 = vmatprep.subr.mxu0 0.0
      %895 = vmatpush1.msra.mxu0 0.0
      %896 = vmatprep.subr.mxu0 0.0
      %897 = vmatpush1.msra.mxu0 0.0
      %898 = vmatprep.subr.mxu0 0.0
      %899 = vmatpush1.msra.mxu0 0.0
      %900 = vmatprep.mubr.f32.mxu0 0.0
      %v901 = vand.u32 %v50, 4294901760
      %902 = vmatmul.mubr.f32.gmra.mrb[0].mxu0 %v901
      %v903 = vpop.f32.mrb[0].mxu0
      %v904 = vadd.f32 %v826, %v903
      %v905 = vpop.f32.mrb[0].mxu0
      %v906 = vadd.f32 %v828, %v905
      %907 = vdwg.mxu0
      %v908 = vand.u32 %v40, 4294901760
      %909 = vmatprep.subr.mxu0 %v908
      %v910 = vand.u32 %v39, 4294901760
      %911 = vmatpush1.msra.mxu0 %v910
      %912 = vmatprep.subr.mxu0 0.0
      %913 = vmatpush1.msra.mxu0 0.0
      %914 = vmatprep.subr.mxu0 0.0
      %915 = vmatpush1.msra.mxu0 0.0
      %916 = vmatprep.subr.mxu0 0.0
      %917 = vmatpush1.msra.mxu0 0.0
      %918 = vmatprep.subr.mxu0 0.0
      %919 = vmatpush1.msra.mxu0 0.0
      %920 = vmatprep.subr.mxu0 0.0
      %921 = vmatpush1.msra.mxu0 0.0
      %922 = vmatprep.subr.mxu0 0.0
      %923 = vmatpush1.msra.mxu0 0.0
      %924 = vmatprep.subr.mxu0 0.0
      %925 = vmatpush1.msra.mxu0 0.0
      %926 = vmatprep.subr.mxu0 0.0
      %927 = vmatpush1.msra.mxu0 0.0
      %928 = vmatprep.subr.mxu0 0.0
      %929 = vmatpush1.msra.mxu0 0.0
      %930 = vmatprep.subr.mxu0 0.0
      %931 = vmatpush1.msra.mxu0 0.0
      %932 = vmatprep.subr.mxu0 0.0
      %933 = vmatpush1.msra.mxu0 0.0
      %934 = vmatprep.subr.mxu0 0.0
      %935 = vmatpush1.msra.mxu0 0.0
      %936 = vmatprep.subr.mxu0 0.0
      %937 = vmatpush1.msra.mxu0 0.0
      %938 = vmatprep.subr.mxu0 0.0
      %939 = vmatpush1.msra.mxu0 0.0
      %940 = vmatprep.subr.mxu0 0.0
      %941 = vmatpush1.msra.mxu0 0.0
      %942 = vmatprep.subr.mxu0 0.0
      %943 = vmatpush1.msra.mxu0 0.0
      %944 = vmatprep.subr.mxu0 0.0
      %945 = vmatpush1.msra.mxu0 0.0
      %946 = vmatprep.subr.mxu0 0.0
      %947 = vmatpush1.msra.mxu0 0.0
      %948 = vmatprep.subr.mxu0 0.0
      %949 = vmatpush1.msra.mxu0 0.0
      %950 = vmatprep.subr.mxu0 0.0
      %951 = vmatpush1.msra.mxu0 0.0
      %952 = vmatprep.subr.mxu0 0.0
      %953 = vmatpush1.msra.mxu0 0.0
      %954 = vmatprep.subr.mxu0 0.0
      %955 = vmatpush1.msra.mxu0 0.0
      %956 = vmatprep.subr.mxu0 0.0
      %957 = vmatpush1.msra.mxu0 0.0
      %958 = vmatprep.subr.mxu0 0.0
      %959 = vmatpush1.msra.mxu0 0.0
      %960 = vmatprep.subr.mxu0 0.0
      %961 = vmatpush1.msra.mxu0 0.0
      %962 = vmatprep.subr.mxu0 0.0
      %963 = vmatpush1.msra.mxu0 0.0
      %964 = vmatprep.subr.mxu0 0.0
      %965 = vmatpush1.msra.mxu0 0.0
      %966 = vmatprep.subr.mxu0 0.0
      %967 = vmatpush1.msra.mxu0 0.0
      %968 = vmatprep.subr.mxu0 0.0
      %969 = vmatpush1.msra.mxu0 0.0
      %970 = vmatprep.subr.mxu0 0.0
      %971 = vmatpush1.msra.mxu0 0.0
      %972 = vmatprep.subr.mxu0 0.0
      %973 = vmatpush1.msra.mxu0 0.0
      %974 = vmatprep.mubr.f32.mxu0 0.0
      %v975 = vand.u32 %v50, 4294901760
      %976 = vmatmul.mubr.f32.gmra.mrb[0].mxu0 %v975
      %v977 = vpop.f32.mrb[0].mxu0
      %v978 = vadd.f32 %v904, %v977
      %v979 = vpop.f32.mrb[0].mxu0
      %v980 = vadd.f32 %v906, %v979
      %981 = vdwg.mxu0
      %v982 = vmax.f32 %v513, 0.0
      %v983 = vmax.f32 %v515, 0.0
      %v984 = vmax.f32 %v978, 0.0
      %v985 = vmax.f32 %v980, 0.0
      %v986 = vld [vmem:[%s3] sm:$0xf]
      %v987 = vld [vmem:[%s4] sm:$0xf]
      %989 = vset.pattern.permute.xlu0 0
      %990 = vperm.xlu0 %989, %v987
      %v991 = vpop.permute.xlu0 %990
      %vm993 = vcmask 31744
      %v995 = vsel %vm993, %v986, 0
      %vm997 = vcmask 1043456
      %v999 = vsel %vm997, %v982, 0
      %v1002 = vsel %vm997, %v983, 0
      %v1005 = vsel %vm997, %v984, 0
      %v1008 = vsel %vm997, %v985, 0
      %v1010 = vand.u32 %v1002, 4294901760
      %1011 = vmatprep.subr.mxu0 %v1010
      %v1012 = vand.u32 %v999, 4294901760
      %1013 = vmatpush1.msra.mxu0 %v1012
      %1014 = vmatprep.subr.mxu0 0.0
      %1015 = vmatpush1.msra.mxu0 0.0
      %1016 = vmatprep.subr.mxu0 0.0
      %1017 = vmatpush1.msra.mxu0 0.0
      %1018 = vmatprep.subr.mxu0 0.0
      %1019 = vmatpush1.msra.mxu0 0.0
      %1020 = vmatprep.subr.mxu0 0.0
      %1021 = vmatpush1.msra.mxu0 0.0
      %1022 = vmatprep.subr.mxu0 0.0
      %1023 = vmatpush1.msra.mxu0 0.0
      %1024 = vmatprep.subr.mxu0 0.0
      %1025 = vmatpush1.msra.mxu0 0.0
      %1026 = vmatprep.subr.mxu0 0.0
      %1027 = vmatpush1.msra.mxu0 0.0
      %1028 = vmatprep.subr.mxu0 0.0
      %1029 = vmatpush1.msra.mxu0 0.0
      %1030 = vmatprep.subr.mxu0 0.0
      %1031 = vmatpush1.msra.mxu0 0.0
      %1032 = vmatprep.subr.mxu0 0.0
      %1033 = vmatpush1.msra.mxu0 0.0
      %1034 = vmatprep.subr.mxu0 0.0
      %1035 = vmatpush1.msra.mxu0 0.0
      %1036 = vmatprep.subr.mxu0 0.0
      %1037 = vmatpush1.msra.mxu0 0.0
      %1038 = vmatprep.subr.mxu0 0.0
      %1039 = vmatpush1.msra.mxu0 0.0
      %1040 = vmatprep.subr.mxu0 0.0
      %1041 = vmatpush1.msra.mxu0 0.0
      %1042 = vmatprep.subr.mxu0 0.0
      %1043 = vmatpush1.msra.mxu0 0.0
      %1044 = vmatprep.subr.mxu0 0.0
      %1045 = vmatpush1.msra.mxu0 0.0
      %1046 = vmatprep.subr.mxu0 0.0
      %1047 = vmatpush1.msra.mxu0 0.0
      %1048 = vmatprep.subr.mxu0 0.0
      %1049 = vmatpush1.msra.mxu0 0.0
      %1050 = vmatprep.subr.mxu0 0.0
      %1051 = vmatpush1.msra.mxu0 0.0
      %1052 = vmatprep.subr.mxu0 0.0
      %1053 = vmatpush1.msra.mxu0 0.0
      %1054 = vmatprep.subr.mxu0 0.0
      %1055 = vmatpush1.msra.mxu0 0.0
      %1056 = vmatprep.subr.mxu0 0.0
      %1057 = vmatpush1.msra.mxu0 0.0
      %1058 = vmatprep.subr.mxu0 0.0
      %1059 = vmatpush1.msra.mxu0 0.0
      %1060 = vmatprep.subr.mxu0 0.0
      %1061 = vmatpush1.msra.mxu0 0.0
      %1062 = vmatprep.subr.mxu0 0.0
      %1063 = vmatpush1.msra.mxu0 0.0
      %1064 = vmatprep.subr.mxu0 0.0
      %1065 = vmatpush1.msra.mxu0 0.0
      %1066 = vmatprep.subr.mxu0 0.0
      %1067 = vmatpush1.msra.mxu0 0.0
      %1068 = vmatprep.subr.mxu0 0.0
      %1069 = vmatpush1.msra.mxu0 0.0
      %1070 = vmatprep.subr.mxu0 0.0
      %1071 = vmatpush1.msra.mxu0 0.0
      %1072 = vmatprep.subr.mxu0 0.0
      %1073 = vmatpush1.msra.mxu0 0.0
      %1074 = vmatprep.subr.mxu0 0.0
      %1075 = vmatpush1.msra.mxu0 0.0
      %1076 = vmatprep.mubr.f32.mxu0 0.0
      %v1077 = vand.u32 %v995, 4294901760
      %v1078 = vsub.f32 %v995, %v1077
      %v1079 = vand.u32 %v1078, 4294901760
      %v1080 = vsub.f32 %v1078, %v1079
      %v1081 = vand.u32 %v1080, 4294901760
      %1082 = vmatmul.mubr.f32.gmra.mrb[0].mxu0 %v1081
      %v1083 = vpop.f32.mrb[0].mxu0
      %v1084 = vadd.f32 %v991, %v1083
      %v1085 = vpop.f32.mrb[0].mxu0
      %v1086 = vadd.f32 %v991, %v1085
      %1087 = vdwg.mxu0
      %v1088 = vand.u32 %v1002, 4294901760
      %v1089 = vsub.f32 %v1002, %v1088
      %v1090 = vand.u32 %v1089, 4294901760
      %v1091 = vsub.f32 %v1089, %v1090
      %v1092 = vand.u32 %v1091, 4294901760
      %1093 = vmatprep.subr.mxu0 %v1092
      %v1094 = vand.u32 %v999, 4294901760
      %v1095 = vsub.f32 %v999, %v1094
      %v1096 = vand.u32 %v1095, 4294901760
      %v1097 = vsub.f32 %v1095, %v1096
      %v1098 = vand.u32 %v1097, 4294901760
      %1099 = vmatpush1.msra.mxu0 %v1098
      %1100 = vmatprep.subr.mxu0 0.0
      %1101 = vmatpush1.msra.mxu0 0.0
      %1102 = vmatprep.subr.mxu0 0.0
      %1103 = vmatpush1.msra.mxu0 0.0
      %1104 = vmatprep.subr.mxu0 0.0
      %1105 = vmatpush1.msra.mxu0 0.0
      %1106 = vmatprep.subr.mxu0 0.0
      %1107 = vmatpush1.msra.mxu0 0.0
      %1108 = vmatprep.subr.mxu0 0.0
      %1109 = vmatpush1.msra.mxu0 0.0
      %1110 = vmatprep.subr.mxu0 0.0
      %1111 = vmatpush1.msra.mxu0 0.0
      %1112 = vmatprep.subr.mxu0 0.0
      %1113 = vmatpush1.msra.mxu0 0.0
      %1114 = vmatprep.subr.mxu0 0.0
      %1115 = vmatpush1.msra.mxu0 0.0
      %1116 = vmatprep.subr.mxu0 0.0
      %1117 = vmatpush1.msra.mxu0 0.0
      %1118 = vmatprep.subr.mxu0 0.0
      %1119 = vmatpush1.msra.mxu0 0.0
      %1120 = vmatprep.subr.mxu0 0.0
      %1121 = vmatpush1.msra.mxu0 0.0
      %1122 = vmatprep.subr.mxu0 0.0
      %1123 = vmatpush1.msra.mxu0 0.0
      %1124 = vmatprep.subr.mxu0 0.0
      %1125 = vmatpush1.msra.mxu0 0.0
      %1126 = vmatprep.subr.mxu0 0.0
      %1127 = vmatpush1.msra.mxu0 0.0
      %1128 = vmatprep.subr.mxu0 0.0
      %1129 = vmatpush1.msra.mxu0 0.0
      %1130 = vmatprep.subr.mxu0 0.0
      %1131 = vmatpush1.msra.mxu0 0.0
      %1132 = vmatprep.subr.mxu0 0.0
      %1133 = vmatpush1.msra.mxu0 0.0
      %1134 = vmatprep.subr.mxu0 0.0
      %1135 = vmatpush1.msra.mxu0 0.0
      %1136 = vmatprep.subr.mxu0 0.0
      %1137 = vmatpush1.msra.mxu0 0.0
      %1138 = vmatprep.subr.mxu0 0.0
      %1139 = vmatpush1.msra.mxu0 0.0
      %1140 = vmatprep.subr.mxu0 0.0
      %1141 = vmatpush1.msra.mxu0 0.0
      %1142 = vmatprep.subr.mxu0 0.0
      %1143 = vmatpush1.msra.mxu0 0.0
      %1144 = vmatprep.subr.mxu0 0.0
      %1145 = vmatpush1.msra.mxu0 0.0
      %1146 = vmatprep.subr.mxu0 0.0
      %1147 = vmatpush1.msra.mxu0 0.0
      %1148 = vmatprep.subr.mxu0 0.0
      %1149 = vmatpush1.msra.mxu0 0.0
      %1150 = vmatprep.subr.mxu0 0.0
      %1151 = vmatpush1.msra.mxu0 0.0
      %1152 = vmatprep.subr.mxu0 0.0
      %1153 = vmatpush1.msra.mxu0 0.0
      %1154 = vmatprep.subr.mxu0 0.0
      %1155 = vmatpush1.msra.mxu0 0.0
      %1156 = vmatprep.subr.mxu0 0.0
      %1157 = vmatpush1.msra.mxu0 0.0
      %1158 = vmatprep.subr.mxu0 0.0
      %1159 = vmatpush1.msra.mxu0 0.0
      %1160 = vmatprep.subr.mxu0 0.0
      %1161 = vmatpush1.msra.mxu0 0.0
      %1162 = vmatprep.mubr.f32.mxu0 0.0
      %v1163 = vand.u32 %v995, 4294901760
      %1164 = vmatmul.mubr.f32.gmra.mrb[0].mxu0 %v1163
      %v1165 = vpop.f32.mrb[0].mxu0
      %v1166 = vadd.f32 %v1084, %v1165
      %v1167 = vpop.f32.mrb[0].mxu0
      %v1168 = vadd.f32 %v1086, %v1167
      %1169 = vdwg.mxu0
      %v1170 = vand.u32 %v1002, 4294901760
      %v1171 = vsub.f32 %v1002, %v1170
      %1172 = vmatprep.subr.mxu0 %v1171
      %v1173 = vand.u32 %v999, 4294901760
      %v1174 = vsub.f32 %v999, %v1173
      %1175 = vmatpush1.msra.mxu0 %v1174
      %1176 = vmatprep.subr.mxu0 0.0
      %1177 = vmatpush1.msra.mxu0 0.0
      %1178 = vmatprep.subr.mxu0 0.0
      %1179 = vmatpush1.msra.mxu0 0.0
      %1180 = vmatprep.subr.mxu0 0.0
      %1181 = vmatpush1.msra.mxu0 0.0
      %1182 = vmatprep.subr.mxu0 0.0
      %1183 = vmatpush1.msra.mxu0 0.0
      %1184 = vmatprep.subr.mxu0 0.0
      %1185 = vmatpush1.msra.mxu0 0.0
      %1186 = vmatprep.subr.mxu0 0.0
      %1187 = vmatpush1.msra.mxu0 0.0
      %1188 = vmatprep.subr.mxu0 0.0
      %1189 = vmatpush1.msra.mxu0 0.0
      %1190 = vmatprep.subr.mxu0 0.0
      %1191 = vmatpush1.msra.mxu0 0.0
      %1192 = vmatprep.subr.mxu0 0.0
      %1193 = vmatpush1.msra.mxu0 0.0
      %1194 = vmatprep.subr.mxu0 0.0
      %1195 = vmatpush1.msra.mxu0 0.0
      %1196 = vmatprep.subr.mxu0 0.0
      %1197 = vmatpush1.msra.mxu0 0.0
      %1198 = vmatprep.subr.mxu0 0.0
      %1199 = vmatpush1.msra.mxu0 0.0
      %1200 = vmatprep.subr.mxu0 0.0
      %1201 = vmatpush1.msra.mxu0 0.0
      %1202 = vmatprep.subr.mxu0 0.0
      %1203 = vmatpush1.msra.mxu0 0.0
      %1204 = vmatprep.subr.mxu0 0.0
      %1205 = vmatpush1.msra.mxu0 0.0
      %1206 = vmatprep.subr.mxu0 0.0
      %1207 = vmatpush1.msra.mxu0 0.0
      %1208 = vmatprep.subr.mxu0 0.0
      %1209 = vmatpush1.msra.mxu0 0.0
      %1210 = vmatprep.subr.mxu0 0.0
      %1211 = vmatpush1.msra.mxu0 0.0
      %1212 = vmatprep.subr.mxu0 0.0
      %1213 = vmatpush1.msra.mxu0 0.0
      %1214 = vmatprep.subr.mxu0 0.0
      %1215 = vmatpush1.msra.mxu0 0.0
      %1216 = vmatprep.subr.mxu0 0.0
      %1217 = vmatpush1.msra.mxu0 0.0
      %1218 = vmatprep.subr.mxu0 0.0
      %1219 = vmatpush1.msra.mxu0 0.0
      %1220 = vmatprep.subr.mxu0 0.0
      %1221 = vmatpush1.msra.mxu0 0.0
      %1222 = vmatprep.subr.mxu0 0.0
      %1223 = vmatpush1.msra.mxu0 0.0
      %1224 = vmatprep.subr.mxu0 0.0
      %1225 = vmatpush1.msra.mxu0 0.0
      %1226 = vmatprep.subr.mxu0 0.0
      %1227 = vmatpush1.msra.mxu0 0.0
      %1228 = vmatprep.subr.mxu0 0.0
      %1229 = vmatpush1.msra.mxu0 0.0
      %1230 = vmatprep.subr.mxu0 0.0
      %1231 = vmatpush1.msra.mxu0 0.0
      %1232 = vmatprep.subr.mxu0 0.0
      %1233 = vmatpush1.msra.mxu0 0.0
      %1234 = vmatprep.subr.mxu0 0.0
      %1235 = vmatpush1.msra.mxu0 0.0
      %1236 = vmatprep.subr.mxu0 0.0
      %1237 = vmatpush1.msra.mxu0 0.0
      %1238 = vmatprep.mubr.f32.mxu0 0.0
      %v1239 = vand.u32 %v995, 4294901760
      %v1240 = vsub.f32 %v995, %v1239
      %1241 = vmatmul.mubr.f32.gmra.mrb[0].mxu0 %v1240
      %v1242 = vpop.f32.mrb[0].mxu0
      %v1243 = vadd.f32 %v1166, %v1242
      %v1244 = vpop.f32.mrb[0].mxu0
      %v1245 = vadd.f32 %v1168, %v1244
      %1246 = vdwg.mxu0
      %v1247 = vand.u32 %v1002, 4294901760
      %1248 = vmatprep.subr.mxu0 %v1247
      %v1249 = vand.u32 %v999, 4294901760
      %1250 = vmatpush1.msra.mxu0 %v1249
      %1251 = vmatprep.subr.mxu0 0.0
      %1252 = vmatpush1.msra.mxu0 0.0
      %1253 = vmatprep.subr.mxu0 0.0
      %1254 = vmatpush1.msra.mxu0 0.0
      %1255 = vmatprep.subr.mxu0 0.0
      %1256 = vmatpush1.msra.mxu0 0.0
      %1257 = vmatprep.subr.mxu0 0.0
      %1258 = vmatpush1.msra.mxu0 0.0
      %1259 = vmatprep.subr.mxu0 0.0
      %1260 = vmatpush1.msra.mxu0 0.0
      %1261 = vmatprep.subr.mxu0 0.0
      %1262 = vmatpush1.msra.mxu0 0.0
      %1263 = vmatprep.subr.mxu0 0.0
      %1264 = vmatpush1.msra.mxu0 0.0
      %1265 = vmatprep.subr.mxu0 0.0
      %1266 = vmatpush1.msra.mxu0 0.0
      %1267 = vmatprep.subr.mxu0 0.0
      %1268 = vmatpush1.msra.mxu0 0.0
      %1269 = vmatprep.subr.mxu0 0.0
      %1270 = vmatpush1.msra.mxu0 0.0
      %1271 = vmatprep.subr.mxu0 0.0
      %1272 = vmatpush1.msra.mxu0 0.0
      %1273 = vmatprep.subr.mxu0 0.0
      %1274 = vmatpush1.msra.mxu0 0.0
      %1275 = vmatprep.subr.mxu0 0.0
      %1276 = vmatpush1.msra.mxu0 0.0
      %1277 = vmatprep.subr.mxu0 0.0
      %1278 = vmatpush1.msra.mxu0 0.0
      %1279 = vmatprep.subr.mxu0 0.0
      %1280 = vmatpush1.msra.mxu0 0.0
      %1281 = vmatprep.subr.mxu0 0.0
      %1282 = vmatpush1.msra.mxu0 0.0
      %1283 = vmatprep.subr.mxu0 0.0
      %1284 = vmatpush1.msra.mxu0 0.0
      %1285 = vmatprep.subr.mxu0 0.0
      %1286 = vmatpush1.msra.mxu0 0.0
      %1287 = vmatprep.subr.mxu0 0.0
      %1288 = vmatpush1.msra.mxu0 0.0
      %1289 = vmatprep.subr.mxu0 0.0
      %1290 = vmatpush1.msra.mxu0 0.0
      %1291 = vmatprep.subr.mxu0 0.0
      %1292 = vmatpush1.msra.mxu0 0.0
      %1293 = vmatprep.subr.mxu0 0.0
      %1294 = vmatpush1.msra.mxu0 0.0
      %1295 = vmatprep.subr.mxu0 0.0
      %1296 = vmatpush1.msra.mxu0 0.0
      %1297 = vmatprep.subr.mxu0 0.0
      %1298 = vmatpush1.msra.mxu0 0.0
      %1299 = vmatprep.subr.mxu0 0.0
      %1300 = vmatpush1.msra.mxu0 0.0
      %1301 = vmatprep.subr.mxu0 0.0
      %1302 = vmatpush1.msra.mxu0 0.0
      %1303 = vmatprep.subr.mxu0 0.0
      %1304 = vmatpush1.msra.mxu0 0.0
      %1305 = vmatprep.subr.mxu0 0.0
      %1306 = vmatpush1.msra.mxu0 0.0
      %1307 = vmatprep.subr.mxu0 0.0
      %1308 = vmatpush1.msra.mxu0 0.0
      %1309 = vmatprep.subr.mxu0 0.0
      %1310 = vmatpush1.msra.mxu0 0.0
      %1311 = vmatprep.subr.mxu0 0.0
      %1312 = vmatpush1.msra.mxu0 0.0
      %1313 = vmatprep.mubr.f32.mxu0 0.0
      %v1314 = vand.u32 %v995, 4294901760
      %v1315 = vsub.f32 %v995, %v1314
      %v1316 = vand.u32 %v1315, 4294901760
      %1317 = vmatmul.mubr.f32.gmra.mrb[0].mxu0 %v1316
      %v1318 = vpop.f32.mrb[0].mxu0
      %v1319 = vadd.f32 %v1243, %v1318
      %v1320 = vpop.f32.mrb[0].mxu0
      %v1321 = vadd.f32 %v1245, %v1320
      %1322 = vdwg.mxu0
      %v1323 = vand.u32 %v1002, 4294901760
      %v1324 = vsub.f32 %v1002, %v1323
      %v1325 = vand.u32 %v1324, 4294901760
      %1326 = vmatprep.subr.mxu0 %v1325
      %v1327 = vand.u32 %v999, 4294901760
      %v1328 = vsub.f32 %v999, %v1327
      %v1329 = vand.u32 %v1328, 4294901760
      %1330 = vmatpush1.msra.mxu0 %v1329
      %1331 = vmatprep.subr.mxu0 0.0
      %1332 = vmatpush1.msra.mxu0 0.0
      %1333 = vmatprep.subr.mxu0 0.0
      %1334 = vmatpush1.msra.mxu0 0.0
      %1335 = vmatprep.subr.mxu0 0.0
      %1336 = vmatpush1.msra.mxu0 0.0
      %1337 = vmatprep.subr.mxu0 0.0
      %1338 = vmatpush1.msra.mxu0 0.0
      %1339 = vmatprep.subr.mxu0 0.0
      %1340 = vmatpush1.msra.mxu0 0.0
      %1341 = vmatprep.subr.mxu0 0.0
      %1342 = vmatpush1.msra.mxu0 0.0
      %1343 = vmatprep.subr.mxu0 0.0
      %1344 = vmatpush1.msra.mxu0 0.0
      %1345 = vmatprep.subr.mxu0 0.0
      %1346 = vmatpush1.msra.mxu0 0.0
      %1347 = vmatprep.subr.mxu0 0.0
      %1348 = vmatpush1.msra.mxu0 0.0
      %1349 = vmatprep.subr.mxu0 0.0
      %1350 = vmatpush1.msra.mxu0 0.0
      %1351 = vmatprep.subr.mxu0 0.0
      %1352 = vmatpush1.msra.mxu0 0.0
      %1353 = vmatprep.subr.mxu0 0.0
      %1354 = vmatpush1.msra.mxu0 0.0
      %1355 = vmatprep.subr.mxu0 0.0
      %1356 = vmatpush1.msra.mxu0 0.0
      %1357 = vmatprep.subr.mxu0 0.0
      %1358 = vmatpush1.msra.mxu0 0.0
      %1359 = vmatprep.subr.mxu0 0.0
      %1360 = vmatpush1.msra.mxu0 0.0
      %1361 = vmatprep.subr.mxu0 0.0
      %1362 = vmatpush1.msra.mxu0 0.0
      %1363 = vmatprep.subr.mxu0 0.0
      %1364 = vmatpush1.msra.mxu0 0.0
      %1365 = vmatprep.subr.mxu0 0.0
      %1366 = vmatpush1.msra.mxu0 0.0
      %1367 = vmatprep.subr.mxu0 0.0
      %1368 = vmatpush1.msra.mxu0 0.0
      %1369 = vmatprep.subr.mxu0 0.0
      %1370 = vmatpush1.msra.mxu0 0.0
      %1371 = vmatprep.subr.mxu0 0.0
      %1372 = vmatpush1.msra.mxu0 0.0
      %1373 = vmatprep.subr.mxu0 0.0
      %1374 = vmatpush1.msra.mxu0 0.0
      %1375 = vmatprep.subr.mxu0 0.0
      %1376 = vmatpush1.msra.mxu0 0.0
      %1377 = vmatprep.subr.mxu0 0.0
      %1378 = vmatpush1.msra.mxu0 0.0
      %1379 = vmatprep.subr.mxu0 0.0
      %1380 = vmatpush1.msra.mxu0 0.0
      %1381 = vmatprep.subr.mxu0 0.0
      %1382 = vmatpush1.msra.mxu0 0.0
      %1383 = vmatprep.subr.mxu0 0.0
      %1384 = vmatpush1.msra.mxu0 0.0
      %1385 = vmatprep.subr.mxu0 0.0
      %1386 = vmatpush1.msra.mxu0 0.0
      %1387 = vmatprep.subr.mxu0 0.0
      %1388 = vmatpush1.msra.mxu0 0.0
      %1389 = vmatprep.subr.mxu0 0.0
      %1390 = vmatpush1.msra.mxu0 0.0
      %1391 = vmatprep.subr.mxu0 0.0
      %1392 = vmatpush1.msra.mxu0 0.0
      %1393 = vmatprep.mubr.f32.mxu0 0.0
      %v1394 = vand.u32 %v995, 4294901760
      %1395 = vmatmul.mubr.f32.gmra.mrb[0].mxu0 %v1394
      %v1396 = vpop.f32.mrb[0].mxu0
      %v1397 = vadd.f32 %v1319, %v1396
      %v1398 = vpop.f32.mrb[0].mxu0
      %v1399 = vadd.f32 %v1321, %v1398
      %1400 = vdwg.mxu0
      %v1401 = vand.u32 %v1002, 4294901760
      %1402 = vmatprep.subr.mxu0 %v1401
      %v1403 = vand.u32 %v999, 4294901760
      %1404 = vmatpush1.msra.mxu0 %v1403
      %1405 = vmatprep.subr.mxu0 0.0
      %1406 = vmatpush1.msra.mxu0 0.0
      %1407 = vmatprep.subr.mxu0 0.0
      %1408 = vmatpush1.msra.mxu0 0.0
      %1409 = vmatprep.subr.mxu0 0.0
      %1410 = vmatpush1.msra.mxu0 0.0
      %1411 = vmatprep.subr.mxu0 0.0
      %1412 = vmatpush1.msra.mxu0 0.0
      %1413 = vmatprep.subr.mxu0 0.0
      %1414 = vmatpush1.msra.mxu0 0.0
      %1415 = vmatprep.subr.mxu0 0.0
      %1416 = vmatpush1.msra.mxu0 0.0
      %1417 = vmatprep.subr.mxu0 0.0
      %1418 = vmatpush1.msra.mxu0 0.0
      %1419 = vmatprep.subr.mxu0 0.0
      %1420 = vmatpush1.msra.mxu0 0.0
      %1421 = vmatprep.subr.mxu0 0.0
      %1422 = vmatpush1.msra.mxu0 0.0
      %1423 = vmatprep.subr.mxu0 0.0
      %1424 = vmatpush1.msra.mxu0 0.0
      %1425 = vmatprep.subr.mxu0 0.0
      %1426 = vmatpush1.msra.mxu0 0.0
      %1427 = vmatprep.subr.mxu0 0.0
      %1428 = vmatpush1.msra.mxu0 0.0
      %1429 = vmatprep.subr.mxu0 0.0
      %1430 = vmatpush1.msra.mxu0 0.0
      %1431 = vmatprep.subr.mxu0 0.0
      %1432 = vmatpush1.msra.mxu0 0.0
      %1433 = vmatprep.subr.mxu0 0.0
      %1434 = vmatpush1.msra.mxu0 0.0
      %1435 = vmatprep.subr.mxu0 0.0
      %1436 = vmatpush1.msra.mxu0 0.0
      %1437 = vmatprep.subr.mxu0 0.0
      %1438 = vmatpush1.msra.mxu0 0.0
      %1439 = vmatprep.subr.mxu0 0.0
      %1440 = vmatpush1.msra.mxu0 0.0
      %1441 = vmatprep.subr.mxu0 0.0
      %1442 = vmatpush1.msra.mxu0 0.0
      %1443 = vmatprep.subr.mxu0 0.0
      %1444 = vmatpush1.msra.mxu0 0.0
      %1445 = vmatprep.subr.mxu0 0.0
      %1446 = vmatpush1.msra.mxu0 0.0
      %1447 = vmatprep.subr.mxu0 0.0
      %1448 = vmatpush1.msra.mxu0 0.0
      %1449 = vmatprep.subr.mxu0 0.0
      %1450 = vmatpush1.msra.mxu0 0.0
      %1451 = vmatprep.subr.mxu0 0.0
      %1452 = vmatpush1.msra.mxu0 0.0
      %1453 = vmatprep.subr.mxu0 0.0
      %1454 = vmatpush1.msra.mxu0 0.0
      %1455 = vmatprep.subr.mxu0 0.0
      %1456 = vmatpush1.msra.mxu0 0.0
      %1457 = vmatprep.subr.mxu0 0.0
      %1458 = vmatpush1.msra.mxu0 0.0
      %1459 = vmatprep.subr.mxu0 0.0
      %1460 = vmatpush1.msra.mxu0 0.0
      %1461 = vmatprep.subr.mxu0 0.0
      %1462 = vmatpush1.msra.mxu0 0.0
      %1463 = vmatprep.subr.mxu0 0.0
      %1464 = vmatpush1.msra.mxu0 0.0
      %1465 = vmatprep.subr.mxu0 0.0
      %1466 = vmatpush1.msra.mxu0 0.0
      %1467 = vmatprep.mubr.f32.mxu0 0.0
      %v1468 = vand.u32 %v995, 4294901760
      %1469 = vmatmul.mubr.f32.gmra.mrb[0].mxu0 %v1468
      %v1470 = vpop.f32.mrb[0].mxu0
      %v1471 = vadd.f32 %v1397, %v1470
      %v1472 = vpop.f32.mrb[0].mxu0
      %v1473 = vadd.f32 %v1399, %v1472
      %1474 = vdwg.mxu0
      %v1475 = vand.u32 %v1008, 4294901760
      %1476 = vmatprep.subr.mxu0 %v1475
      %v1477 = vand.u32 %v1005, 4294901760
      %1478 = vmatpush1.msra.mxu0 %v1477
      %1479 = vmatprep.subr.mxu0 0.0
      %1480 = vmatpush1.msra.mxu0 0.0
      %1481 = vmatprep.subr.mxu0 0.0
      %1482 = vmatpush1.msra.mxu0 0.0
      %1483 = vmatprep.subr.mxu0 0.0
      %1484 = vmatpush1.msra.mxu0 0.0
      %1485 = vmatprep.subr.mxu0 0.0
      %1486 = vmatpush1.msra.mxu0 0.0
      %1487 = vmatprep.subr.mxu0 0.0
      %1488 = vmatpush1.msra.mxu0 0.0
      %1489 = vmatprep.subr.mxu0 0.0
      %1490 = vmatpush1.msra.mxu0 0.0
      %1491 = vmatprep.subr.mxu0 0.0
      %1492 = vmatpush1.msra.mxu0 0.0
      %1493 = vmatprep.subr.mxu0 0.0
      %1494 = vmatpush1.msra.mxu0 0.0
      %1495 = vmatprep.subr.mxu0 0.0
      %1496 = vmatpush1.msra.mxu0 0.0
      %1497 = vmatprep.subr.mxu0 0.0
      %1498 = vmatpush1.msra.mxu0 0.0
      %1499 = vmatprep.subr.mxu0 0.0
      %1500 = vmatpush1.msra.mxu0 0.0
      %1501 = vmatprep.subr.mxu0 0.0
      %1502 = vmatpush1.msra.mxu0 0.0
      %1503 = vmatprep.subr.mxu0 0.0
      %1504 = vmatpush1.msra.mxu0 0.0
      %1505 = vmatprep.subr.mxu0 0.0
      %1506 = vmatpush1.msra.mxu0 0.0
      %1507 = vmatprep.subr.mxu0 0.0
      %1508 = vmatpush1.msra.mxu0 0.0
      %1509 = vmatprep.subr.mxu0 0.0
      %1510 = vmatpush1.msra.mxu0 0.0
      %1511 = vmatprep.subr.mxu0 0.0
      %1512 = vmatpush1.msra.mxu0 0.0
      %1513 = vmatprep.subr.mxu0 0.0
      %1514 = vmatpush1.msra.mxu0 0.0
      %1515 = vmatprep.subr.mxu0 0.0
      %1516 = vmatpush1.msra.mxu0 0.0
      %1517 = vmatprep.subr.mxu0 0.0
      %1518 = vmatpush1.msra.mxu0 0.0
      %1519 = vmatprep.subr.mxu0 0.0
      %1520 = vmatpush1.msra.mxu0 0.0
      %1521 = vmatprep.subr.mxu0 0.0
      %1522 = vmatpush1.msra.mxu0 0.0
      %1523 = vmatprep.subr.mxu0 0.0
      %1524 = vmatpush1.msra.mxu0 0.0
      %1525 = vmatprep.subr.mxu0 0.0
      %1526 = vmatpush1.msra.mxu0 0.0
      %1527 = vmatprep.subr.mxu0 0.0
      %1528 = vmatpush1.msra.mxu0 0.0
      %1529 = vmatprep.subr.mxu0 0.0
      %1530 = vmatpush1.msra.mxu0 0.0
      %1531 = vmatprep.subr.mxu0 0.0
      %1532 = vmatpush1.msra.mxu0 0.0
      %1533 = vmatprep.subr.mxu0 0.0
      %1534 = vmatpush1.msra.mxu0 0.0
      %1535 = vmatprep.subr.mxu0 0.0
      %1536 = vmatpush1.msra.mxu0 0.0
      %1537 = vmatprep.subr.mxu0 0.0
      %1538 = vmatpush1.msra.mxu0 0.0
      %1539 = vmatprep.subr.mxu0 0.0
      %1540 = vmatpush1.msra.mxu0 0.0
      %1541 = vmatprep.mubr.f32.mxu0 0.0
      %v1542 = vand.u32 %v995, 4294901760
      %v1543 = vsub.f32 %v995, %v1542
      %v1544 = vand.u32 %v1543, 4294901760
      %v1545 = vsub.f32 %v1543, %v1544
      %v1546 = vand.u32 %v1545, 4294901760
      %1547 = vmatmul.mubr.f32.gmra.mrb[0].mxu0 %v1546
      %v1548 = vpop.f32.mrb[0].mxu0
      %v1549 = vadd.f32 %v991, %v1548
      %v1550 = vpop.f32.mrb[0].mxu0
      %v1551 = vadd.f32 %v991, %v1550
      %1552 = vdwg.mxu0
      %v1553 = vand.u32 %v1008, 4294901760
      %v1554 = vsub.f32 %v1008, %v1553
      %v1555 = vand.u32 %v1554, 4294901760
      %v1556 = vsub.f32 %v1554, %v1555
      %v1557 = vand.u32 %v1556, 4294901760
      %1558 = vmatprep.subr.mxu0 %v1557
      %v1559 = vand.u32 %v1005, 4294901760
      %v1560 = vsub.f32 %v1005, %v1559
      %v1561 = vand.u32 %v1560, 4294901760
      %v1562 = vsub.f32 %v1560, %v1561
      %v1563 = vand.u32 %v1562, 4294901760
      %1564 = vmatpush1.msra.mxu0 %v1563
      %1565 = vmatprep.subr.mxu0 0.0
      %1566 = vmatpush1.msra.mxu0 0.0
      %1567 = vmatprep.subr.mxu0 0.0
      %1568 = vmatpush1.msra.mxu0 0.0
      %1569 = vmatprep.subr.mxu0 0.0
      %1570 = vmatpush1.msra.mxu0 0.0
      %1571 = vmatprep.subr.mxu0 0.0
      %1572 = vmatpush1.msra.mxu0 0.0
      %1573 = vmatprep.subr.mxu0 0.0
      %1574 = vmatpush1.msra.mxu0 0.0
      %1575 = vmatprep.subr.mxu0 0.0
      %1576 = vmatpush1.msra.mxu0 0.0
      %1577 = vmatprep.subr.mxu0 0.0
      %1578 = vmatpush1.msra.mxu0 0.0
      %1579 = vmatprep.subr.mxu0 0.0
      %1580 = vmatpush1.msra.mxu0 0.0
      %1581 = vmatprep.subr.mxu0 0.0
      %1582 = vmatpush1.msra.mxu0 0.0
      %1583 = vmatprep.subr.mxu0 0.0
      %1584 = vmatpush1.msra.mxu0 0.0
      %1585 = vmatprep.subr.mxu0 0.0
      %1586 = vmatpush1.msra.mxu0 0.0
      %1587 = vmatprep.subr.mxu0 0.0
      %1588 = vmatpush1.msra.mxu0 0.0
      %1589 = vmatprep.subr.mxu0 0.0
      %1590 = vmatpush1.msra.mxu0 0.0
      %1591 = vmatprep.subr.mxu0 0.0
      %1592 = vmatpush1.msra.mxu0 0.0
      %1593 = vmatprep.subr.mxu0 0.0
      %1594 = vmatpush1.msra.mxu0 0.0
      %1595 = vmatprep.subr.mxu0 0.0
      %1596 = vmatpush1.msra.mxu0 0.0
      %1597 = vmatprep.subr.mxu0 0.0
      %1598 = vmatpush1.msra.mxu0 0.0
      %1599 = vmatprep.subr.mxu0 0.0
      %1600 = vmatpush1.msra.mxu0 0.0
      %1601 = vmatprep.subr.mxu0 0.0
      %1602 = vmatpush1.msra.mxu0 0.0
      %1603 = vmatprep.subr.mxu0 0.0
      %1604 = vmatpush1.msra.mxu0 0.0
      %1605 = vmatprep.subr.mxu0 0.0
      %1606 = vmatpush1.msra.mxu0 0.0
      %1607 = vmatprep.subr.mxu0 0.0
      %1608 = vmatpush1.msra.mxu0 0.0
      %1609 = vmatprep.subr.mxu0 0.0
      %1610 = vmatpush1.msra.mxu0 0.0
      %1611 = vmatprep.subr.mxu0 0.0
      %1612 = vmatpush1.msra.mxu0 0.0
      %1613 = vmatprep.subr.mxu0 0.0
      %1614 = vmatpush1.msra.mxu0 0.0
      %1615 = vmatprep.subr.mxu0 0.0
      %1616 = vmatpush1.msra.mxu0 0.0
      %1617 = vmatprep.subr.mxu0 0.0
      %1618 = vmatpush1.msra.mxu0 0.0
      %1619 = vmatprep.subr.mxu0 0.0
      %1620 = vmatpush1.msra.mxu0 0.0
      %1621 = vmatprep.subr.mxu0 0.0
      %1622 = vmatpush1.msra.mxu0 0.0
      %1623 = vmatprep.subr.mxu0 0.0
      %1624 = vmatpush1.msra.mxu0 0.0
      %1625 = vmatprep.subr.mxu0 0.0
      %1626 = vmatpush1.msra.mxu0 0.0
      %1627 = vmatprep.mubr.f32.mxu0 0.0
      %v1628 = vand.u32 %v995, 4294901760
      %1629 = vmatmul.mubr.f32.gmra.mrb[0].mxu0 %v1628
      %v1630 = vpop.f32.mrb[0].mxu0
      %v1631 = vadd.f32 %v1549, %v1630
      %v1632 = vpop.f32.mrb[0].mxu0
      %v1633 = vadd.f32 %v1551, %v1632
      %1634 = vdwg.mxu0
      %v1635 = vand.u32 %v1008, 4294901760
      %v1636 = vsub.f32 %v1008, %v1635
      %1637 = vmatprep.subr.mxu0 %v1636
      %v1638 = vand.u32 %v1005, 4294901760
      %v1639 = vsub.f32 %v1005, %v1638
      %1640 = vmatpush1.msra.mxu0 %v1639
      %1641 = vmatprep.subr.mxu0 0.0
      %1642 = vmatpush1.msra.mxu0 0.0
      %1643 = vmatprep.subr.mxu0 0.0
      %1644 = vmatpush1.msra.mxu0 0.0
      %1645 = vmatprep.subr.mxu0 0.0
      %1646 = vmatpush1.msra.mxu0 0.0
      %1647 = vmatprep.subr.mxu0 0.0
      %1648 = vmatpush1.msra.mxu0 0.0
      %1649 = vmatprep.subr.mxu0 0.0
      %1650 = vmatpush1.msra.mxu0 0.0
      %1651 = vmatprep.subr.mxu0 0.0
      %1652 = vmatpush1.msra.mxu0 0.0
      %1653 = vmatprep.subr.mxu0 0.0
      %1654 = vmatpush1.msra.mxu0 0.0
      %1655 = vmatprep.subr.mxu0 0.0
      %1656 = vmatpush1.msra.mxu0 0.0
      %1657 = vmatprep.subr.mxu0 0.0
      %1658 = vmatpush1.msra.mxu0 0.0
      %1659 = vmatprep.subr.mxu0 0.0
      %1660 = vmatpush1.msra.mxu0 0.0
      %1661 = vmatprep.subr.mxu0 0.0
      %1662 = vmatpush1.msra.mxu0 0.0
      %1663 = vmatprep.subr.mxu0 0.0
      %1664 = vmatpush1.msra.mxu0 0.0
      %1665 = vmatprep.subr.mxu0 0.0
      %1666 = vmatpush1.msra.mxu0 0.0
      %1667 = vmatprep.subr.mxu0 0.0
      %1668 = vmatpush1.msra.mxu0 0.0
      %1669 = vmatprep.subr.mxu0 0.0
      %1670 = vmatpush1.msra.mxu0 0.0
      %1671 = vmatprep.subr.mxu0 0.0
      %1672 = vmatpush1.msra.mxu0 0.0
      %1673 = vmatprep.subr.mxu0 0.0
      %1674 = vmatpush1.msra.mxu0 0.0
      %1675 = vmatprep.subr.mxu0 0.0
      %1676 = vmatpush1.msra.mxu0 0.0
      %1677 = vmatprep.subr.mxu0 0.0
      %1678 = vmatpush1.msra.mxu0 0.0
      %1679 = vmatprep.subr.mxu0 0.0
      %1680 = vmatpush1.msra.mxu0 0.0
      %1681 = vmatprep.subr.mxu0 0.0
      %1682 = vmatpush1.msra.mxu0 0.0
      %1683 = vmatprep.subr.mxu0 0.0
      %1684 = vmatpush1.msra.mxu0 0.0
      %1685 = vmatprep.subr.mxu0 0.0
      %1686 = vmatpush1.msra.mxu0 0.0
      %1687 = vmatprep.subr.mxu0 0.0
      %1688 = vmatpush1.msra.mxu0 0.0
      %1689 = vmatprep.subr.mxu0 0.0
      %1690 = vmatpush1.msra.mxu0 0.0
      %1691 = vmatprep.subr.mxu0 0.0
      %1692 = vmatpush1.msra.mxu0 0.0
      %1693 = vmatprep.subr.mxu0 0.0
      %1694 = vmatpush1.msra.mxu0 0.0
      %1695 = vmatprep.subr.mxu0 0.0
      %1696 = vmatpush1.msra.mxu0 0.0
      %1697 = vmatprep.subr.mxu0 0.0
      %1698 = vmatpush1.msra.mxu0 0.0
      %1699 = vmatprep.subr.mxu0 0.0
      %1700 = vmatpush1.msra.mxu0 0.0
      %1701 = vmatprep.subr.mxu0 0.0
      %1702 = vmatpush1.msra.mxu0 0.0
      %1703 = vmatprep.mubr.f32.mxu0 0.0
      %v1704 = vand.u32 %v995, 4294901760
      %v1705 = vsub.f32 %v995, %v1704
      %1706 = vmatmul.mubr.f32.gmra.mrb[0].mxu0 %v1705
      %v1707 = vpop.f32.mrb[0].mxu0
      %v1708 = vadd.f32 %v1631, %v1707
      %v1709 = vpop.f32.mrb[0].mxu0
      %v1710 = vadd.f32 %v1633, %v1709
      %1711 = vdwg.mxu0
      %v1712 = vand.u32 %v1008, 4294901760
      %1713 = vmatprep.subr.mxu0 %v1712
      %v1714 = vand.u32 %v1005, 4294901760
      %1715 = vmatpush1.msra.mxu0 %v1714
      %1716 = vmatprep.subr.mxu0 0.0
      %1717 = vmatpush1.msra.mxu0 0.0
      %1718 = vmatprep.subr.mxu0 0.0
      %1719 = vmatpush1.msra.mxu0 0.0
      %1720 = vmatprep.subr.mxu0 0.0
      %1721 = vmatpush1.msra.mxu0 0.0
      %1722 = vmatprep.subr.mxu0 0.0
      %1723 = vmatpush1.msra.mxu0 0.0
      %1724 = vmatprep.subr.mxu0 0.0
      %1725 = vmatpush1.msra.mxu0 0.0
      %1726 = vmatprep.subr.mxu0 0.0
      %1727 = vmatpush1.msra.mxu0 0.0
      %1728 = vmatprep.subr.mxu0 0.0
      %1729 = vmatpush1.msra.mxu0 0.0
      %1730 = vmatprep.subr.mxu0 0.0
      %1731 = vmatpush1.msra.mxu0 0.0
      %1732 = vmatprep.subr.mxu0 0.0
      %1733 = vmatpush1.msra.mxu0 0.0
      %1734 = vmatprep.subr.mxu0 0.0
      %1735 = vmatpush1.msra.mxu0 0.0
      %1736 = vmatprep.subr.mxu0 0.0
      %1737 = vmatpush1.msra.mxu0 0.0
      %1738 = vmatprep.subr.mxu0 0.0
      %1739 = vmatpush1.msra.mxu0 0.0
      %1740 = vmatprep.subr.mxu0 0.0
      %1741 = vmatpush1.msra.mxu0 0.0
      %1742 = vmatprep.subr.mxu0 0.0
      %1743 = vmatpush1.msra.mxu0 0.0
      %1744 = vmatprep.subr.mxu0 0.0
      %1745 = vmatpush1.msra.mxu0 0.0
      %1746 = vmatprep.subr.mxu0 0.0
      %1747 = vmatpush1.msra.mxu0 0.0
      %1748 = vmatprep.subr.mxu0 0.0
      %1749 = vmatpush1.msra.mxu0 0.0
      %1750 = vmatprep.subr.mxu0 0.0
      %1751 = vmatpush1.msra.mxu0 0.0
      %1752 = vmatprep.subr.mxu0 0.0
      %1753 = vmatpush1.msra.mxu0 0.0
      %1754 = vmatprep.subr.mxu0 0.0
      %1755 = vmatpush1.msra.mxu0 0.0
      %1756 = vmatprep.subr.mxu0 0.0
      %1757 = vmatpush1.msra.mxu0 0.0
      %1758 = vmatprep.subr.mxu0 0.0
      %1759 = vmatpush1.msra.mxu0 0.0
      %1760 = vmatprep.subr.mxu0 0.0
      %1761 = vmatpush1.msra.mxu0 0.0
      %1762 = vmatprep.subr.mxu0 0.0
      %1763 = vmatpush1.msra.mxu0 0.0
      %1764 = vmatprep.subr.mxu0 0.0
      %1765 = vmatpush1.msra.mxu0 0.0
      %1766 = vmatprep.subr.mxu0 0.0
      %1767 = vmatpush1.msra.mxu0 0.0
      %1768 = vmatprep.subr.mxu0 0.0
      %1769 = vmatpush1.msra.mxu0 0.0
      %1770 = vmatprep.subr.mxu0 0.0
      %1771 = vmatpush1.msra.mxu0 0.0
      %1772 = vmatprep.subr.mxu0 0.0
      %1773 = vmatpush1.msra.mxu0 0.0
      %1774 = vmatprep.subr.mxu0 0.0
      %1775 = vmatpush1.msra.mxu0 0.0
      %1776 = vmatprep.subr.mxu0 0.0
      %1777 = vmatpush1.msra.mxu0 0.0
      %1778 = vmatprep.mubr.f32.mxu0 0.0
      %v1779 = vand.u32 %v995, 4294901760
      %v1780 = vsub.f32 %v995, %v1779
      %v1781 = vand.u32 %v1780, 4294901760
      %1782 = vmatmul.mubr.f32.gmra.mrb[0].mxu0 %v1781
      %v1783 = vpop.f32.mrb[0].mxu0
      %v1784 = vadd.f32 %v1708, %v1783
      %v1785 = vpop.f32.mrb[0].mxu0
      %v1786 = vadd.f32 %v1710, %v1785
      %1787 = vdwg.mxu0
      %v1788 = vand.u32 %v1008, 4294901760
      %v1789 = vsub.f32 %v1008, %v1788
      %v1790 = vand.u32 %v1789, 4294901760
      %1791 = vmatprep.subr.mxu0 %v1790
      %v1792 = vand.u32 %v1005, 4294901760
      %v1793 = vsub.f32 %v1005, %v1792
      %v1794 = vand.u32 %v1793, 4294901760
      %1795 = vmatpush1.msra.mxu0 %v1794
      %1796 = vmatprep.subr.mxu0 0.0
      %1797 = vmatpush1.msra.mxu0 0.0
      %1798 = vmatprep.subr.mxu0 0.0
      %1799 = vmatpush1.msra.mxu0 0.0
      %1800 = vmatprep.subr.mxu0 0.0
      %1801 = vmatpush1.msra.mxu0 0.0
      %1802 = vmatprep.subr.mxu0 0.0
      %1803 = vmatpush1.msra.mxu0 0.0
      %1804 = vmatprep.subr.mxu0 0.0
      %1805 = vmatpush1.msra.mxu0 0.0
      %1806 = vmatprep.subr.mxu0 0.0
      %1807 = vmatpush1.msra.mxu0 0.0
      %1808 = vmatprep.subr.mxu0 0.0
      %1809 = vmatpush1.msra.mxu0 0.0
      %1810 = vmatprep.subr.mxu0 0.0
      %1811 = vmatpush1.msra.mxu0 0.0
      %1812 = vmatprep.subr.mxu0 0.0
      %1813 = vmatpush1.msra.mxu0 0.0
      %1814 = vmatprep.subr.mxu0 0.0
      %1815 = vmatpush1.msra.mxu0 0.0
      %1816 = vmatprep.subr.mxu0 0.0
      %1817 = vmatpush1.msra.mxu0 0.0
      %1818 = vmatprep.subr.mxu0 0.0
      %1819 = vmatpush1.msra.mxu0 0.0
      %1820 = vmatprep.subr.mxu0 0.0
      %1821 = vmatpush1.msra.mxu0 0.0
      %1822 = vmatprep.subr.mxu0 0.0
      %1823 = vmatpush1.msra.mxu0 0.0
      %1824 = vmatprep.subr.mxu0 0.0
      %1825 = vmatpush1.msra.mxu0 0.0
      %1826 = vmatprep.subr.mxu0 0.0
      %1827 = vmatpush1.msra.mxu0 0.0
      %1828 = vmatprep.subr.mxu0 0.0
      %1829 = vmatpush1.msra.mxu0 0.0
      %1830 = vmatprep.subr.mxu0 0.0
      %1831 = vmatpush1.msra.mxu0 0.0
      %1832 = vmatprep.subr.mxu0 0.0
      %1833 = vmatpush1.msra.mxu0 0.0
      %1834 = vmatprep.subr.mxu0 0.0
      %1835 = vmatpush1.msra.mxu0 0.0
      %1836 = vmatprep.subr.mxu0 0.0
      %1837 = vmatpush1.msra.mxu0 0.0
      %1838 = vmatprep.subr.mxu0 0.0
      %1839 = vmatpush1.msra.mxu0 0.0
      %1840 = vmatprep.subr.mxu0 0.0
      %1841 = vmatpush1.msra.mxu0 0.0
      %1842 = vmatprep.subr.mxu0 0.0
      %1843 = vmatpush1.msra.mxu0 0.0
      %1844 = vmatprep.subr.mxu0 0.0
      %1845 = vmatpush1.msra.mxu0 0.0
      %1846 = vmatprep.subr.mxu0 0.0
      %1847 = vmatpush1.msra.mxu0 0.0
      %1848 = vmatprep.subr.mxu0 0.0
      %1849 = vmatpush1.msra.mxu0 0.0
      %1850 = vmatprep.subr.mxu0 0.0
      %1851 = vmatpush1.msra.mxu0 0.0
      %1852 = vmatprep.subr.mxu0 0.0
      %1853 = vmatpush1.msra.mxu0 0.0
      %1854 = vmatprep.subr.mxu0 0.0
      %1855 = vmatpush1.msra.mxu0 0.0
      %1856 = vmatprep.subr.mxu0 0.0
      %1857 = vmatpush1.msra.mxu0 0.0
      %1858 = vmatprep.mubr.f32.mxu0 0.0
      %v1859 = vand.u32 %v995, 4294901760
      %1860 = vmatmul.mubr.f32.gmra.mrb[0].mxu0 %v1859
      %v1861 = vpop.f32.mrb[0].mxu0
      %v1862 = vadd.f32 %v1784, %v1861
      %v1863 = vpop.f32.mrb[0].mxu0
      %v1864 = vadd.f32 %v1786, %v1863
      %1865 = vdwg.mxu0
      %v1866 = vand.u32 %v1008, 4294901760
      %1867 = vmatprep.subr.mxu0 %v1866
      %v1868 = vand.u32 %v1005, 4294901760
      %1869 = vmatpush1.msra.mxu0 %v1868
      %1870 = vmatprep.subr.mxu0 0.0
      %1871 = vmatpush1.msra.mxu0 0.0
      %1872 = vmatprep.subr.mxu0 0.0
      %1873 = vmatpush1.msra.mxu0 0.0
      %1874 = vmatprep.subr.mxu0 0.0
      %1875 = vmatpush1.msra.mxu0 0.0
      %1876 = vmatprep.subr.mxu0 0.0
      %1877 = vmatpush1.msra.mxu0 0.0
      %1878 = vmatprep.subr.mxu0 0.0
      %1879 = vmatpush1.msra.mxu0 0.0
      %1880 = vmatprep.subr.mxu0 0.0
      %1881 = vmatpush1.msra.mxu0 0.0
      %1882 = vmatprep.subr.mxu0 0.0
      %1883 = vmatpush1.msra.mxu0 0.0
      %1884 = vmatprep.subr.mxu0 0.0
      %1885 = vmatpush1.msra.mxu0 0.0
      %1886 = vmatprep.subr.mxu0 0.0
      %1887 = vmatpush1.msra.mxu0 0.0
      %1888 = vmatprep.subr.mxu0 0.0
      %1889 = vmatpush1.msra.mxu0 0.0
      %1890 = vmatprep.subr.mxu0 0.0
      %1891 = vmatpush1.msra.mxu0 0.0
      %1892 = vmatprep.subr.mxu0 0.0
      %1893 = vmatpush1.msra.mxu0 0.0
      %1894 = vmatprep.subr.mxu0 0.0
      %1895 = vmatpush1.msra.mxu0 0.0
      %1896 = vmatprep.subr.mxu0 0.0
      %1897 = vmatpush1.msra.mxu0 0.0
      %1898 = vmatprep.subr.mxu0 0.0
      %1899 = vmatpush1.msra.mxu0 0.0
      %1900 = vmatprep.subr.mxu0 0.0
      %1901 = vmatpush1.msra.mxu0 0.0
      %1902 = vmatprep.subr.mxu0 0.0
      %1903 = vmatpush1.msra.mxu0 0.0
      %1904 = vmatprep.subr.mxu0 0.0
      %1905 = vmatpush1.msra.mxu0 0.0
      %1906 = vmatprep.subr.mxu0 0.0
      %1907 = vmatpush1.msra.mxu0 0.0
      %1908 = vmatprep.subr.mxu0 0.0
      %1909 = vmatpush1.msra.mxu0 0.0
      %1910 = vmatprep.subr.mxu0 0.0
      %1911 = vmatpush1.msra.mxu0 0.0
      %1912 = vmatprep.subr.mxu0 0.0
      %1913 = vmatpush1.msra.mxu0 0.0
      %1914 = vmatprep.subr.mxu0 0.0
      %1915 = vmatpush1.msra.mxu0 0.0
      %1916 = vmatprep.subr.mxu0 0.0
      %1917 = vmatpush1.msra.mxu0 0.0
      %1918 = vmatprep.subr.mxu0 0.0
      %1919 = vmatpush1.msra.mxu0 0.0
      %1920 = vmatprep.subr.mxu0 0.0
      %1921 = vmatpush1.msra.mxu0 0.0
      %1922 = vmatprep.subr.mxu0 0.0
      %1923 = vmatpush1.msra.mxu0 0.0
      %1924 = vmatprep.subr.mxu0 0.0
      %1925 = vmatpush1.msra.mxu0 0.0
      %1926 = vmatprep.subr.mxu0 0.0
      %1927 = vmatpush1.msra.mxu0 0.0
      %1928 = vmatprep.subr.mxu0 0.0
      %1929 = vmatpush1.msra.mxu0 0.0
      %1930 = vmatprep.subr.mxu0 0.0
      %1931 = vmatpush1.msra.mxu0 0.0
      %1932 = vmatprep.mubr.f32.mxu0 0.0
      %v1933 = vand.u32 %v995, 4294901760
      %1934 = vmatmul.mubr.f32.gmra.mrb[0].mxu0 %v1933
      %v1935 = vpop.f32.mrb[0].mxu0
      %v1936 = vadd.f32 %v1862, %v1935
      %v1937 = vpop.f32.mrb[0].mxu0
      %v1938 = vadd.f32 %v1864, %v1937
      %1939 = vdwg.mxu0
      %v1940 = vxor.u32 %v1471, 2147483648
      %v1941 = vxor.u32 %v1473, 2147483648
      %v1942 = vxor.u32 %v1936, 2147483648
      %v1943 = vxor.u32 %v1938, 2147483648
      %v1944 = vmul.f32 %v1940, 1.442695
      %v1945 = vpow.pop %v1944
      %v1946 = vmul.f32 %v1941, 1.442695
      %v1947 = vpow.pop %v1946
      %v1948 = vmul.f32 %v1942, 1.442695
      %v1949 = vpow.pop %v1948
      %v1950 = vmul.f32 %v1943, 1.442695
      %v1951 = vpow.pop %v1950
      %v1952 = vadd.f32 %v1945, 1.0
      %v1953 = vadd.f32 %v1947, 1.0
      %v1954 = vadd.f32 %v1949, 1.0
      %v1955 = vadd.f32 %v1951, 1.0
      %v1956 = vrcp.pop %v1952
      %v1957 = vmul.f32 1.0, %v1956
      %v1958 = vrcp.pop %v1953
      %v1959 = vmul.f32 1.0, %v1958
      %v1960 = vrcp.pop %v1954
      %v1961 = vmul.f32 1.0, %v1960
      %v1962 = vrcp.pop %v1955
      %v1963 = vmul.f32 1.0, %v1962
      %v1968 = vcombine.low %v1957, %v1959
      %v1969 = vcombine.low %v1961, %v1963
      %1972 = vst [vmem:[#allocation2] sm:$0xff] %v1968
      %1973 = vst [vmem:[#allocation2 + $0x8] sm:$0xff] %v1969
      %v1974 = vmul.f32 %v1957, %v1957
      %v1975 = vmul.f32 %v1959, %v1959
      %v1976 = vmul.f32 %v1961, %v1961
      %v1977 = vmul.f32 %v1963, %v1963
      %v1978 = vsel %vm997, %v1974, 0.0
      %v1979 = vrot.slane %v1978, 4
      %v1980 = vadd.f32 %v1978, %v1979
      %v1981 = vrot.slane %v1980, 2
      %v1982 = vadd.f32 %v1980, %v1981
      %v1983 = vrot.slane %v1982, 1
      %v1984 = vadd.f32 %v1982, %v1983
      %v1985 = vsel %vm997, %v1975, 0.0
      %v1986 = vrot.slane %v1985, 4
      %v1987 = vadd.f32 %v1985, %v1986
      %v1988 = vrot.slane %v1987, 2
      %v1989 = vadd.f32 %v1987, %v1988
      %v1990 = vrot.slane %v1989, 1
      %v1991 = vadd.f32 %v1989, %v1990
      %v1992 = vsel %vm997, %v1976, 0.0
      %v1993 = vrot.slane %v1992, 4
      %v1994 = vadd.f32 %v1992, %v1993
      %v1995 = vrot.slane %v1994, 2
      %v1996 = vadd.f32 %v1994, %v1995
      %v1997 = vrot.slane %v1996, 1
      %v1998 = vadd.f32 %v1996, %v1997
      %v1999 = vsel %vm997, %v1977, 0.0
      %v2000 = vrot.slane %v1999, 4
      %v2001 = vadd.f32 %v1999, %v2000
      %v2002 = vrot.slane %v2001, 2
      %v2003 = vadd.f32 %v2001, %v2002
      %v2004 = vrot.slane %v2003, 1
      %v2005 = vadd.f32 %v2003, %v2004
      %v2010 = vcombine.low %v1984, %v1991
      %v2011 = vcombine.low %v1998, %v2005
      %v2013 = vunpack.c.l.s4 1966171168
      %v2014 = vunpack.c.0.s8 %v2013
      %v2015 = vlaneseq
      %v2016 = vshrl.u32 %v2015, 7
      %v2017 = vsub.s32 %v2014, %v2016
      %v2018 = vrot.slane %v2010, %v2017
      %v2020 = vunpack.c.l.s4 1966171168
      %v2021 = vunpack.c.0.s8 %v2020
      %v2022 = vlaneseq
      %v2023 = vshrl.u32 %v2022, 7
      %v2024 = vsub.s32 %v2021, %v2023
      %v2025 = vrot.slane %v2011, %v2024
      %v2026 = vcombine.low %v2018, %v2025
      %v2028 = vunpack.c.l.s4 1966171168
      %v2029 = vunpack.c.0.s8 %v2028
      %v2030 = vlaneseq
      %v2031 = vshrl.u32 %v2030, 7
      %v2032 = vsub.s32 %v2029, %v2031
      %v2033 = vrot.slane %v2026, %v2032
      %v2035 = vlaneseq
      %vm2036 = vcmp.ge.s32.totalorder %v2035, 0
      %vm2037 = vcmp.lt.s32.totalorder %v2035, 512
      %vm2038 = vmand %vm2036, %vm2037
      %2039 = vst.msk [vmem:[#allocation3] sm:$0xf] %vm2038, %v2033
      %vm2040 = vcmask 33792
      %2041 = vst.msk [vmem:[#allocation4] sm:$0x3] %vm2040, 0.0
    $region37: #{protopnet_forward.1} parent=1 // pred_fallthru
      _
    %v2042 = vld [vmem:[%s5] sm:$0xff]
    %v2043 = vld [vmem:[%s5 + $0x8] sm:$0x3]
    %v2044 = vld [vmem:[#allocation2] sm:$0xff]
    %v2045 = vld [vmem:[#allocation2 + $0x8] sm:$0xff]
    %v2048 = vcombine.high %v2044, %v2044
    %v2049 = vcombine.high %v2045, %v2045
    %vm2050 = vcmask 31744
    %v2052 = vsel %vm2050, %v2042, 0
    %v2055 = vsel %vm2050, %v2043, 0
    %vm2057 = vcmask 1043456
    %v2058 = vsel %vm2057, %v2044, 0
    %v2060 = vsel %vm2057, %v2048, 0
    %v2062 = vsel %vm2057, %v2045, 0
    %v2064 = vsel %vm2057, %v2049, 0
    %v2066 = vand.u32 %v2060, 4294901760
    %2067 = vmatprep.subr.mxu0 %v2066
    %v2068 = vand.u32 %v2058, 4294901760
    %2069 = vmatpush1.msra.mxu0 %v2068
    %2070 = vmatprep.subr.mxu0 0.0
    %2071 = vmatpush1.msra.mxu0 0.0
    %2072 = vmatprep.subr.mxu0 0.0
    %2073 = vmatpush1.msra.mxu0 0.0
    %2074 = vmatprep.subr.mxu0 0.0
    %2075 = vmatpush1.msra.mxu0 0.0
    %2076 = vmatprep.subr.mxu0 0.0
    %2077 = vmatpush1.msra.mxu0 0.0
    %2078 = vmatprep.subr.mxu0 0.0
    %2079 = vmatpush1.msra.mxu0 0.0
    %2080 = vmatprep.subr.mxu0 0.0
    %2081 = vmatpush1.msra.mxu0 0.0
    %2082 = vmatprep.subr.mxu0 0.0
    %2083 = vmatpush1.msra.mxu0 0.0
    %2084 = vmatprep.subr.mxu0 0.0
    %2085 = vmatpush1.msra.mxu0 0.0
    %2086 = vmatprep.subr.mxu0 0.0
    %2087 = vmatpush1.msra.mxu0 0.0
    %2088 = vmatprep.subr.mxu0 0.0
    %2089 = vmatpush1.msra.mxu0 0.0
    %2090 = vmatprep.subr.mxu0 0.0
    %2091 = vmatpush1.msra.mxu0 0.0
    %2092 = vmatprep.subr.mxu0 0.0
    %2093 = vmatpush1.msra.mxu0 0.0
    %2094 = vmatprep.subr.mxu0 0.0
    %2095 = vmatpush1.msra.mxu0 0.0
    %2096 = vmatprep.subr.mxu0 0.0
    %2097 = vmatpush1.msra.mxu0 0.0
    %2098 = vmatprep.subr.mxu0 0.0
    %2099 = vmatpush1.msra.mxu0 0.0
    %2100 = vmatprep.subr.mxu0 0.0
    %2101 = vmatpush1.msra.mxu0 0.0
    %2102 = vmatprep.subr.mxu0 0.0
    %2103 = vmatpush1.msra.mxu0 0.0
    %2104 = vmatprep.subr.mxu0 0.0
    %2105 = vmatpush1.msra.mxu0 0.0
    %2106 = vmatprep.subr.mxu0 0.0
    %2107 = vmatpush1.msra.mxu0 0.0
    %2108 = vmatprep.subr.mxu0 0.0
    %2109 = vmatpush1.msra.mxu0 0.0
    %2110 = vmatprep.subr.mxu0 0.0
    %2111 = vmatpush1.msra.mxu0 0.0
    %2112 = vmatprep.subr.mxu0 0.0
    %2113 = vmatpush1.msra.mxu0 0.0
    %2114 = vmatprep.subr.mxu0 0.0
    %2115 = vmatpush1.msra.mxu0 0.0
    %2116 = vmatprep.subr.mxu0 0.0
    %2117 = vmatpush1.msra.mxu0 0.0
    %2118 = vmatprep.subr.mxu0 0.0
    %2119 = vmatpush1.msra.mxu0 0.0
    %2120 = vmatprep.subr.mxu0 0.0
    %2121 = vmatpush1.msra.mxu0 0.0
    %2122 = vmatprep.subr.mxu0 0.0
    %2123 = vmatpush1.msra.mxu0 0.0
    %2124 = vmatprep.subr.mxu0 0.0
    %2125 = vmatpush1.msra.mxu0 0.0
    %2126 = vmatprep.subr.mxu0 0.0
    %2127 = vmatpush1.msra.mxu0 0.0
    %2128 = vmatprep.subr.mxu0 0.0
    %2129 = vmatpush1.msra.mxu0 0.0
    %2130 = vmatprep.subr.mxu0 0.0
    %2131 = vmatpush1.msra.mxu0 0.0
    %2132 = vmatprep.mubr.f32.mxu0 0.0
    %v2133 = vand.u32 %v2052, 4294901760
    %v2134 = vsub.f32 %v2052, %v2133
    %v2135 = vand.u32 %v2134, 4294901760
    %v2136 = vsub.f32 %v2134, %v2135
    %v2137 = vand.u32 %v2136, 4294901760
    %2138 = vmatmul.mubr.f32.gmra.mrb[0].mxu0 %v2137
    %v2139 = vpop.f32.mrb[0].mxu0
    %v2140 = vadd.f32 0.0, %v2139
    %v2141 = vpop.f32.mrb[0].mxu0
    %v2142 = vadd.f32 0.0, %v2141
    %2143 = vmatprep.mubr.f32.mxu0 0.0
    %v2144 = vand.u32 %v2055, 4294901760
    %v2145 = vsub.f32 %v2055, %v2144
    %v2146 = vand.u32 %v2145, 4294901760
    %v2147 = vsub.f32 %v2145, %v2146
    %v2148 = vand.u32 %v2147, 4294901760
    %2149 = vmatmul.mubr.f32.gmra.mrb[0].mxu0 %v2148
    %v2150 = vpop.f32.mrb[0].mxu0
    %v2151 = vadd.f32 0.0, %v2150
    %v2152 = vpop.f32.mrb[0].mxu0
    %v2153 = vadd.f32 0.0, %v2152
    %2154 = vdwg.mxu0
    %v2155 = vand.u32 %v2060, 4294901760
    %v2156 = vsub.f32 %v2060, %v2155
    %v2157 = vand.u32 %v2156, 4294901760
    %v2158 = vsub.f32 %v2156, %v2157
    %v2159 = vand.u32 %v2158, 4294901760
    %2160 = vmatprep.subr.mxu0 %v2159
    %v2161 = vand.u32 %v2058, 4294901760
    %v2162 = vsub.f32 %v2058, %v2161
    %v2163 = vand.u32 %v2162, 4294901760
    %v2164 = vsub.f32 %v2162, %v2163
    %v2165 = vand.u32 %v2164, 4294901760
    %2166 = vmatpush1.msra.mxu0 %v2165
    %2167 = vmatprep.subr.mxu0 0.0
    %2168 = vmatpush1.msra.mxu0 0.0
    %2169 = vmatprep.subr.mxu0 0.0
    %2170 = vmatpush1.msra.mxu0 0.0
    %2171 = vmatprep.subr.mxu0 0.0
    %2172 = vmatpush1.msra.mxu0 0.0
    %2173 = vmatprep.subr.mxu0 0.0
    %2174 = vmatpush1.msra.mxu0 0.0
    %2175 = vmatprep.subr.mxu0 0.0
    %2176 = vmatpush1.msra.mxu0 0.0
    %2177 = vmatprep.subr.mxu0 0.0
    %2178 = vmatpush1.msra.mxu0 0.0
    %2179 = vmatprep.subr.mxu0 0.0
    %2180 = vmatpush1.msra.mxu0 0.0
    %2181 = vmatprep.subr.mxu0 0.0
    %2182 = vmatpush1.msra.mxu0 0.0
    %2183 = vmatprep.subr.mxu0 0.0
    %2184 = vmatpush1.msra.mxu0 0.0
    %2185 = vmatprep.subr.mxu0 0.0
    %2186 = vmatpush1.msra.mxu0 0.0
    %2187 = vmatprep.subr.mxu0 0.0
    %2188 = vmatpush1.msra.mxu0 0.0
    %2189 = vmatprep.subr.mxu0 0.0
    %2190 = vmatpush1.msra.mxu0 0.0
    %2191 = vmatprep.subr.mxu0 0.0
    %2192 = vmatpush1.msra.mxu0 0.0
    %2193 = vmatprep.subr.mxu0 0.0
    %2194 = vmatpush1.msra.mxu0 0.0
    %2195 = vmatprep.subr.mxu0 0.0
    %2196 = vmatpush1.msra.mxu0 0.0
    %2197 = vmatprep.subr.mxu0 0.0
    %2198 = vmatpush1.msra.mxu0 0.0
    %2199 = vmatprep.subr.mxu0 0.0
    %2200 = vmatpush1.msra.mxu0 0.0
    %2201 = vmatprep.subr.mxu0 0.0
    %2202 = vmatpush1.msra.mxu0 0.0
    %2203 = vmatprep.subr.mxu0 0.0
    %2204 = vmatpush1.msra.mxu0 0.0
    %2205 = vmatprep.subr.mxu0 0.0
    %2206 = vmatpush1.msra.mxu0 0.0
    %2207 = vmatprep.subr.mxu0 0.0
    %2208 = vmatpush1.msra.mxu0 0.0
    %2209 = vmatprep.subr.mxu0 0.0
    %2210 = vmatpush1.msra.mxu0 0.0
    %2211 = vmatprep.subr.mxu0 0.0
    %2212 = vmatpush1.msra.mxu0 0.0
    %2213 = vmatprep.subr.mxu0 0.0
    %2214 = vmatpush1.msra.mxu0 0.0
    %2215 = vmatprep.subr.mxu0 0.0
    %2216 = vmatpush1.msra.mxu0 0.0
    %2217 = vmatprep.subr.mxu0 0.0
    %2218 = vmatpush1.msra.mxu0 0.0
    %2219 = vmatprep.subr.mxu0 0.0
    %2220 = vmatpush1.msra.mxu0 0.0
    %2221 = vmatprep.subr.mxu0 0.0
    %2222 = vmatpush1.msra.mxu0 0.0
    %2223 = vmatprep.subr.mxu0 0.0
    %2224 = vmatpush1.msra.mxu0 0.0
    %2225 = vmatprep.subr.mxu0 0.0
    %2226 = vmatpush1.msra.mxu0 0.0
    %2227 = vmatprep.subr.mxu0 0.0
    %2228 = vmatpush1.msra.mxu0 0.0
    %2229 = vmatprep.mubr.f32.mxu0 0.0
    %v2230 = vand.u32 %v2052, 4294901760
    %2231 = vmatmul.mubr.f32.gmra.mrb[0].mxu0 %v2230
    %v2232 = vpop.f32.mrb[0].mxu0
    %v2233 = vadd.f32 %v2140, %v2232
    %v2234 = vpop.f32.mrb[0].mxu0
    %v2235 = vadd.f32 %v2142, %v2234
    %2236 = vmatprep.mubr.f32.mxu0 0.0
    %v2237 = vand.u32 %v2055, 4294901760
    %2238 = vmatmul.mubr.f32.gmra.mrb[0].mxu0 %v2237
    %v2239 = vpop.f32.mrb[0].mxu0
    %v2240 = vadd.f32 %v2151, %v2239
    %v2241 = vpop.f32.mrb[0].mxu0
    %v2242 = vadd.f32 %v2153, %v2241
    %2243 = vdwg.mxu0
    %v2244 = vand.u32 %v2060, 4294901760
    %v2245 = vsub.f32 %v2060, %v2244
    %2246 = vmatprep.subr.mxu0 %v2245
    %v2247 = vand.u32 %v2058, 4294901760
    %v2248 = vsub.f32 %v2058, %v2247
    %2249 = vmatpush1.msra.mxu0 %v2248
    %2250 = vmatprep.subr.mxu0 0.0
    %2251 = vmatpush1.msra.mxu0 0.0
    %2252 = vmatprep.subr.mxu0 0.0
    %2253 = vmatpush1.msra.mxu0 0.0
    %2254 = vmatprep.subr.mxu0 0.0
    %2255 = vmatpush1.msra.mxu0 0.0
    %2256 = vmatprep.subr.mxu0 0.0
    %2257 = vmatpush1.msra.mxu0 0.0
    %2258 = vmatprep.subr.mxu0 0.0
    %2259 = vmatpush1.msra.mxu0 0.0
    %2260 = vmatprep.subr.mxu0 0.0
    %2261 = vmatpush1.msra.mxu0 0.0
    %2262 = vmatprep.subr.mxu0 0.0
    %2263 = vmatpush1.msra.mxu0 0.0
    %2264 = vmatprep.subr.mxu0 0.0
    %2265 = vmatpush1.msra.mxu0 0.0
    %2266 = vmatprep.subr.mxu0 0.0
    %2267 = vmatpush1.msra.mxu0 0.0
    %2268 = vmatprep.subr.mxu0 0.0
    %2269 = vmatpush1.msra.mxu0 0.0
    %2270 = vmatprep.subr.mxu0 0.0
    %2271 = vmatpush1.msra.mxu0 0.0
    %2272 = vmatprep.subr.mxu0 0.0
    %2273 = vmatpush1.msra.mxu0 0.0
    %2274 = vmatprep.subr.mxu0 0.0
    %2275 = vmatpush1.msra.mxu0 0.0
    %2276 = vmatprep.subr.mxu0 0.0
    %2277 = vmatpush1.msra.mxu0 0.0
    %2278 = vmatprep.subr.mxu0 0.0
    %2279 = vmatpush1.msra.mxu0 0.0
    %2280 = vmatprep.subr.mxu0 0.0
    %2281 = vmatpush1.msra.mxu0 0.0
    %2282 = vmatprep.subr.mxu0 0.0
    %2283 = vmatpush1.msra.mxu0 0.0
    %2284 = vmatprep.subr.mxu0 0.0
    %2285 = vmatpush1.msra.mxu0 0.0
    %2286 = vmatprep.subr.mxu0 0.0
    %2287 = vmatpush1.msra.mxu0 0.0
    %2288 = vmatprep.subr.mxu0 0.0
    %2289 = vmatpush1.msra.mxu0 0.0
    %2290 = vmatprep.subr.mxu0 0.0
    %2291 = vmatpush1.msra.mxu0 0.0
    %2292 = vmatprep.subr.mxu0 0.0
    %2293 = vmatpush1.msra.mxu0 0.0
    %2294 = vmatprep.subr.mxu0 0.0
    %2295 = vmatpush1.msra.mxu0 0.0
    %2296 = vmatprep.subr.mxu0 0.0
    %2297 = vmatpush1.msra.mxu0 0.0
    %2298 = vmatprep.subr.mxu0 0.0
    %2299 = vmatpush1.msra.mxu0 0.0
    %2300 = vmatprep.subr.mxu0 0.0
    %2301 = vmatpush1.msra.mxu0 0.0
    %2302 = vmatprep.subr.mxu0 0.0
    %2303 = vmatpush1.msra.mxu0 0.0
    %2304 = vmatprep.subr.mxu0 0.0
    %2305 = vmatpush1.msra.mxu0 0.0
    %2306 = vmatprep.subr.mxu0 0.0
    %2307 = vmatpush1.msra.mxu0 0.0
    %2308 = vmatprep.subr.mxu0 0.0
    %2309 = vmatpush1.msra.mxu0 0.0
    %2310 = vmatprep.subr.mxu0 0.0
    %2311 = vmatpush1.msra.mxu0 0.0
    %2312 = vmatprep.mubr.f32.mxu0 0.0
    %v2313 = vand.u32 %v2052, 4294901760
    %v2314 = vsub.f32 %v2052, %v2313
    %2315 = vmatmul.mubr.f32.gmra.mrb[0].mxu0 %v2314
    %v2316 = vpop.f32.mrb[0].mxu0
    %v2317 = vadd.f32 %v2233, %v2316
    %v2318 = vpop.f32.mrb[0].mxu0
    %v2319 = vadd.f32 %v2235, %v2318
    %2320 = vmatprep.mubr.f32.mxu0 0.0
    %v2321 = vand.u32 %v2055, 4294901760
    %v2322 = vsub.f32 %v2055, %v2321
    %2323 = vmatmul.mubr.f32.gmra.mrb[0].mxu0 %v2322
    %v2324 = vpop.f32.mrb[0].mxu0
    %v2325 = vadd.f32 %v2240, %v2324
    %v2326 = vpop.f32.mrb[0].mxu0
    %v2327 = vadd.f32 %v2242, %v2326
    %2328 = vdwg.mxu0
    %v2329 = vand.u32 %v2060, 4294901760
    %2330 = vmatprep.subr.mxu0 %v2329
    %v2331 = vand.u32 %v2058, 4294901760
    %2332 = vmatpush1.msra.mxu0 %v2331
    %2333 = vmatprep.subr.mxu0 0.0
    %2334 = vmatpush1.msra.mxu0 0.0
    %2335 = vmatprep.subr.mxu0 0.0
    %2336 = vmatpush1.msra.mxu0 0.0
    %2337 = vmatprep.subr.mxu0 0.0
    %2338 = vmatpush1.msra.mxu0 0.0
    %2339 = vmatprep.subr.mxu0 0.0
    %2340 = vmatpush1.msra.mxu0 0.0
    %2341 = vmatprep.subr.mxu0 0.0
    %2342 = vmatpush1.msra.mxu0 0.0
    %2343 = vmatprep.subr.mxu0 0.0
    %2344 = vmatpush1.msra.mxu0 0.0
    %2345 = vmatprep.subr.mxu0 0.0
    %2346 = vmatpush1.msra.mxu0 0.0
    %2347 = vmatprep.subr.mxu0 0.0
    %2348 = vmatpush1.msra.mxu0 0.0
    %2349 = vmatprep.subr.mxu0 0.0
    %2350 = vmatpush1.msra.mxu0 0.0
    %2351 = vmatprep.subr.mxu0 0.0
    %2352 = vmatpush1.msra.mxu0 0.0
    %2353 = vmatprep.subr.mxu0 0.0
    %2354 = vmatpush1.msra.mxu0 0.0
    %2355 = vmatprep.subr.mxu0 0.0
    %2356 = vmatpush1.msra.mxu0 0.0
    %2357 = vmatprep.subr.mxu0 0.0
    %2358 = vmatpush1.msra.mxu0 0.0
    %2359 = vmatprep.subr.mxu0 0.0
    %2360 = vmatpush1.msra.mxu0 0.0
    %2361 = vmatprep.subr.mxu0 0.0
    %2362 = vmatpush1.msra.mxu0 0.0
    %2363 = vmatprep.subr.mxu0 0.0
    %2364 = vmatpush1.msra.mxu0 0.0
    %2365 = vmatprep.subr.mxu0 0.0
    %2366 = vmatpush1.msra.mxu0 0.0
    %2367 = vmatprep.subr.mxu0 0.0
    %2368 = vmatpush1.msra.mxu0 0.0
    %2369 = vmatprep.subr.mxu0 0.0
    %2370 = vmatpush1.msra.mxu0 0.0
    %2371 = vmatprep.subr.mxu0 0.0
    %2372 = vmatpush1.msra.mxu0 0.0
    %2373 = vmatprep.subr.mxu0 0.0
    %2374 = vmatpush1.msra.mxu0 0.0
    %2375 = vmatprep.subr.mxu0 0.0
    %2376 = vmatpush1.msra.mxu0 0.0
    %2377 = vmatprep.subr.mxu0 0.0
    %2378 = vmatpush1.msra.mxu0 0.0
    %2379 = vmatprep.subr.mxu0 0.0
    %2380 = vmatpush1.msra.mxu0 0.0
    %2381 = vmatprep.subr.mxu0 0.0
    %2382 = vmatpush1.msra.mxu0 0.0
    %2383 = vmatprep.subr.mxu0 0.0
    %2384 = vmatpush1.msra.mxu0 0.0
    %2385 = vmatprep.subr.mxu0 0.0
    %2386 = vmatpush1.msra.mxu0 0.0
    %2387 = vmatprep.subr.mxu0 0.0
    %2388 = vmatpush1.msra.mxu0 0.0
    %2389 = vmatprep.subr.mxu0 0.0
    %2390 = vmatpush1.msra.mxu0 0.0
    %2391 = vmatprep.subr.mxu0 0.0
    %2392 = vmatpush1.msra.mxu0 0.0
    %2393 = vmatprep.subr.mxu0 0.0
    %2394 = vmatpush1.msra.mxu0 0.0
    %2395 = vmatprep.mubr.f32.mxu0 0.0
    %v2396 = vand.u32 %v2052, 4294901760
    %v2397 = vsub.f32 %v2052, %v2396
    %v2398 = vand.u32 %v2397, 4294901760
    %2399 = vmatmul.mubr.f32.gmra.mrb[0].mxu0 %v2398
    %v2400 = vpop.f32.mrb[0].mxu0
    %v2401 = vadd.f32 %v2317, %v2400
    %v2402 = vpop.f32.mrb[0].mxu0
    %v2403 = vadd.f32 %v2319, %v2402
    %2404 = vmatprep.mubr.f32.mxu0 0.0
    %v2405 = vand.u32 %v2055, 4294901760
    %v2406 = vsub.f32 %v2055, %v2405
    %v2407 = vand.u32 %v2406, 4294901760
    %2408 = vmatmul.mubr.f32.gmra.mrb[0].mxu0 %v2407
    %v2409 = vpop.f32.mrb[0].mxu0
    %v2410 = vadd.f32 %v2325, %v2409
    %v2411 = vpop.f32.mrb[0].mxu0
    %v2412 = vadd.f32 %v2327, %v2411
    %2413 = vdwg.mxu0
    %v2414 = vand.u32 %v2060, 4294901760
    %v2415 = vsub.f32 %v2060, %v2414
    %v2416 = vand.u32 %v2415, 4294901760
    %2417 = vmatprep.subr.mxu0 %v2416
    %v2418 = vand.u32 %v2058, 4294901760
    %v2419 = vsub.f32 %v2058, %v2418
    %v2420 = vand.u32 %v2419, 4294901760
    %2421 = vmatpush1.msra.mxu0 %v2420
    %2422 = vmatprep.subr.mxu0 0.0
    %2423 = vmatpush1.msra.mxu0 0.0
    %2424 = vmatprep.subr.mxu0 0.0
    %2425 = vmatpush1.msra.mxu0 0.0
    %2426 = vmatprep.subr.mxu0 0.0
    %2427 = vmatpush1.msra.mxu0 0.0
    %2428 = vmatprep.subr.mxu0 0.0
    %2429 = vmatpush1.msra.mxu0 0.0
    %2430 = vmatprep.subr.mxu0 0.0
    %2431 = vmatpush1.msra.mxu0 0.0
    %2432 = vmatprep.subr.mxu0 0.0
    %2433 = vmatpush1.msra.mxu0 0.0
    %2434 = vmatprep.subr.mxu0 0.0
    %2435 = vmatpush1.msra.mxu0 0.0
    %2436 = vmatprep.subr.mxu0 0.0
    %2437 = vmatpush1.msra.mxu0 0.0
    %2438 = vmatprep.subr.mxu0 0.0
    %2439 = vmatpush1.msra.mxu0 0.0
    %2440 = vmatprep.subr.mxu0 0.0
    %2441 = vmatpush1.msra.mxu0 0.0
    %2442 = vmatprep.subr.mxu0 0.0
    %2443 = vmatpush1.msra.mxu0 0.0
    %2444 = vmatprep.subr.mxu0 0.0
    %2445 = vmatpush1.msra.mxu0 0.0
    %2446 = vmatprep.subr.mxu0 0.0
    %2447 = vmatpush1.msra.mxu0 0.0
    %2448 = vmatprep.subr.mxu0 0.0
    %2449 = vmatpush1.msra.mxu0 0.0
    %2450 = vmatprep.subr.mxu0 0.0
    %2451 = vmatpush1.msra.mxu0 0.0
    %2452 = vmatprep.subr.mxu0 0.0
    %2453 = vmatpush1.msra.mxu0 0.0
    %2454 = vmatprep.subr.mxu0 0.0
    %2455 = vmatpush1.msra.mxu0 0.0
    %2456 = vmatprep.subr.mxu0 0.0
    %2457 = vmatpush1.msra.mxu0 0.0
    %2458 = vmatprep.subr.mxu0 0.0
    %2459 = vmatpush1.msra.mxu0 0.0
    %2460 = vmatprep.subr.mxu0 0.0
    %2461 = vmatpush1.msra.mxu0 0.0
    %2462 = vmatprep.subr.mxu0 0.0
    %2463 = vmatpush1.msra.mxu0 0.0
    %2464 = vmatprep.subr.mxu0 0.0
    %2465 = vmatpush1.msra.mxu0 0.0
    %2466 = vmatprep.subr.mxu0 0.0
    %2467 = vmatpush1.msra.mxu0 0.0
    %2468 = vmatprep.subr.mxu0 0.0
    %2469 = vmatpush1.msra.mxu0 0.0
    %2470 = vmatprep.subr.mxu0 0.0
    %2471 = vmatpush1.msra.mxu0 0.0
    %2472 = vmatprep.subr.mxu0 0.0
    %2473 = vmatpush1.msra.mxu0 0.0
    %2474 = vmatprep.subr.mxu0 0.0
    %2475 = vmatpush1.msra.mxu0 0.0
    %2476 = vmatprep.subr.mxu0 0.0
    %2477 = vmatpush1.msra.mxu0 0.0
    %2478 = vmatprep.subr.mxu0 0.0
    %2479 = vmatpush1.msra.mxu0 0.0
    %2480 = vmatprep.subr.mxu0 0.0
    %2481 = vmatpush1.msra.mxu0 0.0
    %2482 = vmatprep.subr.mxu0 0.0
    %2483 = vmatpush1.msra.mxu0 0.0
    %2484 = vmatprep.mubr.f32.mxu0 0.0
    %v2485 = vand.u32 %v2052, 4294901760
    %2486 = vmatmul.mubr.f32.gmra.mrb[0].mxu0 %v2485
    %v2487 = vpop.f32.mrb[0].mxu0
    %v2488 = vadd.f32 %v2401, %v2487
    %v2489 = vpop.f32.mrb[0].mxu0
    %v2490 = vadd.f32 %v2403, %v2489
    %2491 = vmatprep.mubr.f32.mxu0 0.0
    %v2492 = vand.u32 %v2055, 4294901760
    %2493 = vmatmul.mubr.f32.gmra.mrb[0].mxu0 %v2492
    %v2494 = vpop.f32.mrb[0].mxu0
    %v2495 = vadd.f32 %v2410, %v2494
    %v2496 = vpop.f32.mrb[0].mxu0
    %v2497 = vadd.f32 %v2412, %v2496
    %2498 = vdwg.mxu0
    %v2499 = vand.u32 %v2060, 4294901760
    %2500 = vmatprep.subr.mxu0 %v2499
    %v2501 = vand.u32 %v2058, 4294901760
    %2502 = vmatpush1.msra.mxu0 %v2501
    %2503 = vmatprep.subr.mxu0 0.0
    %2504 = vmatpush1.msra.mxu0 0.0
    %2505 = vmatprep.subr.mxu0 0.0
    %2506 = vmatpush1.msra.mxu0 0.0
    %2507 = vmatprep.subr.mxu0 0.0
    %2508 = vmatpush1.msra.mxu0 0.0
    %2509 = vmatprep.subr.mxu0 0.0
    %2510 = vmatpush1.msra.mxu0 0.0
    %2511 = vmatprep.subr.mxu0 0.0
    %2512 = vmatpush1.msra.mxu0 0.0
    %2513 = vmatprep.subr.mxu0 0.0
    %2514 = vmatpush1.msra.mxu0 0.0
    %2515 = vmatprep.subr.mxu0 0.0
    %2516 = vmatpush1.msra.mxu0 0.0
    %2517 = vmatprep.subr.mxu0 0.0
    %2518 = vmatpush1.msra.mxu0 0.0
    %2519 = vmatprep.subr.mxu0 0.0
    %2520 = vmatpush1.msra.mxu0 0.0
    %2521 = vmatprep.subr.mxu0 0.0
    %2522 = vmatpush1.msra.mxu0 0.0
    %2523 = vmatprep.subr.mxu0 0.0
    %2524 = vmatpush1.msra.mxu0 0.0
    %2525 = vmatprep.subr.mxu0 0.0
    %2526 = vmatpush1.msra.mxu0 0.0
    %2527 = vmatprep.subr.mxu0 0.0
    %2528 = vmatpush1.msra.mxu0 0.0
    %2529 = vmatprep.subr.mxu0 0.0
    %2530 = vmatpush1.msra.mxu0 0.0
    %2531 = vmatprep.subr.mxu0 0.0
    %2532 = vmatpush1.msra.mxu0 0.0
    %2533 = vmatprep.subr.mxu0 0.0
    %2534 = vmatpush1.msra.mxu0 0.0
    %2535 = vmatprep.subr.mxu0 0.0
    %2536 = vmatpush1.msra.mxu0 0.0
    %2537 = vmatprep.subr.mxu0 0.0
    %2538 = vmatpush1.msra.mxu0 0.0
    %2539 = vmatprep.subr.mxu0 0.0
    %2540 = vmatpush1.msra.mxu0 0.0
    %2541 = vmatprep.subr.mxu0 0.0
    %2542 = vmatpush1.msra.mxu0 0.0
    %2543 = vmatprep.subr.mxu0 0.0
    %2544 = vmatpush1.msra.mxu0 0.0
    %2545 = vmatprep.subr.mxu0 0.0
    %2546 = vmatpush1.msra.mxu0 0.0
    %2547 = vmatprep.subr.mxu0 0.0
    %2548 = vmatpush1.msra.mxu0 0.0
    %2549 = vmatprep.subr.mxu0 0.0
    %2550 = vmatpush1.msra.mxu0 0.0
    %2551 = vmatprep.subr.mxu0 0.0
    %2552 = vmatpush1.msra.mxu0 0.0
    %2553 = vmatprep.subr.mxu0 0.0
    %2554 = vmatpush1.msra.mxu0 0.0
    %2555 = vmatprep.subr.mxu0 0.0
    %2556 = vmatpush1.msra.mxu0 0.0
    %2557 = vmatprep.subr.mxu0 0.0
    %2558 = vmatpush1.msra.mxu0 0.0
    %2559 = vmatprep.subr.mxu0 0.0
    %2560 = vmatpush1.msra.mxu0 0.0
    %2561 = vmatprep.subr.mxu0 0.0
    %2562 = vmatpush1.msra.mxu0 0.0
    %2563 = vmatprep.subr.mxu0 0.0
    %2564 = vmatpush1.msra.mxu0 0.0
    %2565 = vmatprep.mubr.f32.mxu0 0.0
    %v2566 = vand.u32 %v2052, 4294901760
    %2567 = vmatmul.mubr.f32.gmra.mrb[0].mxu0 %v2566
    %v2568 = vpop.f32.mrb[0].mxu0
    %v2569 = vadd.f32 %v2488, %v2568
    %v2570 = vpop.f32.mrb[0].mxu0
    %v2571 = vadd.f32 %v2490, %v2570
    %2572 = vmatprep.mubr.f32.mxu0 0.0
    %v2573 = vand.u32 %v2055, 4294901760
    %2574 = vmatmul.mubr.f32.gmra.mrb[0].mxu0 %v2573
    %v2575 = vpop.f32.mrb[0].mxu0
    %v2576 = vadd.f32 %v2495, %v2575
    %v2577 = vpop.f32.mrb[0].mxu0
    %v2578 = vadd.f32 %v2497, %v2577
    %2579 = vdwg.mxu0
    %v2580 = vand.u32 %v2064, 4294901760
    %2581 = vmatprep.subr.mxu0 %v2580
    %v2582 = vand.u32 %v2062, 4294901760
    %2583 = vmatpush1.msra.mxu0 %v2582
    %2584 = vmatprep.subr.mxu0 0.0
    %2585 = vmatpush1.msra.mxu0 0.0
    %2586 = vmatprep.subr.mxu0 0.0
    %2587 = vmatpush1.msra.mxu0 0.0
    %2588 = vmatprep.subr.mxu0 0.0
    %2589 = vmatpush1.msra.mxu0 0.0
    %2590 = vmatprep.subr.mxu0 0.0
    %2591 = vmatpush1.msra.mxu0 0.0
    %2592 = vmatprep.subr.mxu0 0.0
    %2593 = vmatpush1.msra.mxu0 0.0
    %2594 = vmatprep.subr.mxu0 0.0
    %2595 = vmatpush1.msra.mxu0 0.0
    %2596 = vmatprep.subr.mxu0 0.0
    %2597 = vmatpush1.msra.mxu0 0.0
    %2598 = vmatprep.subr.mxu0 0.0
    %2599 = vmatpush1.msra.mxu0 0.0
    %2600 = vmatprep.subr.mxu0 0.0
    %2601 = vmatpush1.msra.mxu0 0.0
    %2602 = vmatprep.subr.mxu0 0.0
    %2603 = vmatpush1.msra.mxu0 0.0
    %2604 = vmatprep.subr.mxu0 0.0
    %2605 = vmatpush1.msra.mxu0 0.0
    %2606 = vmatprep.subr.mxu0 0.0
    %2607 = vmatpush1.msra.mxu0 0.0
    %2608 = vmatprep.subr.mxu0 0.0
    %2609 = vmatpush1.msra.mxu0 0.0
    %2610 = vmatprep.subr.mxu0 0.0
    %2611 = vmatpush1.msra.mxu0 0.0
    %2612 = vmatprep.subr.mxu0 0.0
    %2613 = vmatpush1.msra.mxu0 0.0
    %2614 = vmatprep.subr.mxu0 0.0
    %2615 = vmatpush1.msra.mxu0 0.0
    %2616 = vmatprep.subr.mxu0 0.0
    %2617 = vmatpush1.msra.mxu0 0.0
    %2618 = vmatprep.subr.mxu0 0.0
    %2619 = vmatpush1.msra.mxu0 0.0
    %2620 = vmatprep.subr.mxu0 0.0
    %2621 = vmatpush1.msra.mxu0 0.0
    %2622 = vmatprep.subr.mxu0 0.0
    %2623 = vmatpush1.msra.mxu0 0.0
    %2624 = vmatprep.subr.mxu0 0.0
    %2625 = vmatpush1.msra.mxu0 0.0
    %2626 = vmatprep.subr.mxu0 0.0
    %2627 = vmatpush1.msra.mxu0 0.0
    %2628 = vmatprep.subr.mxu0 0.0
    %2629 = vmatpush1.msra.mxu0 0.0
    %2630 = vmatprep.subr.mxu0 0.0
    %2631 = vmatpush1.msra.mxu0 0.0
    %2632 = vmatprep.subr.mxu0 0.0
    %2633 = vmatpush1.msra.mxu0 0.0
    %2634 = vmatprep.subr.mxu0 0.0
    %2635 = vmatpush1.msra.mxu0 0.0
    %2636 = vmatprep.subr.mxu0 0.0
    %2637 = vmatpush1.msra.mxu0 0.0
    %2638 = vmatprep.subr.mxu0 0.0
    %2639 = vmatpush1.msra.mxu0 0.0
    %2640 = vmatprep.subr.mxu0 0.0
    %2641 = vmatpush1.msra.mxu0 0.0
    %2642 = vmatprep.subr.mxu0 0.0
    %2643 = vmatpush1.msra.mxu0 0.0
    %2644 = vmatprep.subr.mxu0 0.0
    %2645 = vmatpush1.msra.mxu0 0.0
    %2646 = vmatprep.mubr.f32.mxu0 0.0
    %v2647 = vand.u32 %v2052, 4294901760
    %v2648 = vsub.f32 %v2052, %v2647
    %v2649 = vand.u32 %v2648, 4294901760
    %v2650 = vsub.f32 %v2648, %v2649
    %v2651 = vand.u32 %v2650, 4294901760
    %2652 = vmatmul.mubr.f32.gmra.mrb[0].mxu0 %v2651
    %v2653 = vpop.f32.mrb[0].mxu0
    %v2654 = vadd.f32 0.0, %v2653
    %v2655 = vpop.f32.mrb[0].mxu0
    %v2656 = vadd.f32 0.0, %v2655
    %2657 = vmatprep.mubr.f32.mxu0 0.0
    %v2658 = vand.u32 %v2055, 4294901760
    %v2659 = vsub.f32 %v2055, %v2658
    %v2660 = vand.u32 %v2659, 4294901760
    %v2661 = vsub.f32 %v2659, %v2660
    %v2662 = vand.u32 %v2661, 4294901760
    %2663 = vmatmul.mubr.f32.gmra.mrb[0].mxu0 %v2662
    %v2664 = vpop.f32.mrb[0].mxu0
    %v2665 = vadd.f32 0.0, %v2664
    %v2666 = vpop.f32.mrb[0].mxu0
    %v2667 = vadd.f32 0.0, %v2666
    %2668 = vdwg.mxu0
    %v2669 = vand.u32 %v2064, 4294901760
    %v2670 = vsub.f32 %v2064, %v2669
    %v2671 = vand.u32 %v2670, 4294901760
    %v2672 = vsub.f32 %v2670, %v2671
    %v2673 = vand.u32 %v2672, 4294901760
    %2674 = vmatprep.subr.mxu0 %v2673
    %v2675 = vand.u32 %v2062, 4294901760
    %v2676 = vsub.f32 %v2062, %v2675
    %v2677 = vand.u32 %v2676, 4294901760
    %v2678 = vsub.f32 %v2676, %v2677
    %v2679 = vand.u32 %v2678, 4294901760
    %2680 = vmatpush1.msra.mxu0 %v2679
    %2681 = vmatprep.subr.mxu0 0.0
    %2682 = vmatpush1.msra.mxu0 0.0
    %2683 = vmatprep.subr.mxu0 0.0
    %2684 = vmatpush1.msra.mxu0 0.0
    %2685 = vmatprep.subr.mxu0 0.0
    %2686 = vmatpush1.msra.mxu0 0.0
    %2687 = vmatprep.subr.mxu0 0.0
    %2688 = vmatpush1.msra.mxu0 0.0
    %2689 = vmatprep.subr.mxu0 0.0
    %2690 = vmatpush1.msra.mxu0 0.0
    %2691 = vmatprep.subr.mxu0 0.0
    %2692 = vmatpush1.msra.mxu0 0.0
    %2693 = vmatprep.subr.mxu0 0.0
    %2694 = vmatpush1.msra.mxu0 0.0
    %2695 = vmatprep.subr.mxu0 0.0
    %2696 = vmatpush1.msra.mxu0 0.0
    %2697 = vmatprep.subr.mxu0 0.0
    %2698 = vmatpush1.msra.mxu0 0.0
    %2699 = vmatprep.subr.mxu0 0.0
    %2700 = vmatpush1.msra.mxu0 0.0
    %2701 = vmatprep.subr.mxu0 0.0
    %2702 = vmatpush1.msra.mxu0 0.0
    %2703 = vmatprep.subr.mxu0 0.0
    %2704 = vmatpush1.msra.mxu0 0.0
    %2705 = vmatprep.subr.mxu0 0.0
    %2706 = vmatpush1.msra.mxu0 0.0
    %2707 = vmatprep.subr.mxu0 0.0
    %2708 = vmatpush1.msra.mxu0 0.0
    %2709 = vmatprep.subr.mxu0 0.0
    %2710 = vmatpush1.msra.mxu0 0.0
    %2711 = vmatprep.subr.mxu0 0.0
    %2712 = vmatpush1.msra.mxu0 0.0
    %2713 = vmatprep.subr.mxu0 0.0
    %2714 = vmatpush1.msra.mxu0 0.0
    %2715 = vmatprep.subr.mxu0 0.0
    %2716 = vmatpush1.msra.mxu0 0.0
    %2717 = vmatprep.subr.mxu0 0.0
    %2718 = vmatpush1.msra.mxu0 0.0
    %2719 = vmatprep.subr.mxu0 0.0
    %2720 = vmatpush1.msra.mxu0 0.0
    %2721 = vmatprep.subr.mxu0 0.0
    %2722 = vmatpush1.msra.mxu0 0.0
    %2723 = vmatprep.subr.mxu0 0.0
    %2724 = vmatpush1.msra.mxu0 0.0
    %2725 = vmatprep.subr.mxu0 0.0
    %2726 = vmatpush1.msra.mxu0 0.0
    %2727 = vmatprep.subr.mxu0 0.0
    %2728 = vmatpush1.msra.mxu0 0.0
    %2729 = vmatprep.subr.mxu0 0.0
    %2730 = vmatpush1.msra.mxu0 0.0
    %2731 = vmatprep.subr.mxu0 0.0
    %2732 = vmatpush1.msra.mxu0 0.0
    %2733 = vmatprep.subr.mxu0 0.0
    %2734 = vmatpush1.msra.mxu0 0.0
    %2735 = vmatprep.subr.mxu0 0.0
    %2736 = vmatpush1.msra.mxu0 0.0
    %2737 = vmatprep.subr.mxu0 0.0
    %2738 = vmatpush1.msra.mxu0 0.0
    %2739 = vmatprep.subr.mxu0 0.0
    %2740 = vmatpush1.msra.mxu0 0.0
    %2741 = vmatprep.subr.mxu0 0.0
    %2742 = vmatpush1.msra.mxu0 0.0
    %2743 = vmatprep.mubr.f32.mxu0 0.0
    %v2744 = vand.u32 %v2052, 4294901760
    %2745 = vmatmul.mubr.f32.gmra.mrb[0].mxu0 %v2744
    %v2746 = vpop.f32.mrb[0].mxu0
    %v2747 = vadd.f32 %v2654, %v2746
    %v2748 = vpop.f32.mrb[0].mxu0
    %v2749 = vadd.f32 %v2656, %v2748
    %2750 = vmatprep.mubr.f32.mxu0 0.0
    %v2751 = vand.u32 %v2055, 4294901760
    %2752 = vmatmul.mubr.f32.gmra.mrb[0].mxu0 %v2751
    %v2753 = vpop.f32.mrb[0].mxu0
    %v2754 = vadd.f32 %v2665, %v2753
    %v2755 = vpop.f32.mrb[0].mxu0
    %v2756 = vadd.f32 %v2667, %v2755
    %2757 = vdwg.mxu0
    %v2758 = vand.u32 %v2064, 4294901760
    %v2759 = vsub.f32 %v2064, %v2758
    %2760 = vmatprep.subr.mxu0 %v2759
    %v2761 = vand.u32 %v2062, 4294901760
    %v2762 = vsub.f32 %v2062, %v2761
    %2763 = vmatpush1.msra.mxu0 %v2762
    %2764 = vmatprep.subr.mxu0 0.0
    %2765 = vmatpush1.msra.mxu0 0.0
    %2766 = vmatprep.subr.mxu0 0.0
    %2767 = vmatpush1.msra.mxu0 0.0
    %2768 = vmatprep.subr.mxu0 0.0
    %2769 = vmatpush1.msra.mxu0 0.0
    %2770 = vmatprep.subr.mxu0 0.0
    %2771 = vmatpush1.msra.mxu0 0.0
    %2772 = vmatprep.subr.mxu0 0.0
    %2773 = vmatpush1.msra.mxu0 0.0
    %2774 = vmatprep.subr.mxu0 0.0
    %2775 = vmatpush1.msra.mxu0 0.0
    %2776 = vmatprep.subr.mxu0 0.0
    %2777 = vmatpush1.msra.mxu0 0.0
    %2778 = vmatprep.subr.mxu0 0.0
    %2779 = vmatpush1.msra.mxu0 0.0
    %2780 = vmatprep.subr.mxu0 0.0
    %2781 = vmatpush1.msra.mxu0 0.0
    %2782 = vmatprep.subr.mxu0 0.0
    %2783 = vmatpush1.msra.mxu0 0.0
    %2784 = vmatprep.subr.mxu0 0.0
    %2785 = vmatpush1.msra.mxu0 0.0
    %2786 = vmatprep.subr.mxu0 0.0
    %2787 = vmatpush1.msra.mxu0 0.0
    %2788 = vmatprep.subr.mxu0 0.0
    %2789 = vmatpush1.msra.mxu0 0.0
    %2790 = vmatprep.subr.mxu0 0.0
    %2791 = vmatpush1.msra.mxu0 0.0
    %2792 = vmatprep.subr.mxu0 0.0
    %2793 = vmatpush1.msra.mxu0 0.0
    %2794 = vmatprep.subr.mxu0 0.0
    %2795 = vmatpush1.msra.mxu0 0.0
    %2796 = vmatprep.subr.mxu0 0.0
    %2797 = vmatpush1.msra.mxu0 0.0
    %2798 = vmatprep.subr.mxu0 0.0
    %2799 = vmatpush1.msra.mxu0 0.0
    %2800 = vmatprep.subr.mxu0 0.0
    %2801 = vmatpush1.msra.mxu0 0.0
    %2802 = vmatprep.subr.mxu0 0.0
    %2803 = vmatpush1.msra.mxu0 0.0
    %2804 = vmatprep.subr.mxu0 0.0
    %2805 = vmatpush1.msra.mxu0 0.0
    %2806 = vmatprep.subr.mxu0 0.0
    %2807 = vmatpush1.msra.mxu0 0.0
    %2808 = vmatprep.subr.mxu0 0.0
    %2809 = vmatpush1.msra.mxu0 0.0
    %2810 = vmatprep.subr.mxu0 0.0
    %2811 = vmatpush1.msra.mxu0 0.0
    %2812 = vmatprep.subr.mxu0 0.0
    %2813 = vmatpush1.msra.mxu0 0.0
    %2814 = vmatprep.subr.mxu0 0.0
    %2815 = vmatpush1.msra.mxu0 0.0
    %2816 = vmatprep.subr.mxu0 0.0
    %2817 = vmatpush1.msra.mxu0 0.0
    %2818 = vmatprep.subr.mxu0 0.0
    %2819 = vmatpush1.msra.mxu0 0.0
    %2820 = vmatprep.subr.mxu0 0.0
    %2821 = vmatpush1.msra.mxu0 0.0
    %2822 = vmatprep.subr.mxu0 0.0
    %2823 = vmatpush1.msra.mxu0 0.0
    %2824 = vmatprep.subr.mxu0 0.0
    %2825 = vmatpush1.msra.mxu0 0.0
    %2826 = vmatprep.mubr.f32.mxu0 0.0
    %v2827 = vand.u32 %v2052, 4294901760
    %v2828 = vsub.f32 %v2052, %v2827
    %2829 = vmatmul.mubr.f32.gmra.mrb[0].mxu0 %v2828
    %v2830 = vpop.f32.mrb[0].mxu0
    %v2831 = vadd.f32 %v2747, %v2830
    %v2832 = vpop.f32.mrb[0].mxu0
    %v2833 = vadd.f32 %v2749, %v2832
    %2834 = vmatprep.mubr.f32.mxu0 0.0
    %v2835 = vand.u32 %v2055, 4294901760
    %v2836 = vsub.f32 %v2055, %v2835
    %2837 = vmatmul.mubr.f32.gmra.mrb[0].mxu0 %v2836
    %v2838 = vpop.f32.mrb[0].mxu0
    %v2839 = vadd.f32 %v2754, %v2838
    %v2840 = vpop.f32.mrb[0].mxu0
    %v2841 = vadd.f32 %v2756, %v2840
    %2842 = vdwg.mxu0
    %v2843 = vand.u32 %v2064, 4294901760
    %2844 = vmatprep.subr.mxu0 %v2843
    %v2845 = vand.u32 %v2062, 4294901760
    %2846 = vmatpush1.msra.mxu0 %v2845
    %2847 = vmatprep.subr.mxu0 0.0
    %2848 = vmatpush1.msra.mxu0 0.0
    %2849 = vmatprep.subr.mxu0 0.0
    %2850 = vmatpush1.msra.mxu0 0.0
    %2851 = vmatprep.subr.mxu0 0.0
    %2852 = vmatpush1.msra.mxu0 0.0
    %2853 = vmatprep.subr.mxu0 0.0
    %2854 = vmatpush1.msra.mxu0 0.0
    %2855 = vmatprep.subr.mxu0 0.0
    %2856 = vmatpush1.msra.mxu0 0.0
    %2857 = vmatprep.subr.mxu0 0.0
    %2858 = vmatpush1.msra.mxu0 0.0
    %2859 = vmatprep.subr.mxu0 0.0
    %2860 = vmatpush1.msra.mxu0 0.0
    %2861 = vmatprep.subr.mxu0 0.0
    %2862 = vmatpush1.msra.mxu0 0.0
    %2863 = vmatprep.subr.mxu0 0.0
    %2864 = vmatpush1.msra.mxu0 0.0
    %2865 = vmatprep.subr.mxu0 0.0
    %2866 = vmatpush1.msra.mxu0 0.0
    %2867 = vmatprep.subr.mxu0 0.0
    %2868 = vmatpush1.msra.mxu0 0.0
    %2869 = vmatprep.subr.mxu0 0.0
    %2870 = vmatpush1.msra.mxu0 0.0
    %2871 = vmatprep.subr.mxu0 0.0
    %2872 = vmatpush1.msra.mxu0 0.0
    %2873 = vmatprep.subr.mxu0 0.0
    %2874 = vmatpush1.msra.mxu0 0.0
    %2875 = vmatprep.subr.mxu0 0.0
    %2876 = vmatpush1.msra.mxu0 0.0
    %2877 = vmatprep.subr.mxu0 0.0
    %2878 = vmatpush1.msra.mxu0 0.0
    %2879 = vmatprep.subr.mxu0 0.0
    %2880 = vmatpush1.msra.mxu0 0.0
    %2881 = vmatprep.subr.mxu0 0.0
    %2882 = vmatpush1.msra.mxu0 0.0
    %2883 = vmatprep.subr.mxu0 0.0
    %2884 = vmatpush1.msra.mxu0 0.0
    %2885 = vmatprep.subr.mxu0 0.0
    %2886 = vmatpush1.msra.mxu0 0.0
    %2887 = vmatprep.subr.mxu0 0.0
    %2888 = vmatpush1.msra.mxu0 0.0
    %2889 = vmatprep.subr.mxu0 0.0
    %2890 = vmatpush1.msra.mxu0 0.0
    %2891 = vmatprep.subr.mxu0 0.0
    %2892 = vmatpush1.msra.mxu0 0.0
    %2893 = vmatprep.subr.mxu0 0.0
    %2894 = vmatpush1.msra.mxu0 0.0
    %2895 = vmatprep.subr.mxu0 0.0
    %2896 = vmatpush1.msra.mxu0 0.0
    %2897 = vmatprep.subr.mxu0 0.0
    %2898 = vmatpush1.msra.mxu0 0.0
    %2899 = vmatprep.subr.mxu0 0.0
    %2900 = vmatpush1.msra.mxu0 0.0
    %2901 = vmatprep.subr.mxu0 0.0
    %2902 = vmatpush1.msra.mxu0 0.0
    %2903 = vmatprep.subr.mxu0 0.0
    %2904 = vmatpush1.msra.mxu0 0.0
    %2905 = vmatprep.subr.mxu0 0.0
    %2906 = vmatpush1.msra.mxu0 0.0
    %2907 = vmatprep.subr.mxu0 0.0
    %2908 = vmatpush1.msra.mxu0 0.0
    %2909 = vmatprep.mubr.f32.mxu0 0.0
    %v2910 = vand.u32 %v2052, 4294901760
    %v2911 = vsub.f32 %v2052, %v2910
    %v2912 = vand.u32 %v2911, 4294901760
    %2913 = vmatmul.mubr.f32.gmra.mrb[0].mxu0 %v2912
    %v2914 = vpop.f32.mrb[0].mxu0
    %v2915 = vadd.f32 %v2831, %v2914
    %v2916 = vpop.f32.mrb[0].mxu0
    %v2917 = vadd.f32 %v2833, %v2916
    %2918 = vmatprep.mubr.f32.mxu0 0.0
    %v2919 = vand.u32 %v2055, 4294901760
    %v2920 = vsub.f32 %v2055, %v2919
    %v2921 = vand.u32 %v2920, 4294901760
    %2922 = vmatmul.mubr.f32.gmra.mrb[0].mxu0 %v2921
    %v2923 = vpop.f32.mrb[0].mxu0
    %v2924 = vadd.f32 %v2839, %v2923
    %v2925 = vpop.f32.mrb[0].mxu0
    %v2926 = vadd.f32 %v2841, %v2925
    %2927 = vdwg.mxu0
    %v2928 = vand.u32 %v2064, 4294901760
    %v2929 = vsub.f32 %v2064, %v2928
    %v2930 = vand.u32 %v2929, 4294901760
    %2931 = vmatprep.subr.mxu0 %v2930
    %v2932 = vand.u32 %v2062, 4294901760
    %v2933 = vsub.f32 %v2062, %v2932
    %v2934 = vand.u32 %v2933, 4294901760
    %2935 = vmatpush1.msra.mxu0 %v2934
    %2936 = vmatprep.subr.mxu0 0.0
    %2937 = vmatpush1.msra.mxu0 0.0
    %2938 = vmatprep.subr.mxu0 0.0
    %2939 = vmatpush1.msra.mxu0 0.0
    %2940 = vmatprep.subr.mxu0 0.0
    %2941 = vmatpush1.msra.mxu0 0.0
    %2942 = vmatprep.subr.mxu0 0.0
    %2943 = vmatpush1.msra.mxu0 0.0
    %2944 = vmatprep.subr.mxu0 0.0
    %2945 = vmatpush1.msra.mxu0 0.0
    %2946 = vmatprep.subr.mxu0 0.0
    %2947 = vmatpush1.msra.mxu0 0.0
    %2948 = vmatprep.subr.mxu0 0.0
    %2949 = vmatpush1.msra.mxu0 0.0
    %2950 = vmatprep.subr.mxu0 0.0
    %2951 = vmatpush1.msra.mxu0 0.0
    %2952 = vmatprep.subr.mxu0 0.0
    %2953 = vmatpush1.msra.mxu0 0.0
    %2954 = vmatprep.subr.mxu0 0.0
    %2955 = vmatpush1.msra.mxu0 0.0
    %2956 = vmatprep.subr.mxu0 0.0
    %2957 = vmatpush1.msra.mxu0 0.0
    %2958 = vmatprep.subr.mxu0 0.0
    %2959 = vmatpush1.msra.mxu0 0.0
    %2960 = vmatprep.subr.mxu0 0.0
    %2961 = vmatpush1.msra.mxu0 0.0
    %2962 = vmatprep.subr.mxu0 0.0
    %2963 = vmatpush1.msra.mxu0 0.0
    %2964 = vmatprep.subr.mxu0 0.0
    %2965 = vmatpush1.msra.mxu0 0.0
    %2966 = vmatprep.subr.mxu0 0.0
    %2967 = vmatpush1.msra.mxu0 0.0
    %2968 = vmatprep.subr.mxu0 0.0
    %2969 = vmatpush1.msra.mxu0 0.0
    %2970 = vmatprep.subr.mxu0 0.0
    %2971 = vmatpush1.msra.mxu0 0.0
    %2972 = vmatprep.subr.mxu0 0.0
    %2973 = vmatpush1.msra.mxu0 0.0
    %2974 = vmatprep.subr.mxu0 0.0
    %2975 = vmatpush1.msra.mxu0 0.0
    %2976 = vmatprep.subr.mxu0 0.0
    %2977 = vmatpush1.msra.mxu0 0.0
    %2978 = vmatprep.subr.mxu0 0.0
    %2979 = vmatpush1.msra.mxu0 0.0
    %2980 = vmatprep.subr.mxu0 0.0
    %2981 = vmatpush1.msra.mxu0 0.0
    %2982 = vmatprep.subr.mxu0 0.0
    %2983 = vmatpush1.msra.mxu0 0.0
    %2984 = vmatprep.subr.mxu0 0.0
    %2985 = vmatpush1.msra.mxu0 0.0
    %2986 = vmatprep.subr.mxu0 0.0
    %2987 = vmatpush1.msra.mxu0 0.0
    %2988 = vmatprep.subr.mxu0 0.0
    %2989 = vmatpush1.msra.mxu0 0.0
    %2990 = vmatprep.subr.mxu0 0.0
    %2991 = vmatpush1.msra.mxu0 0.0
    %2992 = vmatprep.subr.mxu0 0.0
    %2993 = vmatpush1.msra.mxu0 0.0
    %2994 = vmatprep.subr.mxu0 0.0
    %2995 = vmatpush1.msra.mxu0 0.0
    %2996 = vmatprep.subr.mxu0 0.0
    %2997 = vmatpush1.msra.mxu0 0.0
    %2998 = vmatprep.mubr.f32.mxu0 0.0
    %v2999 = vand.u32 %v2052, 4294901760
    %3000 = vmatmul.mubr.f32.gmra.mrb[0].mxu0 %v2999
    %v3001 = vpop.f32.mrb[0].mxu0
    %v3002 = vadd.f32 %v2915, %v3001
    %v3003 = vpop.f32.mrb[0].mxu0
    %v3004 = vadd.f32 %v2917, %v3003
    %3005 = vmatprep.mubr.f32.mxu0 0.0
    %v3006 = vand.u32 %v2055, 4294901760
    %3007 = vmatmul.mubr.f32.gmra.mrb[0].mxu0 %v3006
    %v3008 = vpop.f32.mrb[0].mxu0
    %v3009 = vadd.f32 %v2924, %v3008
    %v3010 = vpop.f32.mrb[0].mxu0
    %v3011 = vadd.f32 %v2926, %v3010
    %3012 = vdwg.mxu0
    %v3013 = vand.u32 %v2064, 4294901760
    %3014 = vmatprep.subr.mxu0 %v3013
    %v3015 = vand.u32 %v2062, 4294901760
    %3016 = vmatpush1.msra.mxu0 %v3015
    %3017 = vmatprep.subr.mxu0 0.0
    %3018 = vmatpush1.msra.mxu0 0.0
    %3019 = vmatprep.subr.mxu0 0.0
    %3020 = vmatpush1.msra.mxu0 0.0
    %3021 = vmatprep.subr.mxu0 0.0
    %3022 = vmatpush1.msra.mxu0 0.0
    %3023 = vmatprep.subr.mxu0 0.0
    %3024 = vmatpush1.msra.mxu0 0.0
    %3025 = vmatprep.subr.mxu0 0.0
    %3026 = vmatpush1.msra.mxu0 0.0
    %3027 = vmatprep.subr.mxu0 0.0
    %3028 = vmatpush1.msra.mxu0 0.0
    %3029 = vmatprep.subr.mxu0 0.0
    %3030 = vmatpush1.msra.mxu0 0.0
    %3031 = vmatprep.subr.mxu0 0.0
    %3032 = vmatpush1.msra.mxu0 0.0
    %3033 = vmatprep.subr.mxu0 0.0
    %3034 = vmatpush1.msra.mxu0 0.0
    %3035 = vmatprep.subr.mxu0 0.0
    %3036 = vmatpush1.msra.mxu0 0.0
    %3037 = vmatprep.subr.mxu0 0.0
    %3038 = vmatpush1.msra.mxu0 0.0
    %3039 = vmatprep.subr.mxu0 0.0
    %3040 = vmatpush1.msra.mxu0 0.0
    %3041 = vmatprep.subr.mxu0 0.0
    %3042 = vmatpush1.msra.mxu0 0.0
    %3043 = vmatprep.subr.mxu0 0.0
    %3044 = vmatpush1.msra.mxu0 0.0
    %3045 = vmatprep.subr.mxu0 0.0
    %3046 = vmatpush1.msra.mxu0 0.0
    %3047 = vmatprep.subr.mxu0 0.0
    %3048 = vmatpush1.msra.mxu0 0.0
    %3049 = vmatprep.subr.mxu0 0.0
    %3050 = vmatpush1.msra.mxu0 0.0
    %3051 = vmatprep.subr.mxu0 0.0
    %3052 = vmatpush1.msra.mxu0 0.0
    %3053 = vmatprep.subr.mxu0 0.0
    %3054 = vmatpush1.msra.mxu0 0.0
    %3055 = vmatprep.subr.mxu0 0.0
    %3056 = vmatpush1.msra.mxu0 0.0
    %3057 = vmatprep.subr.mxu0 0.0
    %3058 = vmatpush1.msra.mxu0 0.0
    %3059 = vmatprep.subr.mxu0 0.0
    %3060 = vmatpush1.msra.mxu0 0.0
    %3061 = vmatprep.subr.mxu0 0.0
    %3062 = vmatpush1.msra.mxu0 0.0
    %3063 = vmatprep.subr.mxu0 0.0
    %3064 = vmatpush1.msra.mxu0 0.0
    %3065 = vmatprep.subr.mxu0 0.0
    %3066 = vmatpush1.msra.mxu0 0.0
    %3067 = vmatprep.subr.mxu0 0.0
    %3068 = vmatpush1.msra.mxu0 0.0
    %3069 = vmatprep.subr.mxu0 0.0
    %3070 = vmatpush1.msra.mxu0 0.0
    %3071 = vmatprep.subr.mxu0 0.0
    %3072 = vmatpush1.msra.mxu0 0.0
    %3073 = vmatprep.subr.mxu0 0.0
    %3074 = vmatpush1.msra.mxu0 0.0
    %3075 = vmatprep.subr.mxu0 0.0
    %3076 = vmatpush1.msra.mxu0 0.0
    %3077 = vmatprep.subr.mxu0 0.0
    %3078 = vmatpush1.msra.mxu0 0.0
    %3079 = vmatprep.mubr.f32.mxu0 0.0
    %v3080 = vand.u32 %v2052, 4294901760
    %3081 = vmatmul.mubr.f32.gmra.mrb[0].mxu0 %v3080
    %v3082 = vpop.f32.mrb[0].mxu0
    %v3083 = vadd.f32 %v3002, %v3082
    %v3084 = vpop.f32.mrb[0].mxu0
    %v3085 = vadd.f32 %v3004, %v3084
    %3086 = vmatprep.mubr.f32.mxu0 0.0
    %v3087 = vand.u32 %v2055, 4294901760
    %3088 = vmatmul.mubr.f32.gmra.mrb[0].mxu0 %v3087
    %v3089 = vpop.f32.mrb[0].mxu0
    %v3090 = vadd.f32 %v3009, %v3089
    %v3091 = vpop.f32.mrb[0].mxu0
    %v3092 = vadd.f32 %v3011, %v3091
    %3093 = vdwg.mxu0
    %v3094 = vld [vmem:[#allocation3] sm:$0xf]
    %v3095 = vmul.f32 %v2569, 2.0
    %v3096 = vmul.f32 %v2571, 2.0
    %v3097 = vmul.f32 %v3083, 2.0
    %v3098 = vmul.f32 %v3085, 2.0
    %v3099 = vmul.f32 %v2576, 2.0
    %v3100 = vmul.f32 %v2578, 2.0
    %v3101 = vmul.f32 %v3090, 2.0
    %v3102 = vmul.f32 %v3092, 2.0
    %v3104 = vlaneseq
    %v3105 = vshrl.u32 %v3104, 7
    %v3106 = vsub.s32 0, %v3105
    %v3107 = vrot.slane %v3094, %v3106
    %v3108 = vlaneseq
    %v3109 = vshrl.u32 %v3108, 7
    %v3110 = vsub.s32 1, %v3109
    %v3111 = vrot.slane %v3094, %v3110
    %v3112 = vlaneseq
    %v3113 = vshrl.u32 %v3112, 7
    %v3114 = vsub.s32 2, %v3113
    %v3115 = vrot.slane %v3094, %v3114
    %v3116 = vlaneseq
    %v3117 = vshrl.u32 %v3116, 7
    %v3118 = vsub.s32 3, %v3117
    %v3119 = vrot.slane %v3094, %v3118
    %v3124 = vsub.f32 %v3107, %v3095
    %v3125 = vsub.f32 %v3111, %v3096
    %v3126 = vsub.f32 %v3115, %v3097
    %v3127 = vsub.f32 %v3119, %v3098
    %v3128 = vsub.f32 %v3107, %v3099
    %v3129 = vsub.f32 %v3111, %v3100
    %v3130 = vsub.f32 %v3115, %v3101
    %v3131 = vsub.f32 %v3119, %v3102
    %v3132 = vld [vmem:[%s6] sm:$0xff]
    %v3133 = vld [vmem:[%s6 + $0x8] sm:$0x3]
    %3135 = vset.pattern.permute.xlu0 0
    %3136 = vperm.xlu0 %3135, %v3132
    %v3137 = vpop.permute.xlu0 %3136
    %3140 = vset.pattern.permute.xlu0 0
    %3141 = vperm.xlu0 %3140, %v3133
    %v3142 = vpop.permute.xlu0 %3141
    %v3144 = vadd.f32 %v3124, %v3137
    %v3145 = vadd.f32 %v3125, %v3137
    %v3146 = vadd.f32 %v3126, %v3137
    %v3147 = vadd.f32 %v3127, %v3137
    %v3148 = vadd.f32 %v3128, %v3142
    %v3149 = vadd.f32 %v3129, %v3142
    %v3150 = vadd.f32 %v3130, %v3142
    %v3151 = vadd.f32 %v3131, %v3142
    %v3152 = vmax.f32 %v3144, 0.0
    %v3153 = vmax.f32 %v3145, 0.0
    %v3154 = vmax.f32 %v3146, 0.0
    %v3155 = vmax.f32 %v3147, 0.0
    %v3156 = vmax.f32 %v3148, 0.0
    %v3157 = vmax.f32 %v3149, 0.0
    %v3158 = vmax.f32 %v3150, 0.0
    %v3159 = vmax.f32 %v3151, 0.0
    %v3160 = vmin.f32 %v3152, %v3153
    %3161 = vmin.xlane.f32.xlu0 %v3160
    %v3162 = vpop.xlane.xlu0 %3161
    %vm3163 = vcmask 1041408
    %v3164 = vsel %vm3163, %v3156, inf
    %v3165 = vsel %vm3163, %v3157, inf
    %v3166 = vmin.f32 %v3164, %v3165
    %3167 = vmin.xlane.f32.xlu0 %v3166
    %v3168 = vpop.xlane.xlu0 %3167
    %v3169 = vmin.f32 %v3154, %v3155
    %3170 = vmin.xlane.f32.xlu0 %v3169
    %v3171 = vpop.xlane.xlu0 %3170
    %v3172 = vsel %vm3163, %v3158, inf
    %v3173 = vsel %vm3163, %v3159, inf
    %v3174 = vmin.f32 %v3172, %v3173
    %3175 = vmin.xlane.f32.xlu0 %v3174
    %v3176 = vpop.xlane.xlu0 %3175
    %vm3177 = vcmask 7168
    %v3178 = vsel %vm3177, %v3162, %v3171
    %v3179 = vsel %vm3177, %v3168, %v3176
    %3180 = vxpose.xlu0.b32.start [1/16] %v3178, 128
    %3181 = vxpose.xlu0.b32.cont [2/16] %v3179, 128
    %3182 = vxpose.xlu0.b32.cont [3/16] 0.0, 128
    %3183 = vxpose.xlu0.b32.cont [4/16] 0.0, 128
    %3184 = vxpose.xlu0.b32.cont [5/16] 0.0, 128
    %3185 = vxpose.xlu0.b32.cont [6/16] 0.0, 128
    %3186 = vxpose.xlu0.b32.cont [7/16] 0.0, 128
    %3187 = vxpose.xlu0.b32.cont [8/16] 0.0, 128
    %3188 = vxpose.xlu0.b32.cont [9/16] 0.0, 128
    %3189 = vxpose.xlu0.b32.cont [10/16] 0.0, 128
    %3190 = vxpose.xlu0.b32.cont [11/16] 0.0, 128
    %3191 = vxpose.xlu0.b32.cont [12/16] 0.0, 128
    %3192 = vxpose.xlu0.b32.cont [13/16] 0.0, 128
    %3193 = vxpose.xlu0.b32.cont [14/16] 0.0, 128
    %3194 = vxpose.xlu0.b32.cont [15/16] 0.0, 128
    %3195 = vxpose.xlu0.b32.end [16/16] 0.0, 128
    %v3196 = vpop.trf.xlu0
    %v3197 = vpop.trf.xlu0
    %v3198 = vpop.trf.xlu0
    %v3199 = vpop.trf.xlu0
    %v3200 = vpop.trf.xlu0
    %v3201 = vpop.trf.xlu0
    %v3202 = vpop.trf.xlu0
    %v3203 = vpop.trf.xlu0
    %v3204 = vpop.trf.xlu0
    %v3205 = vpop.trf.xlu0
    %v3206 = vpop.trf.xlu0
    %v3207 = vpop.trf.xlu0
    %v3208 = vpop.trf.xlu0
    %v3209 = vpop.trf.xlu0
    %v3210 = vpop.trf.xlu0
    %v3211 = vpop.trf.xlu0
    %vm3212 = vcmask 74752
    %3213 = vst.msk [vmem:[#allocation6] sm:$0x3] %vm3212, %v3196
    %v3214 = vadd.f32 %v3196, 1.0
    %v3215 = vadd.f32 %v3196, 0.0001
    %v3216 = vrcp.pop %v3215
    %v3217 = vmul.f32 %v3214, %v3216
    %v3218 = vlog2.pop %v3217
    %v3219 = vmul.f32 %v3218, 0.6931472
    %v3220 = vld [vmem:[#allocation4] sm:$0x3]
    %v3221 = vld [vmem:[%s7] sm:$0xff]
    %v3222 = vld [vmem:[%s7 + $0x8] sm:$0x3]
    %vm3223 = vcmask 80896
    %v3225 = vsel %vm3223, %v3219, 0
    %v3228 = vsel %vm3163, %v3222, 0
    %3230 = vmatprep.subr.mxu0 0.0
    %v3231 = vand.u32 %v3221, 4294901760
    %3232 = vmatpush1.msra.mxu0 %v3231
    %3233 = vmatprep.subr.mxu0 0.0
    %v3234 = vand.u32 %v3228, 4294901760
    %3235 = vmatpush1.msra.mxu0 %v3234
    %3236 = vmatprep.subr.mxu0 0.0
    %3237 = vmatpush1.msra.mxu0 0.0
    %3238 = vmatprep.subr.mxu0 0.0
    %3239 = vmatpush1.msra.mxu0 0.0
    %3240 = vmatprep.subr.mxu0 0.0
    %3241 = vmatpush1.msra.mxu0 0.0
    %3242 = vmatprep.subr.mxu0 0.0
    %3243 = vmatpush1.msra.mxu0 0.0
    %3244 = vmatprep.subr.mxu0 0.0
    %3245 = vmatpush1.msra.mxu0 0.0
    %3246 = vmatprep.subr.mxu0 0.0
    %3247 = vmatpush1.msra.mxu0 0.0
    %3248 = vmatprep.subr.mxu0 0.0
    %3249 = vmatpush1.msra.mxu0 0.0
    %3250 = vmatprep.subr.mxu0 0.0
    %3251 = vmatpush1.msra.mxu0 0.0
    %3252 = vmatprep.subr.mxu0 0.0
    %3253 = vmatpush1.msra.mxu0 0.0
    %3254 = vmatprep.subr.mxu0 0.0
    %3255 = vmatpush1.msra.mxu0 0.0
    %3256 = vmatprep.subr.mxu0 0.0
    %3257 = vmatpush1.msra.mxu0 0.0
    %3258 = vmatprep.subr.mxu0 0.0
    %3259 = vmatpush1.msra.mxu0 0.0
    %3260 = vmatprep.subr.mxu0 0.0
    %3261 = vmatpush1.msra.mxu0 0.0
    %3262 = vmatprep.subr.mxu0 0.0
    %3263 = vmatpush1.msra.mxu0 0.0
    %3264 = vmatprep.subr.mxu0 0.0
    %3265 = vmatpush1.msra.mxu0 0.0
    %3266 = vmatprep.subr.mxu0 0.0
    %3267 = vmatpush1.msra.mxu0 0.0
    %3268 = vmatprep.subr.mxu0 0.0
    %3269 = vmatpush1.msra.mxu0 0.0
    %3270 = vmatprep.subr.mxu0 0.0
    %3271 = vmatpush1.msra.mxu0 0.0
    %3272 = vmatprep.subr.mxu0 0.0
    %3273 = vmatpush1.msra.mxu0 0.0
    %3274 = vmatprep.subr.mxu0 0.0
    %3275 = vmatpush1.msra.mxu0 0.0
    %3276 = vmatprep.subr.mxu0 0.0
    %3277 = vmatpush1.msra.mxu0 0.0
    %3278 = vmatprep.subr.mxu0 0.0
    %3279 = vmatpush1.msra.mxu0 0.0
    %3280 = vmatprep.subr.mxu0 0.0
    %3281 = vmatpush1.msra.mxu0 0.0
    %3282 = vmatprep.subr.mxu0 0.0
    %3283 = vmatpush1.msra.mxu0 0.0
    %3284 = vmatprep.subr.mxu0 0.0
    %3285 = vmatpush1.msra.mxu0 0.0
    %3286 = vmatprep.subr.mxu0 0.0
    %3287 = vmatpush1.msra.mxu0 0.0
    %3288 = vmatprep.subr.mxu0 0.0
    %3289 = vmatpush1.msra.mxu0 0.0
    %3290 = vmatprep.subr.mxu0 0.0
    %3291 = vmatpush1.msra.mxu0 0.0
    %3292 = vmatprep.subr.mxu0 0.0
    %3293 = vmatpush1.msra.mxu0 0.0
    %3294 = vmatprep.subr.mxu0 0.0
    %3295 = vmatpush1.msra.mxu0 0.0
    %3296 = vmatprep.mubr.f32.mxu0 0.0
    %v3297 = vand.u32 %v3225, 4294901760
    %v3298 = vsub.f32 %v3225, %v3297
    %v3299 = vand.u32 %v3298, 4294901760
    %v3300 = vsub.f32 %v3298, %v3299
    %v3301 = vand.u32 %v3300, 4294901760
    %3302 = vmatmul.mubr.f32.gmra.mrb[0].mxu0 %v3301
    %v3303 = vpop.f32.mrb[0].mxu0
    %v3304 = vadd.f32 0.0, %v3303
    %v3305 = vpop.f32.mrb[0].mxu0
    %3306 = vdwg.mxu0
    %3307 = vmatprep.subr.mxu0 0.0
    %v3308 = vand.u32 %v3221, 4294901760
    %v3309 = vsub.f32 %v3221, %v3308
    %v3310 = vand.u32 %v3309, 4294901760
    %v3311 = vsub.f32 %v3309, %v3310
    %v3312 = vand.u32 %v3311, 4294901760
    %3313 = vmatpush1.msra.mxu0 %v3312
    %3314 = vmatprep.subr.mxu0 0.0
    %v3315 = vand.u32 %v3228, 4294901760
    %v3316 = vsub.f32 %v3228, %v3315
    %v3317 = vand.u32 %v3316, 4294901760
    %v3318 = vsub.f32 %v3316, %v3317
    %v3319 = vand.u32 %v3318, 4294901760
    %3320 = vmatpush1.msra.mxu0 %v3319
    %3321 = vmatprep.subr.mxu0 0.0
    %3322 = vmatpush1.msra.mxu0 0.0
    %3323 = vmatprep.subr.mxu0 0.0
    %3324 = vmatpush1.msra.mxu0 0.0
    %3325 = vmatprep.subr.mxu0 0.0
    %3326 = vmatpush1.msra.mxu0 0.0
    %3327 = vmatprep.subr.mxu0 0.0
    %3328 = vmatpush1.msra.mxu0 0.0
    %3329 = vmatprep.subr.mxu0 0.0
    %3330 = vmatpush1.msra.mxu0 0.0
    %3331 = vmatprep.subr.mxu0 0.0
    %3332 = vmatpush1.msra.mxu0 0.0
    %3333 = vmatprep.subr.mxu0 0.0
    %3334 = vmatpush1.msra.mxu0 0.0
    %3335 = vmatprep.subr.mxu0 0.0
    %3336 = vmatpush1.msra.mxu0 0.0
    %3337 = vmatprep.subr.mxu0 0.0
    %3338 = vmatpush1.msra.mxu0 0.0
    %3339 = vmatprep.subr.mxu0 0.0
    %3340 = vmatpush1.msra.mxu0 0.0
    %3341 = vmatprep.subr.mxu0 0.0
    %3342 = vmatpush1.msra.mxu0 0.0
    %3343 = vmatprep.subr.mxu0 0.0
    %3344 = vmatpush1.msra.mxu0 0.0
    %3345 = vmatprep.subr.mxu0 0.0
    %3346 = vmatpush1.msra.mxu0 0.0
    %3347 = vmatprep.subr.mxu0 0.0
    %3348 = vmatpush1.msra.mxu0 0.0
    %3349 = vmatprep.subr.mxu0 0.0
    %3350 = vmatpush1.msra.mxu0 0.0
    %3351 = vmatprep.subr.mxu0 0.0
    %3352 = vmatpush1.msra.mxu0 0.0
    %3353 = vmatprep.subr.mxu0 0.0
    %3354 = vmatpush1.msra.mxu0 0.0
    %3355 = vmatprep.subr.mxu0 0.0
    %3356 = vmatpush1.msra.mxu0 0.0
    %3357 = vmatprep.subr.mxu0 0.0
    %3358 = vmatpush1.msra.mxu0 0.0
    %3359 = vmatprep.subr.mxu0 0.0
    %3360 = vmatpush1.msra.mxu0 0.0
    %3361 = vmatprep.subr.mxu0 0.0
    %3362 = vmatpush1.msra.mxu0 0.0
    %3363 = vmatprep.subr.mxu0 0.0
    %3364 = vmatpush1.msra.mxu0 0.0
    %3365 = vmatprep.subr.mxu0 0.0
    %3366 = vmatpush1.msra.mxu0 0.0
    %3367 = vmatprep.subr.mxu0 0.0
    %3368 = vmatpush1.msra.mxu0 0.0
    %3369 = vmatprep.subr.mxu0 0.0
    %3370 = vmatpush1.msra.mxu0 0.0
    %3371 = vmatprep.subr.mxu0 0.0
    %3372 = vmatpush1.msra.mxu0 0.0
    %3373 = vmatprep.subr.mxu0 0.0
    %3374 = vmatpush1.msra.mxu0 0.0
    %3375 = vmatprep.subr.mxu0 0.0
    %3376 = vmatpush1.msra.mxu0 0.0
    %3377 = vmatprep.subr.mxu0 0.0
    %3378 = vmatpush1.msra.mxu0 0.0
    %3379 = vmatprep.subr.mxu0 0.0
    %3380 = vmatpush1.msra.mxu0 0.0
    %3381 = vmatprep.mubr.f32.mxu0 0.0
    %v3382 = vand.u32 %v3225, 4294901760
    %3383 = vmatmul.mubr.f32.gmra.mrb[0].mxu0 %v3382
    %v3384 = vpop.f32.mrb[0].mxu0
    %v3385 = vadd.f32 %v3304, %v3384
    %v3386 = vpop.f32.mrb[0].mxu0
    %3387 = vdwg.mxu0
    %3388 = vmatprep.subr.mxu0 0.0
    %v3389 = vand.u32 %v3221, 4294901760
    %v3390 = vsub.f32 %v3221, %v3389
    %3391 = vmatpush1.msra.mxu0 %v3390
    %3392 = vmatprep.subr.mxu0 0.0
    %v3393 = vand.u32 %v3228, 4294901760
    %v3394 = vsub.f32 %v3228, %v3393
    %3395 = vmatpush1.msra.mxu0 %v3394
    %3396 = vmatprep.subr.mxu0 0.0
    %3397 = vmatpush1.msra.mxu0 0.0
    %3398 = vmatprep.subr.mxu0 0.0
    %3399 = vmatpush1.msra.mxu0 0.0
    %3400 = vmatprep.subr.mxu0 0.0
    %3401 = vmatpush1.msra.mxu0 0.0
    %3402 = vmatprep.subr.mxu0 0.0
    %3403 = vmatpush1.msra.mxu0 0.0
    %3404 = vmatprep.subr.mxu0 0.0
    %3405 = vmatpush1.msra.mxu0 0.0
    %3406 = vmatprep.subr.mxu0 0.0
    %3407 = vmatpush1.msra.mxu0 0.0
    %3408 = vmatprep.subr.mxu0 0.0
    %3409 = vmatpush1.msra.mxu0 0.0
    %3410 = vmatprep.subr.mxu0 0.0
    %3411 = vmatpush1.msra.mxu0 0.0
    %3412 = vmatprep.subr.mxu0 0.0
    %3413 = vmatpush1.msra.mxu0 0.0
    %3414 = vmatprep.subr.mxu0 0.0
    %3415 = vmatpush1.msra.mxu0 0.0
    %3416 = vmatprep.subr.mxu0 0.0
    %3417 = vmatpush1.msra.mxu0 0.0
    %3418 = vmatprep.subr.mxu0 0.0
    %3419 = vmatpush1.msra.mxu0 0.0
    %3420 = vmatprep.subr.mxu0 0.0
    %3421 = vmatpush1.msra.mxu0 0.0
    %3422 = vmatprep.subr.mxu0 0.0
    %3423 = vmatpush1.msra.mxu0 0.0
    %3424 = vmatprep.subr.mxu0 0.0
    %3425 = vmatpush1.msra.mxu0 0.0
    %3426 = vmatprep.subr.mxu0 0.0
    %3427 = vmatpush1.msra.mxu0 0.0
    %3428 = vmatprep.subr.mxu0 0.0
    %3429 = vmatpush1.msra.mxu0 0.0
    %3430 = vmatprep.subr.mxu0 0.0
    %3431 = vmatpush1.msra.mxu0 0.0
    %3432 = vmatprep.subr.mxu0 0.0
    %3433 = vmatpush1.msra.mxu0 0.0
    %3434 = vmatprep.subr.mxu0 0.0
    %3435 = vmatpush1.msra.mxu0 0.0
    %3436 = vmatprep.subr.mxu0 0.0
    %3437 = vmatpush1.msra.mxu0 0.0
    %3438 = vmatprep.subr.mxu0 0.0
    %3439 = vmatpush1.msra.mxu0 0.0
    %3440 = vmatprep.subr.mxu0 0.0
    %3441 = vmatpush1.msra.mxu0 0.0
    %3442 = vmatprep.subr.mxu0 0.0
    %3443 = vmatpush1.msra.mxu0 0.0
    %3444 = vmatprep.subr.mxu0 0.0
    %3445 = vmatpush1.msra.mxu0 0.0
    %3446 = vmatprep.subr.mxu0 0.0
    %3447 = vmatpush1.msra.mxu0 0.0
    %3448 = vmatprep.subr.mxu0 0.0
    %3449 = vmatpush1.msra.mxu0 0.0
    %3450 = vmatprep.subr.mxu0 0.0
    %3451 = vmatpush1.msra.mxu0 0.0
    %3452 = vmatprep.subr.mxu0 0.0
    %3453 = vmatpush1.msra.mxu0 0.0
    %3454 = vmatprep.subr.mxu0 0.0
    %3455 = vmatpush1.msra.mxu0 0.0
    %3456 = vmatprep.mubr.f32.mxu0 0.0
    %v3457 = vand.u32 %v3225, 4294901760
    %v3458 = vsub.f32 %v3225, %v3457
    %3459 = vmatmul.mubr.f32.gmra.mrb[0].mxu0 %v3458
    %v3460 = vpop.f32.mrb[0].mxu0
    %v3461 = vadd.f32 %v3385, %v3460
    %v3462 = vpop.f32.mrb[0].mxu0
    %3463 = vdwg.mxu0
    %3464 = vmatprep.subr.mxu0 0.0
    %v3465 = vand.u32 %v3221, 4294901760
    %3466 = vmatpush1.msra.mxu0 %v3465
    %3467 = vmatprep.subr.mxu0 0.0
    %v3468 = vand.u32 %v3228, 4294901760
    %3469 = vmatpush1.msra.mxu0 %v3468
    %3470 = vmatprep.subr.mxu0 0.0
    %3471 = vmatpush1.msra.mxu0 0.0
    %3472 = vmatprep.subr.mxu0 0.0
    %3473 = vmatpush1.msra.mxu0 0.0
    %3474 = vmatprep.subr.mxu0 0.0
    %3475 = vmatpush1.msra.mxu0 0.0
    %3476 = vmatprep.subr.mxu0 0.0
    %3477 = vmatpush1.msra.mxu0 0.0
    %3478 = vmatprep.subr.mxu0 0.0
    %3479 = vmatpush1.msra.mxu0 0.0
    %3480 = vmatprep.subr.mxu0 0.0
    %3481 = vmatpush1.msra.mxu0 0.0
    %3482 = vmatprep.subr.mxu0 0.0
    %3483 = vmatpush1.msra.mxu0 0.0
    %3484 = vmatprep.subr.mxu0 0.0
    %3485 = vmatpush1.msra.mxu0 0.0
    %3486 = vmatprep.subr.mxu0 0.0
    %3487 = vmatpush1.msra.mxu0 0.0
    %3488 = vmatprep.subr.mxu0 0.0
    %3489 = vmatpush1.msra.mxu0 0.0
    %3490 = vmatprep.subr.mxu0 0.0
    %3491 = vmatpush1.msra.mxu0 0.0
    %3492 = vmatprep.subr.mxu0 0.0
    %3493 = vmatpush1.msra.mxu0 0.0
    %3494 = vmatprep.subr.mxu0 0.0
    %3495 = vmatpush1.msra.mxu0 0.0
    %3496 = vmatprep.subr.mxu0 0.0
    %3497 = vmatpush1.msra.mxu0 0.0
    %3498 = vmatprep.subr.mxu0 0.0
    %3499 = vmatpush1.msra.mxu0 0.0
    %3500 = vmatprep.subr.mxu0 0.0
    %3501 = vmatpush1.msra.mxu0 0.0
    %3502 = vmatprep.subr.mxu0 0.0
    %3503 = vmatpush1.msra.mxu0 0.0
    %3504 = vmatprep.subr.mxu0 0.0
    %3505 = vmatpush1.msra.mxu0 0.0
    %3506 = vmatprep.subr.mxu0 0.0
    %3507 = vmatpush1.msra.mxu0 0.0
    %3508 = vmatprep.subr.mxu0 0.0
    %3509 = vmatpush1.msra.mxu0 0.0
    %3510 = vmatprep.subr.mxu0 0.0
    %3511 = vmatpush1.msra.mxu0 0.0
    %3512 = vmatprep.subr.mxu0 0.0
    %3513 = vmatpush1.msra.mxu0 0.0
    %3514 = vmatprep.subr.mxu0 0.0
    %3515 = vmatpush1.msra.mxu0 0.0
    %3516 = vmatprep.subr.mxu0 0.0
    %3517 = vmatpush1.msra.mxu0 0.0
    %3518 = vmatprep.subr.mxu0 0.0
    %3519 = vmatpush1.msra.mxu0 0.0
    %3520 = vmatprep.subr.mxu0 0.0
    %3521 = vmatpush1.msra.mxu0 0.0
    %3522 = vmatprep.subr.mxu0 0.0
    %3523 = vmatpush1.msra.mxu0 0.0
    %3524 = vmatprep.subr.mxu0 0.0
    %3525 = vmatpush1.msra.mxu0 0.0
    %3526 = vmatprep.subr.mxu0 0.0
    %3527 = vmatpush1.msra.mxu0 0.0
    %3528 = vmatprep.subr.mxu0 0.0
    %3529 = vmatpush1.msra.mxu0 0.0
    %3530 = vmatprep.mubr.f32.mxu0 0.0
    %v3531 = vand.u32 %v3225, 4294901760
    %v3532 = vsub.f32 %v3225, %v3531
    %v3533 = vand.u32 %v3532, 4294901760
    %3534 = vmatmul.mubr.f32.gmra.mrb[0].mxu0 %v3533
    %v3535 = vpop.f32.mrb[0].mxu0
    %v3536 = vadd.f32 %v3461, %v3535
    %v3537 = vpop.f32.mrb[0].mxu0
    %3538 = vdwg.mxu0
    %3539 = vmatprep.subr.mxu0 0.0
    %v3540 = vand.u32 %v3221, 4294901760
    %v3541 = vsub.f32 %v3221, %v3540
    %v3542 = vand.u32 %v3541, 4294901760
    %3543 = vmatpush1.msra.mxu0 %v3542
    %3544 = vmatprep.subr.mxu0 0.0
    %v3545 = vand.u32 %v3228, 4294901760
    %v3546 = vsub.f32 %v3228, %v3545
    %v3547 = vand.u32 %v3546, 4294901760
    %3548 = vmatpush1.msra.mxu0 %v3547
    %3549 = vmatprep.subr.mxu0 0.0
    %3550 = vmatpush1.msra.mxu0 0.0
    %3551 = vmatprep.subr.mxu0 0.0
    %3552 = vmatpush1.msra.mxu0 0.0
    %3553 = vmatprep.subr.mxu0 0.0
    %3554 = vmatpush1.msra.mxu0 0.0
    %3555 = vmatprep.subr.mxu0 0.0
    %3556 = vmatpush1.msra.mxu0 0.0
    %3557 = vmatprep.subr.mxu0 0.0
    %3558 = vmatpush1.msra.mxu0 0.0
    %3559 = vmatprep.subr.mxu0 0.0
    %3560 = vmatpush1.msra.mxu0 0.0
    %3561 = vmatprep.subr.mxu0 0.0
    %3562 = vmatpush1.msra.mxu0 0.0
    %3563 = vmatprep.subr.mxu0 0.0
    %3564 = vmatpush1.msra.mxu0 0.0
    %3565 = vmatprep.subr.mxu0 0.0
    %3566 = vmatpush1.msra.mxu0 0.0
    %3567 = vmatprep.subr.mxu0 0.0
    %3568 = vmatpush1.msra.mxu0 0.0
    %3569 = vmatprep.subr.mxu0 0.0
    %3570 = vmatpush1.msra.mxu0 0.0
    %3571 = vmatprep.subr.mxu0 0.0
    %3572 = vmatpush1.msra.mxu0 0.0
    %3573 = vmatprep.subr.mxu0 0.0
    %3574 = vmatpush1.msra.mxu0 0.0
    %3575 = vmatprep.subr.mxu0 0.0
    %3576 = vmatpush1.msra.mxu0 0.0
    %3577 = vmatprep.subr.mxu0 0.0
    %3578 = vmatpush1.msra.mxu0 0.0
    %3579 = vmatprep.subr.mxu0 0.0
    %3580 = vmatpush1.msra.mxu0 0.0
    %3581 = vmatprep.subr.mxu0 0.0
    %3582 = vmatpush1.msra.mxu0 0.0
    %3583 = vmatprep.subr.mxu0 0.0
    %3584 = vmatpush1.msra.mxu0 0.0
    %3585 = vmatprep.subr.mxu0 0.0
    %3586 = vmatpush1.msra.mxu0 0.0
    %3587 = vmatprep.subr.mxu0 0.0
    %3588 = vmatpush1.msra.mxu0 0.0
    %3589 = vmatprep.subr.mxu0 0.0
    %3590 = vmatpush1.msra.mxu0 0.0
    %3591 = vmatprep.subr.mxu0 0.0
    %3592 = vmatpush1.msra.mxu0 0.0
    %3593 = vmatprep.subr.mxu0 0.0
    %3594 = vmatpush1.msra.mxu0 0.0
    %3595 = vmatprep.subr.mxu0 0.0
    %3596 = vmatpush1.msra.mxu0 0.0
    %3597 = vmatprep.subr.mxu0 0.0
    %3598 = vmatpush1.msra.mxu0 0.0
    %3599 = vmatprep.subr.mxu0 0.0
    %3600 = vmatpush1.msra.mxu0 0.0
    %3601 = vmatprep.subr.mxu0 0.0
    %3602 = vmatpush1.msra.mxu0 0.0
    %3603 = vmatprep.subr.mxu0 0.0
    %3604 = vmatpush1.msra.mxu0 0.0
    %3605 = vmatprep.subr.mxu0 0.0
    %3606 = vmatpush1.msra.mxu0 0.0
    %3607 = vmatprep.subr.mxu0 0.0
    %3608 = vmatpush1.msra.mxu0 0.0
    %3609 = vmatprep.mubr.f32.mxu0 0.0
    %v3610 = vand.u32 %v3225, 4294901760
    %3611 = vmatmul.mubr.f32.gmra.mrb[0].mxu0 %v3610
    %v3612 = vpop.f32.mrb[0].mxu0
    %v3613 = vadd.f32 %v3536, %v3612
    %v3614 = vpop.f32.mrb[0].mxu0
    %3615 = vdwg.mxu0
    %3616 = vmatprep.subr.mxu0 0.0
    %v3617 = vand.u32 %v3221, 4294901760
    %3618 = vmatpush1.msra.mxu0 %v3617
    %3619 = vmatprep.subr.mxu0 0.0
    %v3620 = vand.u32 %v3228, 4294901760
    %3621 = vmatpush1.msra.mxu0 %v3620
    %3622 = vmatprep.subr.mxu0 0.0
    %3623 = vmatpush1.msra.mxu0 0.0
    %3624 = vmatprep.subr.mxu0 0.0
    %3625 = vmatpush1.msra.mxu0 0.0
    %3626 = vmatprep.subr.mxu0 0.0
    %3627 = vmatpush1.msra.mxu0 0.0
    %3628 = vmatprep.subr.mxu0 0.0
    %3629 = vmatpush1.msra.mxu0 0.0
    %3630 = vmatprep.subr.mxu0 0.0
    %3631 = vmatpush1.msra.mxu0 0.0
    %3632 = vmatprep.subr.mxu0 0.0
    %3633 = vmatpush1.msra.mxu0 0.0
    %3634 = vmatprep.subr.mxu0 0.0
    %3635 = vmatpush1.msra.mxu0 0.0
    %3636 = vmatprep.subr.mxu0 0.0
    %3637 = vmatpush1.msra.mxu0 0.0
    %3638 = vmatprep.subr.mxu0 0.0
    %3639 = vmatpush1.msra.mxu0 0.0
    %3640 = vmatprep.subr.mxu0 0.0
    %3641 = vmatpush1.msra.mxu0 0.0
    %3642 = vmatprep.subr.mxu0 0.0
    %3643 = vmatpush1.msra.mxu0 0.0
    %3644 = vmatprep.subr.mxu0 0.0
    %3645 = vmatpush1.msra.mxu0 0.0
    %3646 = vmatprep.subr.mxu0 0.0
    %3647 = vmatpush1.msra.mxu0 0.0
    %3648 = vmatprep.subr.mxu0 0.0
    %3649 = vmatpush1.msra.mxu0 0.0
    %3650 = vmatprep.subr.mxu0 0.0
    %3651 = vmatpush1.msra.mxu0 0.0
    %3652 = vmatprep.subr.mxu0 0.0
    %3653 = vmatpush1.msra.mxu0 0.0
    %3654 = vmatprep.subr.mxu0 0.0
    %3655 = vmatpush1.msra.mxu0 0.0
    %3656 = vmatprep.subr.mxu0 0.0
    %3657 = vmatpush1.msra.mxu0 0.0
    %3658 = vmatprep.subr.mxu0 0.0
    %3659 = vmatpush1.msra.mxu0 0.0
    %3660 = vmatprep.subr.mxu0 0.0
    %3661 = vmatpush1.msra.mxu0 0.0
    %3662 = vmatprep.subr.mxu0 0.0
    %3663 = vmatpush1.msra.mxu0 0.0
    %3664 = vmatprep.subr.mxu0 0.0
    %3665 = vmatpush1.msra.mxu0 0.0
    %3666 = vmatprep.subr.mxu0 0.0
    %3667 = vmatpush1.msra.mxu0 0.0
    %3668 = vmatprep.subr.mxu0 0.0
    %3669 = vmatpush1.msra.mxu0 0.0
    %3670 = vmatprep.subr.mxu0 0.0
    %3671 = vmatpush1.msra.mxu0 0.0
    %3672 = vmatprep.subr.mxu0 0.0
    %3673 = vmatpush1.msra.mxu0 0.0
    %3674 = vmatprep.subr.mxu0 0.0
    %3675 = vmatpush1.msra.mxu0 0.0
    %3676 = vmatprep.subr.mxu0 0.0
    %3677 = vmatpush1.msra.mxu0 0.0
    %3678 = vmatprep.subr.mxu0 0.0
    %3679 = vmatpush1.msra.mxu0 0.0
    %3680 = vmatprep.subr.mxu0 0.0
    %3681 = vmatpush1.msra.mxu0 0.0
    %3682 = vmatprep.mubr.f32.mxu0 0.0
    %v3683 = vand.u32 %v3225, 4294901760
    %3684 = vmatmul.mubr.f32.gmra.mrb[0].mxu0 %v3683
    %v3685 = vpop.f32.mrb[0].mxu0
    %v3686 = vadd.f32 %v3613, %v3685
    %v3687 = vpop.f32.mrb[0].mxu0
    %3688 = vdwg.mxu0
    %v3689 = vadd.f32 %v3220, %v3686
    %vm3690 = vcmask 33792
    %3691 = vst.msk [vmem:[#allocation4] sm:$0x3] %vm3690, %v3689
    // Predicated region
    $region38: #{protopnet_forward.1} parent=1 // pred_check
      _
    $region39: #{protopnet_forward.1} parent=1 // pred_check_branch
      %3693 = sbr.rel (0) target = $region41
    $region40: #{protopnet_forward.1} parent=1 // pred_region
      %s3695 = ssub.s32 32, 32
      %3696 = vsyncadd [#allocation5], %s3695
      %s3698 = sshll.u32 [#allocation4], 4
      %s3699 = int_to_ptr.vmem [resolvable:$true] %s3698
      %3701 = dma.vmem_to_hbm [thread:$0]  %s3699, 32, %s8, [#allocation5]
    $region41: #{protopnet_forward.1} parent=1 // pred_fallthru
      _
    // Predicated region
    $region42: #{protopnet_forward.1} parent=1 // pred_check
      _
    $region43: #{protopnet_forward.1} parent=1 // pred_check_branch
      %3703 = sbr.rel (0) target = $region45
    $region44: #{protopnet_forward.1} parent=1 // pred_region
      %s3705 = ssub.s32 32, 32
      %3706 = vsyncadd [#allocation7], %s3705
      %s3708 = sshll.u32 [#allocation6], 4
      %s3709 = int_to_ptr.vmem [resolvable:$true] %s3708
      %3711 = dma.vmem_to_hbm [thread:$0]  %s3709, 32, %s9, [#allocation7]
    $region45: #{protopnet_forward.1} parent=1 // pred_fallthru
      _
    // Predicated region
    $region46: #{protopnet_forward.1} parent=1 // pred_check
      _
    $region47: #{protopnet_forward.1} parent=1 // pred_check_branch
      %3713 = sbr.rel (0) target = $region49
    $region48: #{protopnet_forward.1} parent=1 // pred_region
      %3714 = dma.done [#allocation5], 32
    $region49: #{protopnet_forward.1} parent=1 // pred_fallthru
      _
    // Predicated region
    $region50: #{protopnet_forward.1} parent=1 // pred_check
      _
    $region51: #{protopnet_forward.1} parent=1 // pred_check_branch
      %3716 = sbr.rel (0) target = $region53
    $region52: #{protopnet_forward.1} parent=1 // pred_region
      %3717 = dma.done [#allocation7], 32
    $region53: #{protopnet_forward.1} parent=1 // pred_fallthru
      _
    %3718 = vsyncpa [#allocation5], 1
    %3719 = vsyncpa [#allocation7], 1

</llo_original>
